<compile_context>
chip_gen: v7x
topology: tpu7x:2x2x1
jax: 0.10.0
libtpu: 0.0.40
codegen_flags: <defaults>
</compile_context>

<pallas_src>
import functools

import jax
import jax.numpy as jnp
import numpy as np
from jax.experimental import pallas as pl
from jax.experimental.pallas import tpu as pltpu

_VMEM = pl.BlockSpec(memory_space=pltpu.MemorySpace.VMEM)
_VMEM_LIMIT = 32 * 1024 * 1024      # safe on v5e/v6e/v7x; >> actual per-call use
_GRID_PARAMS = pltpu.CompilerParams(
    dimension_semantics=("parallel",), vmem_limit_bytes=_VMEM_LIMIT)
_EPS = 1e-5


def _round_up(x, m):
    return ((x + m - 1) // m) * m


def _tiling(m, max_tile=512):
    """Row tiling for (M, C) activations -> (tile_rows, padded_M, num_tiles)."""
    nt = max(1, -(-m // max_tile))
    tm = _round_up(-(-m // nt), 8)
    return tm, tm * nt, nt


# ----------------------------------------------------------------------------
# Pallas kernels
# ----------------------------------------------------------------------------
def _conv_kernel(taps_ref, w_ref, b_ref, o_ref, *stats_refs,
                 m_real, tm, need_mask):
    """One im2col conv tile: (TM, 9*Cin) @ (9*Cin, Cout) + bias.

    Optionally emits per-tile BatchNorm partials (sum, sum-of-squares) computed
    in a single pass over the f32 accumulator (stats_refs == (stats_ref,))."""
    acc = jnp.dot(taps_ref[...], w_ref[...],
                  preferred_element_type=jnp.float32)
    acc = acc + b_ref[...]
    o_ref[...] = acc
    if stats_refs:
        if need_mask:  # exclude padded rows from the batch statistics
            row = pl.program_id(0) * tm + jax.lax.broadcasted_iota(
                jnp.int32, acc.shape, 0)
            acc = jnp.where(row < m_real, acc, 0.0)
        s = jnp.sum(acc, axis=0, keepdims=True)            # (1, Cout)
        ss = jnp.sum(acc * acc, axis=0, keepdims=True)      # (1, Cout)
        stats_refs[0][0] = jnp.concatenate([s, ss], axis=0)  # (2, Cout)


def _bn_act_kernel(x_ref, scale_ref, shift_ref, *rest, use_res, use_relu):
    """y = [relu]( x * scale + shift [+ residual] ) on one row tile."""
    y = x_ref[...] * scale_ref[...] + shift_ref[...]
    if use_res:
        res_ref, o_ref = rest
        y = y + res_ref[...]
    else:
        (o_ref,) = rest
    if use_relu:
        y = jnp.maximum(y, 0.0)
    o_ref[...] = y


def _mlp_kernel(x_ref, w1_ref, b1_ref, w2_ref, b2_ref, w3_ref, b3_ref, o_ref):
    """Fused fc head: Linear(784,256)+ReLU -> Linear(256,64)+ReLU -> Linear(64,10)."""
    h = jnp.dot(x_ref[...], w1_ref[...],
                preferred_element_type=jnp.float32) + b1_ref[...]
    h = jnp.maximum(h, 0.0)
    h = jnp.dot(h, w2_ref[...], preferred_element_type=jnp.float32) + b2_ref[...]
    h = jnp.maximum(h, 0.0)
    o_ref[...] = jnp.dot(h, w3_ref[...],
                         preferred_element_type=jnp.float32) + b3_ref[...]


# ----------------------------------------------------------------------------
# Kernel wrappers
# ----------------------------------------------------------------------------
def _im2col_taps(x_nhwc, cin_p, m_pad):
    """(B,H,W,C) f32 -> (m_pad, 9*cin_p) bf16 im2col buffer ('same' padding)."""
    B, H, W, C = x_nhwc.shape
    x = x_nhwc.astype(jnp.bfloat16)
    if C < cin_p:
        x = jnp.pad(x, ((0, 0), (0, 0), (0, 0), (0, cin_p - C)))
    M = B * H * W
    xp = jnp.pad(x, ((0, 0), (1, 1), (1, 1), (0, 0)))
    taps = jnp.concatenate(
        [xp[:, kh:kh + H, kw:kw + W, :].reshape(M, cin_p)
         for kh in range(3) for kw in range(3)], axis=1)       # (M, 9*cin_p)
    if m_pad != M:
        taps = jnp.pad(taps, ((0, m_pad - M), (0, 0)))
    return taps


def _conv_pallas(taps, w, b, *, m_real, tm, compute_stats):
    m_pad, kdim = taps.shape
    cout_p = w.shape[1]
    nt = m_pad // tm
    kern = functools.partial(_conv_kernel, m_real=m_real, tm=tm,
                             need_mask=(m_pad != m_real))
    out_shape = [jax.ShapeDtypeStruct((m_pad, cout_p), jnp.float32)]
    out_specs = [pl.BlockSpec((tm, cout_p), lambda i: (i, 0))]
    if compute_stats:
        out_shape.append(jax.ShapeDtypeStruct((nt, 2, cout_p), jnp.float32))
        out_specs.append(pl.BlockSpec((1, 2, cout_p), lambda i: (i, 0, 0)))
    return pl.pallas_call(
        kern,
        grid=(nt,),
        in_specs=[
            pl.BlockSpec((tm, kdim), lambda i: (i, 0)),      # im2col row tile
            pl.BlockSpec((kdim, cout_p), lambda i: (0, 0)),  # weights (resident)
            pl.BlockSpec((1, cout_p), lambda i: (0, 0)),     # bias
        ],
        out_shape=tuple(out_shape) if compute_stats else out_shape[0],
        out_specs=tuple(out_specs) if compute_stats else out_specs[0],
        compiler_params=_GRID_PARAMS,
    )(taps, w, b)


def _bn_act_pallas(x2d, scale, shift, *, residual=None, relu=True, tm):
    m_pad, c = x2d.shape
    nt = m_pad // tm
    use_res = residual is not None
    kern = functools.partial(_bn_act_kernel, use_res=use_res, use_relu=relu)
    in_specs = [pl.BlockSpec((tm, c), lambda i: (i, 0)),
                pl.BlockSpec((1, c), lambda i: (0, 0)),
                pl.BlockSpec((1, c), lambda i: (0, 0))]
    operands = [x2d, scale, shift]
    if use_res:  # only DMA a residual when the block actually uses one
        in_specs.append(pl.BlockSpec((tm, c), lambda i: (i, 0)))
        operands.append(residual)
    return pl.pallas_call(
        kern,
        grid=(nt,),
        in_specs=in_specs,
        out_shape=jax.ShapeDtypeStruct((m_pad, c), jnp.float32),
        out_specs=pl.BlockSpec((tm, c), lambda i: (i, 0)),
        compiler_params=_GRID_PARAMS,
    )(*operands)


def _bn_coeffs(stats, m, bn_p):
    """Per-tile (sum, sumsq) partials -> per-channel affine (scale, shift)."""
    s = jnp.sum(stats[:, 0, :], axis=0)
    ss = jnp.sum(stats[:, 1, :], axis=0)
    mean = s / m
    var = jnp.maximum(ss / m - mean * mean, 0.0)            # biased (1/M) var
    scale = bn_p['gamma'] * jax.lax.rsqrt(var + _EPS)        # (1, C)
    shift = bn_p['beta'] - mean * scale                      # (1, C)
    return scale, shift


def _mlp_head(x, fp):
    B = x.shape[0]
    return pl.pallas_call(
        _mlp_kernel,
        out_shape=jax.ShapeDtypeStruct((B, fp['fc3']['w'].shape[1]), jnp.float32),
        in_specs=[_VMEM] * 7,
        out_specs=_VMEM,
        compiler_params=pltpu.CompilerParams(vmem_limit_bytes=_VMEM_LIMIT),
    )(x, fp['fc1']['w'], fp['fc1']['b'], fp['fc2']['w'], fp['fc2']['b'],
      fp['fc3']['w'], fp['fc3']['b'])


# ----------------------------------------------------------------------------
# Parameters
# ----------------------------------------------------------------------------
def _xavier_uniform(key, shape, fan_in, fan_out):
    bound = float(np.sqrt(6.0 / (fan_in + fan_out)))
    return jax.random.uniform(key, shape, jnp.float32, -bound, bound)


def init_params(key):
    keys = iter(jax.random.split(key, 32))

    def conv_p(cin, cout):
        w = _xavier_uniform(next(keys), (3, 3, cin, cout), cin * 9, cout * 9)
        b = jax.random.uniform(next(keys), (cout,), jnp.float32, -0.1, 0.1)
        return {'w': w, 'b': b}

    def bn_p(c):
        return {'gamma': jnp.ones((c,), jnp.float32),
                'beta': jnp.zeros((c,), jnp.float32)}

    def lin_p(din, dout):
        w = _xavier_uniform(next(keys), (din, dout), din, dout)
        b = jax.random.uniform(next(keys), (1, dout), jnp.float32, -0.1, 0.1)
        return {'w': w, 'b': b}

    return {
        'input_conv': conv_p(1, 32),
        'blocks': [{'conv1': conv_p(32, 32), 'bn1': bn_p(32),
                    'conv2': conv_p(32, 32), 'bn2': bn_p(32)} for _ in range(2)],
        'output_conv': conv_p(32, 1),
        'fc1': lin_p(784, 256),
        'fc2': lin_p(256, 64),
        'fc3': lin_p(64, 10),
    }


def prepare_params(params):
    """One-time preprocessing: channel pad, im2col weight reshape, bf16 cast."""
    def conv(cp):
        w = cp['w']
        cin, cout = w.shape[2], w.shape[3]
        cin_p, cout_p = max(cin, 8), max(cout, 8)
        w = jnp.pad(w, ((0, 0), (0, 0), (0, cin_p - cin), (0, cout_p - cout)))
        b = jnp.pad(cp['b'], (0, cout_p - cout))
        return {'w': w.reshape(9 * cin_p, cout_p).astype(jnp.bfloat16),
                'b': b.reshape(1, cout_p).astype(jnp.float32)}

    def bn(bp):
        return {'gamma': bp['gamma'].reshape(1, -1).astype(jnp.float32),
                'beta': bp['beta'].reshape(1, -1).astype(jnp.float32)}

    return {
        'input_conv': conv(params['input_conv']),
        'output_conv': conv(params['output_conv']),
        'blocks': [{'conv1': conv(b['conv1']), 'bn1': bn(b['bn1']),
                    'conv2': conv(b['conv2']), 'bn2': bn(b['bn2'])}
                   for b in params['blocks']],
        'fc1': dict(params['fc1']),
        'fc2': dict(params['fc2']),
        'fc3': dict(params['fc3']),
    }


# ----------------------------------------------------------------------------
# Forward
# ----------------------------------------------------------------------------
def resnet_forward(fp, x_nchw):
    # layout: NCHW input (PyTorch) -> NHWC internally; activations kept as
    # (M_pad, C) 2D slabs between kernels (M = B*H*W).
    x = jnp.transpose(x_nchw, (0, 2, 3, 1)).astype(jnp.float32)
    B, H, W, _ = x.shape
    M = B * H * W
    tm, m_pad, _ = _tiling(M)

    def conv(act_nhwc, cp, compute_stats):
        cin_p = cp['w'].shape[0] // 9
        taps = _im2col_taps(act_nhwc, cin_p, m_pad)
        return _conv_pallas(taps, cp['w'], cp['b'], m_real=M, tm=tm,
                            compute_stats=compute_stats)

    def to_nhwc(act2d, c):
        return act2d[:M, :c].reshape(B, H, W, c)

    # input conv (bias only; no BN / ReLU)
    a2d = conv(x, fp['input_conv'], compute_stats=False)            # (m_pad, 32)

    for blk in fp['blocks']:
        res2d = a2d                                                 # block residual
        c1, st1 = conv(to_nhwc(a2d, 32), blk['conv1'], compute_stats=True)
        scale1, shift1 = _bn_coeffs(st1, M, blk['bn1'])
        n1 = _bn_act_pallas(c1, scale1, shift1, relu=True, tm=tm)
        c2, st2 = conv(to_nhwc(n1, 32), blk['conv2'], compute_stats=True)
        scale2, shift2 = _bn_coeffs(st2, M, blk['bn2'])
        a2d = _bn_act_pallas(c2, scale2, shift2, residual=res2d, relu=True, tm=tm)

    o2d = conv(to_nhwc(a2d, 32), fp['output_conv'], compute_stats=False)
    feat = o2d[:M, :1].reshape(B, H * W)   # C == 1 -> identical to torch .view
    return _mlp_head(feat, fp)


# ----------------------------------------------------------------------------
# Pure-JAX references (numerical checks only)
# ----------------------------------------------------------------------------
def reference_forward(params, x_nchw, *, bf16_matmul_inputs=False):
    """f32 reference.  With bf16_matmul_inputs=True the conv operands are
    rounded to bf16 first (matching the kernel's bf16 MXU operands with f32
    accumulation), which allows a tight comparison."""
    def cast(a):
        return (a.astype(jnp.bfloat16).astype(jnp.float32)
                if bf16_matmul_inputs else a)

    x = jnp.transpose(x_nchw, (0, 2, 3, 1)).astype(jnp.float32)

    def conv(x, w, b):
        y = jax.lax.conv_general_dilated(
            cast(x), cast(w), (1, 1), 'SAME',
            dimension_numbers=('NHWC', 'HWIO', 'NHWC'),
            precision=jax.lax.Precision.HIGHEST)
        return y + b.reshape(1, 1, 1, -1)

    def bn(x, gamma, beta, eps=_EPS):
        mean = jnp.mean(x, axis=(0, 1, 2), keepdims=True)
        var = jnp.mean((x - mean) ** 2, axis=(0, 1, 2), keepdims=True)
        return ((x - mean) * jax.lax.rsqrt(var + eps)) * gamma.reshape(1, 1, 1, -1) \
            + beta.reshape(1, 1, 1, -1)

    p = params
    x = conv(x, p['input_conv']['w'], p['input_conv']['b'])
    for blk in p['blocks']:
        res = x
        x = jax.nn.relu(bn(conv(x, blk['conv1']['w'], blk['conv1']['b']),
                           blk['bn1']['gamma'], blk['bn1']['beta']))
        x = bn(conv(x, blk['conv2']['w'], blk['conv2']['b']),
               blk['bn2']['gamma'], blk['bn2']['beta'])
        x = jax.nn.relu(x + res)
    x = conv(x, p['output_conv']['w'], p['output_conv']['b'])
    x = x.reshape(x.shape[0], -1)
    h = jax.nn.relu(x @ p['fc1']['w'] + p['fc1']['b'])
    h = jax.nn.relu(h @ p['fc2']['w'] + p['fc2']['b'])
    return h @ p['fc3']['w'] + p['fc3']['b']


if __name__ == "__main__":
    key = jax.random.PRNGKey(0)
    pkey, xkey = jax.random.split(key)
    params = init_params(pkey)
    fast_params = prepare_params(params)   # one-time weight prep (off hot path)

    # fc expects 784 = 28*28 features after the 1-channel output conv.
    x = jax.random.normal(xkey, (2, 1, 28, 28), jnp.float32)  # NCHW

    fwd = jax.jit(resnet_forward)
    out = jax.block_until_ready(fwd(fast_params, x))
    assert out.shape == (2, 10)

    # Tight check vs a reference with bf16-rounded conv operands (same matmul
    # semantics as the kernel: bf16 operands, f32 accumulation).
    ref_matched = reference_forward(params, x, bf16_matmul_inputs=True)
    np.testing.assert_allclose(np.asarray(out), np.asarray(ref_matched),
                               rtol=5e-3, atol=5e-3)

    # Loose sanity check vs the pure-f32 reference (bf16 conv operands in the
    # kernel path introduce a small, expected deviation).
    ref_f32 = reference_forward(params, x, bf16_matmul_inputs=False)
    rel_l2 = float(jnp.linalg.norm(out - ref_f32) / jnp.linalg.norm(ref_f32))
    assert rel_l2 < 0.1, f"relative L2 error vs f32 reference too large: {rel_l2}"

    print("KERNEL_OK")
</pallas_src>

<mosaic_0001>
module attributes {stable_mosaic.version = 11 : i64} {
  func.func @_conv_kernel(%arg0: i32, %arg1: memref<392x72xbf16, #tpu.memory_space<vmem>>, %arg2: memref<72x32xbf16, #tpu.memory_space<vmem>>, %arg3: memref<1x32xf32, #tpu.memory_space<vmem>>, %arg4: memref<392x32xf32, #tpu.memory_space<vmem>>) attributes {dimension_semantics = [#tpu.dimension_semantics<parallel>], iteration_bounds = array<i64: 4>, scalar_prefetch = 0 : i64, scratch_operands = 0 : i64, tpu.core_type = #tpu.core_type<tc>, window_params = [{transform_indices = @transform_0, window_bounds = array<i64: 392, 72>}, {pipeline_mode = #tpu.pipeline_mode<synchronous>, transform_indices = @transform_1, window_bounds = array<i64: 72, 32>}, {pipeline_mode = #tpu.pipeline_mode<synchronous>, transform_indices = @transform_2, window_bounds = array<i64: 1, 32>}, {transform_indices = @transform_3, window_bounds = array<i64: 392, 32>}]} {
    %c0 = arith.constant 0 : index
    %c0_0 = arith.constant 0 : index
    %0 = vector.load %arg1[%c0, %c0_0] : memref<392x72xbf16, #tpu.memory_space<vmem>>, vector<392x72xbf16>
    %c0_1 = arith.constant 0 : index
    %c0_2 = arith.constant 0 : index
    %1 = vector.load %arg2[%c0_1, %c0_2] : memref<72x32xbf16, #tpu.memory_space<vmem>>, vector<72x32xbf16>
    %cst = arith.constant dense<0.000000e+00> : vector<392x32xf32>
    %2 = tpu.matmul %0, %1, %cst {dimension_numbers = #tpu.dot_dimension_numbers<[1], [0], [0], [1], [0, 0, 1, 1], [], []>} : vector<392x72xbf16>, vector<72x32xbf16>, vector<392x32xf32> -> vector<392x32xf32>
    %c0_3 = arith.constant 0 : index
    %c0_4 = arith.constant 0 : index
    %3 = vector.load %arg3[%c0_3, %c0_4] : memref<1x32xf32, #tpu.memory_space<vmem>>, vector<1x32xf32>
    %4 = vector.broadcast %3 : vector<1x32xf32> to vector<392x32xf32>
    %5 = arith.addf %2, %4 : vector<392x32xf32>
    %c0_5 = arith.constant 0 : index
    %c0_6 = arith.constant 0 : index
    %6 = vector.load %arg4[%c0_5, %c0_6] : memref<392x32xf32, #tpu.memory_space<vmem>>, vector<392x32xf32>
    tpu.vector_store %arg4[%c0_5, %c0_6], %5 {strides = array<i32>} : memref<392x32xf32, #tpu.memory_space<vmem>>, vector<392x32xf32>,
    return
  }
  func.func @transform_0(%arg0: i32) -> (i32, i32) {
    %c0_i32 = arith.constant 0 : i32
    %c0_i32_0 = arith.constant 0 : i32
    return %arg0, %c0_i32 : i32, i32
  }
  func.func @transform_1(%arg0: i32) -> (i32, i32) {
    %c0_i32 = arith.constant 0 : i32
    %c0_i32_0 = arith.constant 0 : i32
    %c0_i32_1 = arith.constant 0 : i32
    return %c0_i32, %c0_i32_0 : i32, i32
  }
  func.func @transform_2(%arg0: i32) -> (i32, i32) {
    %c0_i32 = arith.constant 0 : i32
    %c0_i32_0 = arith.constant 0 : i32
    %c0_i32_1 = arith.constant 0 : i32
    return %c0_i32, %c0_i32_0 : i32, i32
  }
  func.func @transform_3(%arg0: i32) -> (i32, i32) {
    %c0_i32 = arith.constant 0 : i32
    %c0_i32_0 = arith.constant 0 : i32
    return %arg0, %c0_i32 : i32, i32
  }
}

module attributes {stable_mosaic.version = 11 : i64} {
  func.func @_conv_kernel(%arg0: i32, %arg1: memref<392x288xbf16, #tpu.memory_space<vmem>>, %arg2: memref<288x32xbf16, #tpu.memory_space<vmem>>, %arg3: memref<1x32xf32, #tpu.memory_space<vmem>>, %arg4: memref<392x32xf32, #tpu.memory_space<vmem>>, %arg5: memref<1x2x32xf32, #tpu.memory_space<vmem>>) attributes {dimension_semantics = [#tpu.dimension_semantics<parallel>], iteration_bounds = array<i64: 4>, scalar_prefetch = 0 : i64, scratch_operands = 0 : i64, tpu.core_type = #tpu.core_type<tc>, window_params = [{transform_indices = @transform_0, window_bounds = array<i64: 392, 288>}, {pipeline_mode = #tpu.pipeline_mode<synchronous>, transform_indices = @transform_1, window_bounds = array<i64: 288, 32>}, {pipeline_mode = #tpu.pipeline_mode<synchronous>, transform_indices = @transform_2, window_bounds = array<i64: 1, 32>}, {transform_indices = @transform_3, window_bounds = array<i64: 392, 32>}, {transform_indices = @transform_4, window_bounds = array<i64: 1, 2, 32>}]} {
    %c0 = arith.constant 0 : index
    %c0_0 = arith.constant 0 : index
    %0 = vector.load %arg1[%c0, %c0_0] : memref<392x288xbf16, #tpu.memory_space<vmem>>, vector<392x288xbf16>
    %c0_1 = arith.constant 0 : index
    %c0_2 = arith.constant 0 : index
    %1 = vector.load %arg2[%c0_1, %c0_2] : memref<288x32xbf16, #tpu.memory_space<vmem>>, vector<288x32xbf16>
    %cst = arith.constant dense<0.000000e+00> : vector<392x32xf32>
    %2 = tpu.matmul %0, %1, %cst {dimension_numbers = #tpu.dot_dimension_numbers<[1], [0], [0], [1], [0, 0, 1, 1], [], []>} : vector<392x288xbf16>, vector<288x32xbf16>, vector<392x32xf32> -> vector<392x32xf32>
    %c0_3 = arith.constant 0 : index
    %c0_4 = arith.constant 0 : index
    %3 = vector.load %arg3[%c0_3, %c0_4] : memref<1x32xf32, #tpu.memory_space<vmem>>, vector<1x32xf32>
    %4 = vector.broadcast %3 : vector<1x32xf32> to vector<392x32xf32>
    %5 = arith.addf %2, %4 : vector<392x32xf32>
    %c0_5 = arith.constant 0 : index
    %c0_6 = arith.constant 0 : index
    %6 = vector.load %arg4[%c0_5, %c0_6] : memref<392x32xf32, #tpu.memory_space<vmem>>, vector<392x32xf32>
    tpu.vector_store %arg4[%c0_5, %c0_6], %5 {strides = array<i32>} : memref<392x32xf32, #tpu.memory_space<vmem>>, vector<392x32xf32>,
    %cst_7 = arith.constant dense<0.000000e+00> : vector<32xf32>
    %7 = vector.multi_reduction <add>, %5, %cst_7 [0] : vector<392x32xf32> to vector<32xf32>
    %8 = vector.shape_cast %7 : vector<32xf32> to vector<1x32xf32>
    %9 = arith.mulf %5, %5 : vector<392x32xf32>
    %cst_8 = arith.constant dense<0.000000e+00> : vector<32xf32>
    %10 = vector.multi_reduction <add>, %9, %cst_8 [0] : vector<392x32xf32> to vector<32xf32>
    %11 = vector.shape_cast %10 : vector<32xf32> to vector<1x32xf32>
    %12 = tpu.concatenate %8, %11 in 0 : vector<1x32xf32>, vector<1x32xf32> -> vector<2x32xf32>
    %c0_9 = arith.constant 0 : index
    %c0_10 = arith.constant 0 : index
    %c0_11 = arith.constant 0 : index
    %13 = vector.load %arg5[%c0_9, %c0_10, %c0_11] : memref<1x2x32xf32, #tpu.memory_space<vmem>>, vector<1x2x32xf32>
    %14 = vector.shape_cast %13 : vector<1x2x32xf32> to vector<2x32xf32>
    %15 = vector.shape_cast %12 : vector<2x32xf32> to vector<1x2x32xf32>
    tpu.vector_store %arg5[%c0_9, %c0_10, %c0_11], %15 {strides = array<i32>} : memref<1x2x32xf32, #tpu.memory_space<vmem>>, vector<1x2x32xf32>,
    return
  }
  func.func @transform_0(%arg0: i32) -> (i32, i32) {
    %c0_i32 = arith.constant 0 : i32
    %c0_i32_0 = arith.constant 0 : i32
    return %arg0, %c0_i32 : i32, i32
  }
  func.func @transform_1(%arg0: i32) -> (i32, i32) {
    %c0_i32 = arith.constant 0 : i32
    %c0_i32_0 = arith.constant 0 : i32
    %c0_i32_1 = arith.constant 0 : i32
    return %c0_i32, %c0_i32_0 : i32, i32
  }
  func.func @transform_2(%arg0: i32) -> (i32, i32) {
    %c0_i32 = arith.constant 0 : i32
    %c0_i32_0 = arith.constant 0 : i32
    %c0_i32_1 = arith.constant 0 : i32
    return %c0_i32, %c0_i32_0 : i32, i32
  }
  func.func @transform_3(%arg0: i32) -> (i32, i32) {
    %c0_i32 = arith.constant 0 : i32
    %c0_i32_0 = arith.constant 0 : i32
    return %arg0, %c0_i32 : i32, i32
  }
  func.func @transform_4(%arg0: i32) -> (i32, i32, i32) {
    %c0_i32 = arith.constant 0 : i32
    %c0_i32_0 = arith.constant 0 : i32
    %c0_i32_1 = arith.constant 0 : i32
    return %arg0, %c0_i32, %c0_i32_0 : i32, i32, i32
  }
}

module attributes {stable_mosaic.version = 11 : i64} {
  func.func @_bn_act_kernel(%arg0: i32, %arg1: memref<392x32xf32, #tpu.memory_space<vmem>>, %arg2: memref<1x32xf32, #tpu.memory_space<vmem>>, %arg3: memref<1x32xf32, #tpu.memory_space<vmem>>, %arg4: memref<392x32xf32, #tpu.memory_space<vmem>>) attributes {dimension_semantics = [#tpu.dimension_semantics<parallel>], iteration_bounds = array<i64: 4>, scalar_prefetch = 0 : i64, scratch_operands = 0 : i64, tpu.core_type = #tpu.core_type<tc>, window_params = [{transform_indices = @transform_0, window_bounds = array<i64: 392, 32>}, {pipeline_mode = #tpu.pipeline_mode<synchronous>, transform_indices = @transform_1, window_bounds = array<i64: 1, 32>}, {pipeline_mode = #tpu.pipeline_mode<synchronous>, transform_indices = @transform_2, window_bounds = array<i64: 1, 32>}, {transform_indices = @transform_3, window_bounds = array<i64: 392, 32>}]} {
    %c0 = arith.constant 0 : index
    %c0_0 = arith.constant 0 : index
    %0 = vector.load %arg1[%c0, %c0_0] : memref<392x32xf32, #tpu.memory_space<vmem>>, vector<392x32xf32>
    %c0_1 = arith.constant 0 : index
    %c0_2 = arith.constant 0 : index
    %1 = vector.load %arg2[%c0_1, %c0_2] : memref<1x32xf32, #tpu.memory_space<vmem>>, vector<1x32xf32>
    %2 = vector.broadcast %1 : vector<1x32xf32> to vector<392x32xf32>
    %3 = arith.mulf %0, %2 : vector<392x32xf32>
    %c0_3 = arith.constant 0 : index
    %c0_4 = arith.constant 0 : index
    %4 = vector.load %arg3[%c0_3, %c0_4] : memref<1x32xf32, #tpu.memory_space<vmem>>, vector<1x32xf32>
    %5 = vector.broadcast %4 : vector<1x32xf32> to vector<392x32xf32>
    %6 = arith.addf %3, %5 : vector<392x32xf32>
    %cst = arith.constant 0.000000e+00 : f32
    %7 = vector.broadcast %cst : f32 to vector<392x32xf32>
    %8 = arith.maximumf %6, %7 : vector<392x32xf32>
    %c0_5 = arith.constant 0 : index
    %c0_6 = arith.constant 0 : index
    %9 = vector.load %arg4[%c0_5, %c0_6] : memref<392x32xf32, #tpu.memory_space<vmem>>, vector<392x32xf32>
    tpu.vector_store %arg4[%c0_5, %c0_6], %8 {strides = array<i32>} : memref<392x32xf32, #tpu.memory_space<vmem>>, vector<392x32xf32>,
    return
  }
  func.func @transform_0(%arg0: i32) -> (i32, i32) {
    %c0_i32 = arith.constant 0 : i32
    %c0_i32_0 = arith.constant 0 : i32
    return %arg0, %c0_i32 : i32, i32
  }
  func.func @transform_1(%arg0: i32) -> (i32, i32) {
    %c0_i32 = arith.constant 0 : i32
    %c0_i32_0 = arith.constant 0 : i32
    %c0_i32_1 = arith.constant 0 : i32
    return %c0_i32, %c0_i32_0 : i32, i32
  }
  func.func @transform_2(%arg0: i32) -> (i32, i32) {
    %c0_i32 = arith.constant 0 : i32
    %c0_i32_0 = arith.constant 0 : i32
    %c0_i32_1 = arith.constant 0 : i32
    return %c0_i32, %c0_i32_0 : i32, i32
  }
  func.func @transform_3(%arg0: i32) -> (i32, i32) {
    %c0_i32 = arith.constant 0 : i32
    %c0_i32_0 = arith.constant 0 : i32
    return %arg0, %c0_i32 : i32, i32
  }
}

module attributes {stable_mosaic.version = 11 : i64} {
  func.func @_bn_act_kernel(%arg0: i32, %arg1: memref<392x32xf32, #tpu.memory_space<vmem>>, %arg2: memref<1x32xf32, #tpu.memory_space<vmem>>, %arg3: memref<1x32xf32, #tpu.memory_space<vmem>>, %arg4: memref<392x32xf32, #tpu.memory_space<vmem>>, %arg5: memref<392x32xf32, #tpu.memory_space<vmem>>) attributes {dimension_semantics = [#tpu.dimension_semantics<parallel>], iteration_bounds = array<i64: 4>, scalar_prefetch = 0 : i64, scratch_operands = 0 : i64, tpu.core_type = #tpu.core_type<tc>, window_params = [{transform_indices = @transform_0, window_bounds = array<i64: 392, 32>}, {pipeline_mode = #tpu.pipeline_mode<synchronous>, transform_indices = @transform_1, window_bounds = array<i64: 1, 32>}, {pipeline_mode = #tpu.pipeline_mode<synchronous>, transform_indices = @transform_2, window_bounds = array<i64: 1, 32>}, {transform_indices = @transform_3, window_bounds = array<i64: 392, 32>}, {transform_indices = @transform_4, window_bounds = array<i64: 392, 32>}]} {
    %c0 = arith.constant 0 : index
    %c0_0 = arith.constant 0 : index
    %0 = vector.load %arg1[%c0, %c0_0] : memref<392x32xf32, #tpu.memory_space<vmem>>, vector<392x32xf32>
    %c0_1 = arith.constant 0 : index
    %c0_2 = arith.constant 0 : index
    %1 = vector.load %arg2[%c0_1, %c0_2] : memref<1x32xf32, #tpu.memory_space<vmem>>, vector<1x32xf32>
    %2 = vector.broadcast %1 : vector<1x32xf32> to vector<392x32xf32>
    %3 = arith.mulf %0, %2 : vector<392x32xf32>
    %c0_3 = arith.constant 0 : index
    %c0_4 = arith.constant 0 : index
    %4 = vector.load %arg3[%c0_3, %c0_4] : memref<1x32xf32, #tpu.memory_space<vmem>>, vector<1x32xf32>
    %5 = vector.broadcast %4 : vector<1x32xf32> to vector<392x32xf32>
    %6 = arith.addf %3, %5 : vector<392x32xf32>
    %c0_5 = arith.constant 0 : index
    %c0_6 = arith.constant 0 : index
    %7 = vector.load %arg4[%c0_5, %c0_6] : memref<392x32xf32, #tpu.memory_space<vmem>>, vector<392x32xf32>
    %8 = arith.addf %6, %7 : vector<392x32xf32>
    %cst = arith.constant 0.000000e+00 : f32
    %9 = vector.broadcast %cst : f32 to vector<392x32xf32>
    %10 = arith.maximumf %8, %9 : vector<392x32xf32>
    %c0_7 = arith.constant 0 : index
    %c0_8 = arith.constant 0 : index
    %11 = vector.load %arg5[%c0_7, %c0_8] : memref<392x32xf32, #tpu.memory_space<vmem>>, vector<392x32xf32>
    tpu.vector_store %arg5[%c0_7, %c0_8], %10 {strides = array<i32>} : memref<392x32xf32, #tpu.memory_space<vmem>>, vector<392x32xf32>,
    return
  }
  func.func @transform_0(%arg0: i32) -> (i32, i32) {
    %c0_i32 = arith.constant 0 : i32
    %c0_i32_0 = arith.constant 0 : i32
    return %arg0, %c0_i32 : i32, i32
  }
  func.func @transform_1(%arg0: i32) -> (i32, i32) {
    %c0_i32 = arith.constant 0 : i32
    %c0_i32_0 = arith.constant 0 : i32
    %c0_i32_1 = arith.constant 0 : i32
    return %c0_i32, %c0_i32_0 : i32, i32
  }
  func.func @transform_2(%arg0: i32) -> (i32, i32) {
    %c0_i32 = arith.constant 0 : i32
    %c0_i32_0 = arith.constant 0 : i32
    %c0_i32_1 = arith.constant 0 : i32
    return %c0_i32, %c0_i32_0 : i32, i32
  }
  func.func @transform_3(%arg0: i32) -> (i32, i32) {
    %c0_i32 = arith.constant 0 : i32
    %c0_i32_0 = arith.constant 0 : i32
    return %arg0, %c0_i32 : i32, i32
  }
  func.func @transform_4(%arg0: i32) -> (i32, i32) {
    %c0_i32 = arith.constant 0 : i32
    %c0_i32_0 = arith.constant 0 : i32
    return %arg0, %c0_i32 : i32, i32
  }
}

module attributes {stable_mosaic.version = 11 : i64} {
  func.func @_conv_kernel(%arg0: i32, %arg1: memref<392x288xbf16, #tpu.memory_space<vmem>>, %arg2: memref<288x8xbf16, #tpu.memory_space<vmem>>, %arg3: memref<1x8xf32, #tpu.memory_space<vmem>>, %arg4: memref<392x8xf32, #tpu.memory_space<vmem>>) attributes {dimension_semantics = [#tpu.dimension_semantics<parallel>], iteration_bounds = array<i64: 4>, scalar_prefetch = 0 : i64, scratch_operands = 0 : i64, tpu.core_type = #tpu.core_type<tc>, window_params = [{transform_indices = @transform_0, window_bounds = array<i64: 392, 288>}, {pipeline_mode = #tpu.pipeline_mode<synchronous>, transform_indices = @transform_1, window_bounds = array<i64: 288, 8>}, {pipeline_mode = #tpu.pipeline_mode<synchronous>, transform_indices = @transform_2, window_bounds = array<i64: 1, 8>}, {transform_indices = @transform_3, window_bounds = array<i64: 392, 8>}]} {
    %c0 = arith.constant 0 : index
    %c0_0 = arith.constant 0 : index
    %0 = vector.load %arg1[%c0, %c0_0] : memref<392x288xbf16, #tpu.memory_space<vmem>>, vector<392x288xbf16>
    %c0_1 = arith.constant 0 : index
    %c0_2 = arith.constant 0 : index
    %1 = vector.load %arg2[%c0_1, %c0_2] : memref<288x8xbf16, #tpu.memory_space<vmem>>, vector<288x8xbf16>
    %cst = arith.constant dense<0.000000e+00> : vector<392x8xf32>
    %2 = tpu.matmul %0, %1, %cst {dimension_numbers = #tpu.dot_dimension_numbers<[1], [0], [0], [1], [0, 0, 1, 1], [], []>} : vector<392x288xbf16>, vector<288x8xbf16>, vector<392x8xf32> -> vector<392x8xf32>
    %c0_3 = arith.constant 0 : index
    %c0_4 = arith.constant 0 : index
    %3 = vector.load %arg3[%c0_3, %c0_4] : memref<1x8xf32, #tpu.memory_space<vmem>>, vector<1x8xf32>
    %4 = vector.broadcast %3 : vector<1x8xf32> to vector<392x8xf32>
    %5 = arith.addf %2, %4 : vector<392x8xf32>
    %c0_5 = arith.constant 0 : index
    %c0_6 = arith.constant 0 : index
    %6 = vector.load %arg4[%c0_5, %c0_6] : memref<392x8xf32, #tpu.memory_space<vmem>>, vector<392x8xf32>
    tpu.vector_store %arg4[%c0_5, %c0_6], %5 {strides = array<i32>} : memref<392x8xf32, #tpu.memory_space<vmem>>, vector<392x8xf32>,
    return
  }
  func.func @transform_0(%arg0: i32) -> (i32, i32) {
    %c0_i32 = arith.constant 0 : i32
    %c0_i32_0 = arith.constant 0 : i32
    return %arg0, %c0_i32 : i32, i32
  }
  func.func @transform_1(%arg0: i32) -> (i32, i32) {
    %c0_i32 = arith.constant 0 : i32
    %c0_i32_0 = arith.constant 0 : i32
    %c0_i32_1 = arith.constant 0 : i32
    return %c0_i32, %c0_i32_0 : i32, i32
  }
  func.func @transform_2(%arg0: i32) -> (i32, i32) {
    %c0_i32 = arith.constant 0 : i32
    %c0_i32_0 = arith.constant 0 : i32
    %c0_i32_1 = arith.constant 0 : i32
    return %c0_i32, %c0_i32_0 : i32, i32
  }
  func.func @transform_3(%arg0: i32) -> (i32, i32) {
    %c0_i32 = arith.constant 0 : i32
    %c0_i32_0 = arith.constant 0 : i32
    return %arg0, %c0_i32 : i32, i32
  }
}

module attributes {stable_mosaic.version = 11 : i64} {
  func.func @_mlp_kernel(%arg0: memref<2x784xf32, #tpu.memory_space<vmem>>, %arg1: memref<784x256xf32, #tpu.memory_space<vmem>>, %arg2: memref<1x256xf32, #tpu.memory_space<vmem>>, %arg3: memref<256x64xf32, #tpu.memory_space<vmem>>, %arg4: memref<1x64xf32, #tpu.memory_space<vmem>>, %arg5: memref<64x10xf32, #tpu.memory_space<vmem>>, %arg6: memref<1x10xf32, #tpu.memory_space<vmem>>, %arg7: memref<2x10xf32, #tpu.memory_space<vmem>>) attributes {dimension_semantics = [], scalar_prefetch = 0 : i64, scratch_operands = 0 : i64, tpu.core_type = #tpu.core_type<tc>} {
    %c0 = arith.constant 0 : index
    %c0_0 = arith.constant 0 : index
    %0 = vector.load %arg0[%c0, %c0_0] : memref<2x784xf32, #tpu.memory_space<vmem>>, vector<2x784xf32>
    %c0_1 = arith.constant 0 : index
    %c0_2 = arith.constant 0 : index
    %1 = vector.load %arg1[%c0_1, %c0_2] : memref<784x256xf32, #tpu.memory_space<vmem>>, vector<784x256xf32>
    %cst = arith.constant dense<0.000000e+00> : vector<2x256xf32>
    %2 = tpu.matmul %0, %1, %cst {dimension_numbers = #tpu.dot_dimension_numbers<[1], [0], [0], [1], [0, 0, 1, 1], [], []>} : vector<2x784xf32>, vector<784x256xf32>, vector<2x256xf32> -> vector<2x256xf32>
    %c0_3 = arith.constant 0 : index
    %c0_4 = arith.constant 0 : index
    %3 = vector.load %arg2[%c0_3, %c0_4] : memref<1x256xf32, #tpu.memory_space<vmem>>, vector<1x256xf32>
    %4 = vector.broadcast %3 : vector<1x256xf32> to vector<2x256xf32>
    %5 = arith.addf %2, %4 : vector<2x256xf32>
    %cst_5 = arith.constant 0.000000e+00 : f32
    %6 = vector.broadcast %cst_5 : f32 to vector<2x256xf32>
    %7 = arith.maximumf %5, %6 : vector<2x256xf32>
    %c0_6 = arith.constant 0 : index
    %c0_7 = arith.constant 0 : index
    %8 = vector.load %arg3[%c0_6, %c0_7] : memref<256x64xf32, #tpu.memory_space<vmem>>, vector<256x64xf32>
    %cst_8 = arith.constant dense<0.000000e+00> : vector<2x64xf32>
    %9 = tpu.matmul %7, %8, %cst_8 {dimension_numbers = #tpu.dot_dimension_numbers<[1], [0], [0], [1], [0, 0, 1, 1], [], []>} : vector<2x256xf32>, vector<256x64xf32>, vector<2x64xf32> -> vector<2x64xf32>
    %c0_9 = arith.constant 0 : index
    %c0_10 = arith.constant 0 : index
    %10 = vector.load %arg4[%c0_9, %c0_10] : memref<1x64xf32, #tpu.memory_space<vmem>>, vector<1x64xf32>
    %11 = vector.broadcast %10 : vector<1x64xf32> to vector<2x64xf32>
    %12 = arith.addf %9, %11 : vector<2x64xf32>
    %cst_11 = arith.constant 0.000000e+00 : f32
    %13 = vector.broadcast %cst_11 : f32 to vector<2x64xf32>
    %14 = arith.maximumf %12, %13 : vector<2x64xf32>
    %c0_12 = arith.constant 0 : index
    %c0_13 = arith.constant 0 : index
    %15 = vector.load %arg5[%c0_12, %c0_13] : memref<64x10xf32, #tpu.memory_space<vmem>>, vector<64x10xf32>
    %cst_14 = arith.constant dense<0.000000e+00> : vector<2x10xf32>
    %16 = tpu.matmul %14, %15, %cst_14 {dimension_numbers = #tpu.dot_dimension_numbers<[1], [0], [0], [1], [0, 0, 1, 1], [], []>} : vector<2x64xf32>, vector<64x10xf32>, vector<2x10xf32> -> vector<2x10xf32>
    %c0_15 = arith.constant 0 : index
    %c0_16 = arith.constant 0 : index
    %17 = vector.load %arg6[%c0_15, %c0_16] : memref<1x10xf32, #tpu.memory_space<vmem>>, vector<1x10xf32>
    %18 = vector.broadcast %17 : vector<1x10xf32> to vector<2x10xf32>
    %19 = arith.addf %16, %18 : vector<2x10xf32>
    %c0_17 = arith.constant 0 : index
    %c0_18 = arith.constant 0 : index
    %20 = vector.load %arg7[%c0_17, %c0_18] : memref<2x10xf32, #tpu.memory_space<vmem>>, vector<2x10xf32>
    tpu.vector_store %arg7[%c0_17, %c0_18], %19 {strides = array<i32>} : memref<2x10xf32, #tpu.memory_space<vmem>>, vector<2x10xf32>,
    return
  }
}

</mosaic_0001>

<llo_original>
// kernel: resnet_forward.11
$region0: #{resnet_forward.11}
  #allocation0 [shape = 'u32[]', space=smem, size = 0x4, offset = 0x4, fixed_abs, tag = 'smem constant byte address 0x4 - core index']
  #allocation1 [shape = 'u32[144,128]{1,0:T(1,128)}', space=vmem, size = 0x12000, scoped, tag = 'internal scratch']
  %s0 = inlined_call_operand.vmem [shape: bf16[1568,72], index: 0, kind: input, shape index: {}]
  %s1 = inlined_call_operand.vmem [shape: bf16[72,32], index: 1, kind: input, shape index: {}]
  %s2 = inlined_call_operand.vmem [shape: f32[1,32], index: 2, kind: input, shape index: {}]
  %s3 = inlined_call_operand.vmem [shape: f32[1568,32], index: 3, kind: output, shape index: {}]
  %s4 = sld [smem:[#allocation0]]
  $region45: #{resnet_forward.11} parent=0
    _
  %s6 = ssub.s32 1, %s4
  %s7 = scalar_select 0, %s6, %s4
  loop: start=0, step=1, limit=6
  $region2: #{resnet_forward.11} parent=0 // loop_pre_header
    _
  $region3: #{resnet_forward.11} parent=0 // loop_header
    %s9 = sphi 0, %s13
    %p10 = scmp.ge.s32.totalorder %s9, 6
    %s19 = sphi 0, %s21
    %s22 = sphi 0, %s19
    %s23 = sphi 0, %s22
    %s39 = sphi 0, %s23
    %s43 = sphi 0, %s43
    %s45 = sphi 0, %s43
    %s46 = sphi 0, %s45
    %s60 = sphi 0, %s46
    %s64 = sphi 0, %s64
    %s66 = sphi 0, %s64
    %s67 = sphi 0, %s66
    %s81 = sphi 0, %s67
    %s87 = sphi 0, %s89
    %s90 = sphi 0, %s87
    %s91 = sphi 0, %s90
    %s107 = sphi 0, %s91
  $region4: #{resnet_forward.11} parent=0 // loop_header_branch
    %12 = sbr.rel (%p10) target = $region8
  $region5: #{resnet_forward.11} parent=0 // loop_body
    %s14 = ssub.s32 %s9, 1
    %s15 = ssub.s32 %s9, 2
    %s16 = sadd.s32 %s9, 1
    %s17 = ssub.s32 %s9, %s16
    %p18 = scmp.eq.s32.totalorder %s17, 0
    %s20 = sadd.s32 %s19, 1
    %s21 = scalar_select %p18, %s19, %s20
    %p24 = pneg %p18
    %p25 = scmp.eq.s32.totalorder %s9, 3
    %p26 = por %p24, %p25
    %p27 = scmp.ne.s32.totalorder %s19, %s22
    %p28 = scmp.eq.s32.totalorder %s9, 0
    %p29 = por %p27, %p28
    %p30 = scmp.ne.s32.totalorder %s19, %s22
    %p31 = scmp.eq.s32.totalorder %s14, 3
    %p32 = por %p30, %p31
    %p33 = scmp.ne.s32.totalorder %s22, %s23
    %p34 = scmp.eq.s32.totalorder %s14, 0
    %p35 = por %p33, %p34
    %p36 = scmp.ne.s32.totalorder %s22, %s23
    %p37 = scmp.eq.s32.totalorder %s15, 3
    %p38 = por %p36, %p37
    %p40 = scmp.ne.s32.totalorder %s23, %s39
    %p41 = scmp.eq.s32.totalorder %s15, 0
    %p42 = por %p40, %p41
    %s44 = sadd.s32 %s43, 1
    %p47 = scmp.eq.s32.totalorder %s9, 3
    %p48 = scmp.ne.s32.totalorder %s43, %s45
    %p49 = scmp.eq.s32.totalorder %s9, 0
    %p50 = por %p48, %p49
    %p51 = scmp.ne.s32.totalorder %s43, %s45
    %p52 = scmp.eq.s32.totalorder %s14, 3
    %p53 = por %p51, %p52
    %p54 = scmp.ne.s32.totalorder %s45, %s46
    %p55 = scmp.eq.s32.totalorder %s14, 0
    %p56 = por %p54, %p55
    %p57 = scmp.ne.s32.totalorder %s45, %s46
    %p58 = scmp.eq.s32.totalorder %s15, 3
    %p59 = por %p57, %p58
    %p61 = scmp.ne.s32.totalorder %s46, %s60
    %p62 = scmp.eq.s32.totalorder %s15, 0
    %p63 = por %p61, %p62
    %s65 = sadd.s32 %s64, 1
    %p68 = scmp.eq.s32.totalorder %s9, 3
    %p69 = scmp.ne.s32.totalorder %s64, %s66
    %p70 = scmp.eq.s32.totalorder %s9, 0
    %p71 = por %p69, %p70
    %p72 = scmp.ne.s32.totalorder %s64, %s66
    %p73 = scmp.eq.s32.totalorder %s14, 3
    %p74 = por %p72, %p73
    %p75 = scmp.ne.s32.totalorder %s66, %s67
    %p76 = scmp.eq.s32.totalorder %s14, 0
    %p77 = por %p75, %p76
    %p78 = scmp.ne.s32.totalorder %s66, %s67
    %p79 = scmp.eq.s32.totalorder %s15, 3
    %p80 = por %p78, %p79
    %p82 = scmp.ne.s32.totalorder %s67, %s81
    %p83 = scmp.eq.s32.totalorder %s15, 0
    %p84 = por %p82, %p83
    %s85 = ssub.s32 %s9, %s16
    %p86 = scmp.eq.s32.totalorder %s85, 0
    %s88 = sadd.s32 %s87, 1
    %s89 = scalar_select %p86, %s87, %s88
    %p92 = pneg %p86
    %p93 = scmp.eq.s32.totalorder %s9, 3
    %p94 = por %p92, %p93
    %p95 = scmp.ne.s32.totalorder %s87, %s90
    %p96 = scmp.eq.s32.totalorder %s9, 0
    %p97 = por %p95, %p96
    %p98 = scmp.ne.s32.totalorder %s87, %s90
    %p99 = scmp.eq.s32.totalorder %s14, 3
    %p100 = por %p98, %p99
    %p101 = scmp.ne.s32.totalorder %s90, %s91
    %p102 = scmp.eq.s32.totalorder %s14, 0
    %p103 = por %p101, %p102
    %p104 = scmp.ne.s32.totalorder %s90, %s91
    %p105 = scmp.eq.s32.totalorder %s15, 3
    %p106 = por %p104, %p105
    %p108 = scmp.ne.s32.totalorder %s91, %s107
    %p109 = scmp.eq.s32.totalorder %s15, 0
    %p110 = por %p108, %p109
    %p111 = scmp.le.s32.totalorder 1, %s9
    %p112 = scmp.lt.s32.totalorder %s9, 5
    %p113 = pnand %p111, %p112
    %p114 = pneg %p113
    // Predicated region
    $region9: #{resnet_forward.11} parent=5 // pred_check
      _
    $region10: #{resnet_forward.11} parent=5 // pred_check_branch
      %116 = sbr.rel (%p113) target = $region12
    $region11: #{resnet_forward.11} parent=5 // pred_region
      %s117 = ssub.s32 %s9, 1
      // Predicated region
      $region13: #{resnet_forward.11} parent=11 // pred_check
        %p118 = pneg %p56
      $region14: #{resnet_forward.11} parent=11 // pred_check_branch
        %120 = sbr.rel (%p118) target = $region16
      $region15: #{resnet_forward.11} parent=11 // pred_region
        _
      $region16: #{resnet_forward.11} parent=11 // pred_fallthru
        _
      // Predicated region
      $region17: #{resnet_forward.11} parent=11 // pred_check
        %p121 = pneg %p77
      $region18: #{resnet_forward.11} parent=11 // pred_check_branch
        %123 = sbr.rel (%p121) target = $region20
      $region19: #{resnet_forward.11} parent=11 // pred_region
        _
      $region20: #{resnet_forward.11} parent=11 // pred_fallthru
        _
    $region12: #{resnet_forward.11} parent=5 // pred_fallthru
      _
    %p124 = scmp.lt.s32.totalorder %s9, 4
    // Predicated region
    $region21: #{resnet_forward.11} parent=5 // pred_check
      %p125 = pneg %p124
    $region22: #{resnet_forward.11} parent=5 // pred_check_branch
      %127 = sbr.rel (%p125) target = $region24
    $region23: #{resnet_forward.11} parent=5 // pred_region
      // Predicated region
      $region25: #{resnet_forward.11} parent=23 // pred_check
        %p128 = pneg %p29
      $region26: #{resnet_forward.11} parent=23 // pred_check_branch
        %130 = sbr.rel (%p128) target = $region28
      $region27: #{resnet_forward.11} parent=23 // pred_region
        %s131 = smul.u32 49, %s9
        %p132 = scmp.lt.s32.totalorder %s131, 195
        %s133 = scalar_select %p132, %s131, 195
        %s134 = smul.addr %s133, 4
        %s135 = scalar_lea.vmem %s0, %s134
        %s136 = smul.u32 49, %s9
      $region28: #{resnet_forward.11} parent=23 // pred_fallthru
        _
    $region24: #{resnet_forward.11} parent=5 // pred_fallthru
      _
    %p137 = scmp.le.s32.totalorder 1, %s9
    %p138 = scmp.lt.s32.totalorder %s9, 5
    %p139 = pnand %p137, %p138
    %p140 = pneg %p139
    // Predicated region
    $region29: #{resnet_forward.11} parent=5 // pred_check
      _
    $region30: #{resnet_forward.11} parent=5 // pred_check_branch
      %142 = sbr.rel (%p139) target = $region32
    $region31: #{resnet_forward.11} parent=5 // pred_region
      %s143 = ssub.s32 %s9, 1
      %s144 = smul.u32 49, %s14
      %p145 = scmp.lt.s32.totalorder %s144, 195
      %s146 = scalar_select %p145, %s144, 195
      %s147 = smul.addr %s146, 4
      %s148 = scalar_lea.vmem %s0, %s147
      %p149 = pneg %p35
      %p150 = pneg %p32
      %p151 = pneg %p56
      %p152 = pneg %p53
      %p153 = pneg %p77
      %p154 = pneg %p74
      %p155 = pneg %p103
      %p156 = pneg %p100
      %s157 = smul.u32 49, %s14
      %p158 = scmp.lt.s32.totalorder %s157, 195
      %s159 = scalar_select %p158, %s157, 195
      %s160 = smul.addr %s159, 8
      %s161 = scalar_lea.vmem %s3, %s160
      %s162 = smul.u32 49, %s14
      %p163 = scmp.lt.s32.totalorder %s162, 195
      %s164 = scalar_select %p163, %s162, 195
      %s165 = smul.addr %s164, 4
      %s166 = scalar_lea.vmem %s0, %s165
      %s167 = smul.u32 49, %s14
      %s168 = smul.u32 49, %s14
      %p169 = scmp.lt.s32.totalorder %s168, 195
      %s170 = scalar_select %p169, %s168, 195
      %s171 = smul.addr %s170, 8
      %s172 = scalar_lea.vmem %s3, %s171
      %s173 = smul.u32 49, %s14
      %v175 = vld [vmem:[%s166] sm:$0xf]
      %v176 = vld [vmem:[%s166 + $0x4] sm:$0xf]
      %v177 = vld [vmem:[%s166 + $0x8] sm:$0xf]
      %v178 = vld [vmem:[%s166 + $0xc] sm:$0xf]
      %v179 = vld [vmem:[%s166 + $0x10] sm:$0xf]
      %v180 = vld [vmem:[%s166 + $0x14] sm:$0xf]
      %v181 = vld [vmem:[%s166 + $0x18] sm:$0xf]
      %v182 = vld [vmem:[%s166 + $0x1c] sm:$0xf]
      %v183 = vld [vmem:[%s166 + $0x20] sm:$0xf]
      %v184 = vld [vmem:[%s166 + $0x24] sm:$0xf]
      %v185 = vld [vmem:[%s166 + $0x28] sm:$0xf]
      %v186 = vld [vmem:[%s166 + $0x2c] sm:$0xf]
      %v187 = vld [vmem:[%s166 + $0x30] sm:$0xf]
      %v188 = vld [vmem:[%s166 + $0x34] sm:$0xf]
      %v189 = vld [vmem:[%s166 + $0x38] sm:$0xf]
      %v190 = vld [vmem:[%s166 + $0x3c] sm:$0xf]
      %v191 = vld [vmem:[%s166 + $0x40] sm:$0xf]
      %v192 = vld [vmem:[%s166 + $0x44] sm:$0xf]
      %v193 = vld [vmem:[%s166 + $0x48] sm:$0xf]
      %v194 = vld [vmem:[%s166 + $0x4c] sm:$0xf]
      %v195 = vld [vmem:[%s166 + $0x50] sm:$0xf]
      %v196 = vld [vmem:[%s166 + $0x54] sm:$0xf]
      %v197 = vld [vmem:[%s166 + $0x58] sm:$0xf]
      %v198 = vld [vmem:[%s166 + $0x5c] sm:$0xf]
      %v199 = vld [vmem:[%s166 + $0x60] sm:$0xf]
      %v200 = vld [vmem:[%s166 + $0x64] sm:$0xf]
      %v201 = vld [vmem:[%s166 + $0x68] sm:$0xf]
      %v202 = vld [vmem:[%s166 + $0x6c] sm:$0xf]
      %v203 = vld [vmem:[%s166 + $0x70] sm:$0xf]
      %v204 = vld [vmem:[%s166 + $0x74] sm:$0xf]
      %v205 = vld [vmem:[%s166 + $0x78] sm:$0xf]
      %v206 = vld [vmem:[%s166 + $0x7c] sm:$0xf]
      %v207 = vld [vmem:[%s166 + $0x80] sm:$0xf]
      %v208 = vld [vmem:[%s166 + $0x84] sm:$0xf]
      %v209 = vld [vmem:[%s166 + $0x88] sm:$0xf]
      %v210 = vld [vmem:[%s166 + $0x8c] sm:$0xf]
      %v211 = vld [vmem:[%s166 + $0x90] sm:$0xf]
      %v212 = vld [vmem:[%s166 + $0x94] sm:$0xf]
      %v213 = vld [vmem:[%s166 + $0x98] sm:$0xf]
      %v214 = vld [vmem:[%s166 + $0x9c] sm:$0xf]
      %v215 = vld [vmem:[%s166 + $0xa0] sm:$0xf]
      %v216 = vld [vmem:[%s166 + $0xa4] sm:$0xf]
      %v217 = vld [vmem:[%s166 + $0xa8] sm:$0xf]
      %v218 = vld [vmem:[%s166 + $0xac] sm:$0xf]
      %v219 = vld [vmem:[%s166 + $0xb0] sm:$0xf]
      %v220 = vld [vmem:[%s166 + $0xb4] sm:$0xf]
      %v221 = vld [vmem:[%s166 + $0xb8] sm:$0xf]
      %v222 = vld [vmem:[%s166 + $0xbc] sm:$0xf]
      %v223 = vld [vmem:[%s166 + $0xc0] sm:$0xf]
      %v224 = vld [vmem:[%s1] sm:$0xf]
      %v225 = vld [vmem:[%s1 + $0x4] sm:$0xf]
      %v226 = vld [vmem:[%s1 + $0x8] sm:$0xf]
      %v227 = vld [vmem:[%s1 + $0xc] sm:$0xf]
      %v228 = vld [vmem:[%s1 + $0x10] sm:$0xf]
      %v229 = vld [vmem:[%s1 + $0x14] sm:$0xf]
      %v230 = vld [vmem:[%s1 + $0x18] sm:$0xf]
      %v231 = vld [vmem:[%s1 + $0x1c] sm:$0xf]
      %v232 = vld [vmem:[%s1 + $0x20] sm:$0xf]
      %v233 = vld [vmem:[%s2] sm:$0x1]
      %v235 = vlaneseq
      %v236 = vshrl.u32 %v235, 7
      %v237 = vsub.s32 0, %v236
      %v238 = vrot.slane %v233, %v237
      %v289 = vunpack.c.l.b16 %v175
      %v290 = vunpack.c.l.b16 %v176
      %v291 = vunpack.c.l.b16 %v177
      %v292 = vunpack.c.l.b16 %v178
      %v293 = vunpack.c.l.b16 %v179
      %v294 = vunpack.c.l.b16 %v180
      %v295 = vunpack.c.l.b16 %v181
      %v296 = vunpack.c.l.b16 %v182
      %v297 = vunpack.c.l.b16 %v183
      %v298 = vunpack.c.l.b16 %v184
      %v299 = vunpack.c.l.b16 %v185
      %v300 = vunpack.c.l.b16 %v186
      %v301 = vunpack.c.l.b16 %v187
      %v302 = vunpack.c.l.b16 %v188
      %v303 = vunpack.c.l.b16 %v189
      %v304 = vunpack.c.l.b16 %v190
      %v305 = vunpack.c.l.b16 %v191
      %v306 = vunpack.c.l.b16 %v192
      %v307 = vunpack.c.l.b16 %v193
      %v308 = vunpack.c.l.b16 %v194
      %v309 = vunpack.c.l.b16 %v195
      %v310 = vunpack.c.l.b16 %v196
      %v311 = vunpack.c.l.b16 %v197
      %v312 = vunpack.c.l.b16 %v198
      %v313 = vunpack.c.l.b16 %v199
      %v314 = vunpack.c.l.b16 %v200
      %v315 = vunpack.c.l.b16 %v201
      %v316 = vunpack.c.l.b16 %v202
      %v317 = vunpack.c.l.b16 %v203
      %v318 = vunpack.c.l.b16 %v204
      %v319 = vunpack.c.l.b16 %v205
      %v320 = vunpack.c.l.b16 %v206
      %v321 = vunpack.c.l.b16 %v207
      %v322 = vunpack.c.l.b16 %v208
      %v323 = vunpack.c.l.b16 %v209
      %v324 = vunpack.c.l.b16 %v210
      %v325 = vunpack.c.l.b16 %v211
      %v326 = vunpack.c.l.b16 %v212
      %v327 = vunpack.c.l.b16 %v213
      %v328 = vunpack.c.l.b16 %v214
      %v329 = vunpack.c.l.b16 %v215
      %v330 = vunpack.c.l.b16 %v216
      %v331 = vunpack.c.l.b16 %v217
      %v332 = vunpack.c.l.b16 %v218
      %v333 = vunpack.c.l.b16 %v219
      %v334 = vunpack.c.l.b16 %v220
      %v335 = vunpack.c.l.b16 %v221
      %v336 = vunpack.c.l.b16 %v222
      %v337 = vunpack.c.l.b16 %v223
      %v338 = vpack.c.b16 %v290, %v289
      %v339 = vpack.c.b16 %v292, %v291
      %v340 = vpack.c.b16 %v294, %v293
      %v341 = vpack.c.b16 %v296, %v295
      %v342 = vpack.c.b16 %v298, %v297
      %v343 = vpack.c.b16 %v300, %v299
      %v344 = vpack.c.b16 %v302, %v301
      %v345 = vpack.c.b16 %v304, %v303
      %v346 = vpack.c.b16 %v306, %v305
      %v347 = vpack.c.b16 %v308, %v307
      %v348 = vpack.c.b16 %v310, %v309
      %v349 = vpack.c.b16 %v312, %v311
      %v350 = vpack.c.b16 %v314, %v313
      %v351 = vpack.c.b16 %v316, %v315
      %v352 = vpack.c.b16 %v318, %v317
      %v353 = vpack.c.b16 %v320, %v319
      %v354 = vpack.c.b16 %v322, %v321
      %v355 = vpack.c.b16 %v324, %v323
      %v356 = vpack.c.b16 %v326, %v325
      %v357 = vpack.c.b16 %v328, %v327
      %v358 = vpack.c.b16 %v330, %v329
      %v359 = vpack.c.b16 %v332, %v331
      %v360 = vpack.c.b16 %v334, %v333
      %v361 = vpack.c.b16 %v336, %v335
      %v362 = vpack.c.b16 %v337, %v337
      %v372 = vunpack.c.l.b16 %v224
      %v373 = vunpack.c.l.b16 %v225
      %v374 = vunpack.c.l.b16 %v226
      %v375 = vunpack.c.l.b16 %v227
      %v376 = vunpack.c.l.b16 %v228
      %v377 = vunpack.c.l.b16 %v229
      %v378 = vunpack.c.l.b16 %v230
      %v379 = vunpack.c.l.b16 %v231
      %v380 = vunpack.c.l.b16 %v232
      %v381 = vpack.c.b16 %v373, %v372
      %v382 = vpack.c.b16 %v375, %v374
      %v383 = vpack.c.b16 %v377, %v376
      %v384 = vpack.c.b16 %v379, %v378
      %v385 = vpack.c.b16 %v380, %v380
      %vm390 = vcmask 588800
      %v392 = vsel %vm390, %v338, 0
      %v395 = vsel %vm390, %v339, 0
      %v398 = vsel %vm390, %v340, 0
      %v401 = vsel %vm390, %v341, 0
      %v404 = vsel %vm390, %v342, 0
      %v407 = vsel %vm390, %v343, 0
      %v410 = vsel %vm390, %v344, 0
      %v413 = vsel %vm390, %v345, 0
      %v416 = vsel %vm390, %v346, 0
      %v419 = vsel %vm390, %v347, 0
      %v422 = vsel %vm390, %v348, 0
      %v425 = vsel %vm390, %v349, 0
      %v428 = vsel %vm390, %v350, 0
      %v431 = vsel %vm390, %v351, 0
      %v434 = vsel %vm390, %v352, 0
      %v437 = vsel %vm390, %v353, 0
      %v440 = vsel %vm390, %v354, 0
      %v443 = vsel %vm390, %v355, 0
      %v446 = vsel %vm390, %v356, 0
      %v449 = vsel %vm390, %v357, 0
      %v452 = vsel %vm390, %v358, 0
      %v455 = vsel %vm390, %v359, 0
      %v458 = vsel %vm390, %v360, 0
      %v461 = vsel %vm390, %v361, 0
      %v464 = vsel %vm390, %v362, 0
      %vm466 = vcmask 1043456
      %v468 = vsel %vm466, %v385, 0
      %470 = vmatprep.subr.bf16.mxu0 0
      %471 = vmatpush1.bf16.msra.mxu0 %v381
      %472 = vmatprep.subr.bf16.mxu0 0
      %473 = vmatpush1.bf16.msra.mxu0 %v382
      %474 = vmatprep.subr.bf16.mxu0 0
      %475 = vmatpush1.bf16.msra.mxu0 %v383
      %476 = vmatprep.subr.bf16.mxu0 0
      %477 = vmatpush1.bf16.msra.mxu0 %v384
      %478 = vmatprep.subr.bf16.mxu0 0
      %479 = vmatpush1.bf16.msra.mxu0 %v468
      %480 = vmatprep.subr.bf16.mxu0 0
      %481 = vmatpush1.bf16.msra.mxu0 0
      %482 = vmatprep.subr.bf16.mxu0 0
      %483 = vmatpush1.bf16.msra.mxu0 0
      %484 = vmatprep.subr.bf16.mxu0 0
      %485 = vmatpush1.bf16.msra.mxu0 0
      %486 = vmatprep.subr.bf16.mxu0 0
      %487 = vmatpush1.bf16.msra.mxu0 0
      %488 = vmatprep.subr.bf16.mxu0 0
      %489 = vmatpush1.bf16.msra.mxu0 0
      %490 = vmatprep.subr.bf16.mxu0 0
      %491 = vmatpush1.bf16.msra.mxu0 0
      %492 = vmatprep.subr.bf16.mxu0 0
      %493 = vmatpush1.bf16.msra.mxu0 0
      %494 = vmatprep.subr.bf16.mxu0 0
      %495 = vmatpush1.bf16.msra.mxu0 0
      %496 = vmatprep.subr.bf16.mxu0 0
      %497 = vmatpush1.bf16.msra.mxu0 0
      %498 = vmatprep.subr.bf16.mxu0 0
      %499 = vmatpush1.bf16.msra.mxu0 0
      %500 = vmatprep.subr.bf16.mxu0 0
      %501 = vmatpush1.bf16.msra.mxu0 0
      %502 = vmatprep.mubr.bf16.mxu0 0
      %503 = vmatmul.mubr.bf16.gmra.mrb[0].mxu0 %v392
      %v504 = vpop.f32.mrb[0].mxu0
      %v505 = vadd.f32 %v238, %v504
      %v506 = vpop.f32.mrb[0].mxu0
      %v507 = vpop.f32.mrb[0].mxu0
      %v508 = vadd.f32 %v238, %v507
      %v509 = vpop.f32.mrb[0].mxu0
      %510 = vmatprep.mubr.bf16.mxu0 0
      %511 = vmatmul.mubr.bf16.gmra.mrb[0].mxu0 %v395
      %v512 = vpop.f32.mrb[0].mxu0
      %v513 = vadd.f32 %v238, %v512
      %v514 = vpop.f32.mrb[0].mxu0
      %v515 = vpop.f32.mrb[0].mxu0
      %v516 = vadd.f32 %v238, %v515
      %v517 = vpop.f32.mrb[0].mxu0
      %518 = vmatprep.mubr.bf16.mxu0 0
      %519 = vmatmul.mubr.bf16.gmra.mrb[0].mxu0 %v398
      %v520 = vpop.f32.mrb[0].mxu0
      %v521 = vadd.f32 %v238, %v520
      %v522 = vpop.f32.mrb[0].mxu0
      %v523 = vpop.f32.mrb[0].mxu0
      %v524 = vadd.f32 %v238, %v523
      %v525 = vpop.f32.mrb[0].mxu0
      %526 = vmatprep.mubr.bf16.mxu0 0
      %527 = vmatmul.mubr.bf16.gmra.mrb[0].mxu0 %v401
      %v528 = vpop.f32.mrb[0].mxu0
      %v529 = vadd.f32 %v238, %v528
      %v530 = vpop.f32.mrb[0].mxu0
      %v531 = vpop.f32.mrb[0].mxu0
      %v532 = vadd.f32 %v238, %v531
      %v533 = vpop.f32.mrb[0].mxu0
      %534 = vmatprep.mubr.bf16.mxu0 0
      %535 = vmatmul.mubr.bf16.gmra.mrb[0].mxu0 %v404
      %v536 = vpop.f32.mrb[0].mxu0
      %v537 = vadd.f32 %v238, %v536
      %v538 = vpop.f32.mrb[0].mxu0
      %v539 = vpop.f32.mrb[0].mxu0
      %v540 = vadd.f32 %v238, %v539
      %v541 = vpop.f32.mrb[0].mxu0
      %542 = vmatprep.mubr.bf16.mxu0 0
      %543 = vmatmul.mubr.bf16.gmra.mrb[0].mxu0 %v407
      %v544 = vpop.f32.mrb[0].mxu0
      %v545 = vadd.f32 %v238, %v544
      %v546 = vpop.f32.mrb[0].mxu0
      %v547 = vpop.f32.mrb[0].mxu0
      %v548 = vadd.f32 %v238, %v547
      %v549 = vpop.f32.mrb[0].mxu0
      %550 = vmatprep.mubr.bf16.mxu0 0
      %551 = vmatmul.mubr.bf16.gmra.mrb[0].mxu0 %v410
      %v552 = vpop.f32.mrb[0].mxu0
      %v553 = vadd.f32 %v238, %v552
      %v554 = vpop.f32.mrb[0].mxu0
      %v555 = vpop.f32.mrb[0].mxu0
      %v556 = vadd.f32 %v238, %v555
      %v557 = vpop.f32.mrb[0].mxu0
      %558 = vmatprep.mubr.bf16.mxu0 0
      %559 = vmatmul.mubr.bf16.gmra.mrb[0].mxu0 %v413
      %v560 = vpop.f32.mrb[0].mxu0
      %v561 = vadd.f32 %v238, %v560
      %v562 = vpop.f32.mrb[0].mxu0
      %v563 = vpop.f32.mrb[0].mxu0
      %v564 = vadd.f32 %v238, %v563
      %v565 = vpop.f32.mrb[0].mxu0
      %566 = vmatprep.mubr.bf16.mxu0 0
      %567 = vmatmul.mubr.bf16.gmra.mrb[0].mxu0 %v416
      %v568 = vpop.f32.mrb[0].mxu0
      %v569 = vadd.f32 %v238, %v568
      %v570 = vpop.f32.mrb[0].mxu0
      %v571 = vpop.f32.mrb[0].mxu0
      %v572 = vadd.f32 %v238, %v571
      %v573 = vpop.f32.mrb[0].mxu0
      %574 = vmatprep.mubr.bf16.mxu0 0
      %575 = vmatmul.mubr.bf16.gmra.mrb[0].mxu0 %v419
      %v576 = vpop.f32.mrb[0].mxu0
      %v577 = vadd.f32 %v238, %v576
      %v578 = vpop.f32.mrb[0].mxu0
      %v579 = vpop.f32.mrb[0].mxu0
      %v580 = vadd.f32 %v238, %v579
      %v581 = vpop.f32.mrb[0].mxu0
      %582 = vmatprep.mubr.bf16.mxu0 0
      %583 = vmatmul.mubr.bf16.gmra.mrb[0].mxu0 %v422
      %v584 = vpop.f32.mrb[0].mxu0
      %v585 = vadd.f32 %v238, %v584
      %v586 = vpop.f32.mrb[0].mxu0
      %v587 = vpop.f32.mrb[0].mxu0
      %v588 = vadd.f32 %v238, %v587
      %v589 = vpop.f32.mrb[0].mxu0
      %590 = vmatprep.mubr.bf16.mxu0 0
      %591 = vmatmul.mubr.bf16.gmra.mrb[0].mxu0 %v425
      %v592 = vpop.f32.mrb[0].mxu0
      %v593 = vadd.f32 %v238, %v592
      %v594 = vpop.f32.mrb[0].mxu0
      %v595 = vpop.f32.mrb[0].mxu0
      %v596 = vadd.f32 %v238, %v595
      %v597 = vpop.f32.mrb[0].mxu0
      %598 = vmatprep.mubr.bf16.mxu0 0
      %599 = vmatmul.mubr.bf16.gmra.mrb[0].mxu0 %v428
      %v600 = vpop.f32.mrb[0].mxu0
      %v601 = vadd.f32 %v238, %v600
      %v602 = vpop.f32.mrb[0].mxu0
      %v603 = vpop.f32.mrb[0].mxu0
      %v604 = vadd.f32 %v238, %v603
      %v605 = vpop.f32.mrb[0].mxu0
      %606 = vmatprep.mubr.bf16.mxu0 0
      %607 = vmatmul.mubr.bf16.gmra.mrb[0].mxu0 %v431
      %v608 = vpop.f32.mrb[0].mxu0
      %v609 = vadd.f32 %v238, %v608
      %v610 = vpop.f32.mrb[0].mxu0
      %v611 = vpop.f32.mrb[0].mxu0
      %v612 = vadd.f32 %v238, %v611
      %v613 = vpop.f32.mrb[0].mxu0
      %614 = vmatprep.mubr.bf16.mxu0 0
      %615 = vmatmul.mubr.bf16.gmra.mrb[0].mxu0 %v434
      %v616 = vpop.f32.mrb[0].mxu0
      %v617 = vadd.f32 %v238, %v616
      %v618 = vpop.f32.mrb[0].mxu0
      %v619 = vpop.f32.mrb[0].mxu0
      %v620 = vadd.f32 %v238, %v619
      %v621 = vpop.f32.mrb[0].mxu0
      %622 = vmatprep.mubr.bf16.mxu0 0
      %623 = vmatmul.mubr.bf16.gmra.mrb[0].mxu0 %v437
      %v624 = vpop.f32.mrb[0].mxu0
      %v625 = vadd.f32 %v238, %v624
      %v626 = vpop.f32.mrb[0].mxu0
      %v627 = vpop.f32.mrb[0].mxu0
      %v628 = vadd.f32 %v238, %v627
      %v629 = vpop.f32.mrb[0].mxu0
      %630 = vmatprep.mubr.bf16.mxu0 0
      %631 = vmatmul.mubr.bf16.gmra.mrb[0].mxu0 %v440
      %v632 = vpop.f32.mrb[0].mxu0
      %v633 = vadd.f32 %v238, %v632
      %v634 = vpop.f32.mrb[0].mxu0
      %v635 = vpop.f32.mrb[0].mxu0
      %v636 = vadd.f32 %v238, %v635
      %v637 = vpop.f32.mrb[0].mxu0
      %638 = vmatprep.mubr.bf16.mxu0 0
      %639 = vmatmul.mubr.bf16.gmra.mrb[0].mxu0 %v443
      %v640 = vpop.f32.mrb[0].mxu0
      %v641 = vadd.f32 %v238, %v640
      %v642 = vpop.f32.mrb[0].mxu0
      %v643 = vpop.f32.mrb[0].mxu0
      %v644 = vadd.f32 %v238, %v643
      %v645 = vpop.f32.mrb[0].mxu0
      %646 = vmatprep.mubr.bf16.mxu0 0
      %647 = vmatmul.mubr.bf16.gmra.mrb[0].mxu0 %v446
      %v648 = vpop.f32.mrb[0].mxu0
      %v649 = vadd.f32 %v238, %v648
      %v650 = vpop.f32.mrb[0].mxu0
      %v651 = vpop.f32.mrb[0].mxu0
      %v652 = vadd.f32 %v238, %v651
      %v653 = vpop.f32.mrb[0].mxu0
      %654 = vmatprep.mubr.bf16.mxu0 0
      %655 = vmatmul.mubr.bf16.gmra.mrb[0].mxu0 %v449
      %v656 = vpop.f32.mrb[0].mxu0
      %v657 = vadd.f32 %v238, %v656
      %v658 = vpop.f32.mrb[0].mxu0
      %v659 = vpop.f32.mrb[0].mxu0
      %v660 = vadd.f32 %v238, %v659
      %v661 = vpop.f32.mrb[0].mxu0
      %662 = vmatprep.mubr.bf16.mxu0 0
      %663 = vmatmul.mubr.bf16.gmra.mrb[0].mxu0 %v452
      %v664 = vpop.f32.mrb[0].mxu0
      %v665 = vadd.f32 %v238, %v664
      %v666 = vpop.f32.mrb[0].mxu0
      %v667 = vpop.f32.mrb[0].mxu0
      %v668 = vadd.f32 %v238, %v667
      %v669 = vpop.f32.mrb[0].mxu0
      %670 = vmatprep.mubr.bf16.mxu0 0
      %671 = vmatmul.mubr.bf16.gmra.mrb[0].mxu0 %v455
      %v672 = vpop.f32.mrb[0].mxu0
      %v673 = vadd.f32 %v238, %v672
      %v674 = vpop.f32.mrb[0].mxu0
      %v675 = vpop.f32.mrb[0].mxu0
      %v676 = vadd.f32 %v238, %v675
      %v677 = vpop.f32.mrb[0].mxu0
      %678 = vmatprep.mubr.bf16.mxu0 0
      %679 = vmatmul.mubr.bf16.gmra.mrb[0].mxu0 %v458
      %v680 = vpop.f32.mrb[0].mxu0
      %v681 = vadd.f32 %v238, %v680
      %v682 = vpop.f32.mrb[0].mxu0
      %v683 = vpop.f32.mrb[0].mxu0
      %v684 = vadd.f32 %v238, %v683
      %v685 = vpop.f32.mrb[0].mxu0
      %686 = vmatprep.mubr.bf16.mxu0 0
      %687 = vmatmul.mubr.bf16.gmra.mrb[0].mxu0 %v461
      %v688 = vpop.f32.mrb[0].mxu0
      %v689 = vadd.f32 %v238, %v688
      %v690 = vpop.f32.mrb[0].mxu0
      %v691 = vpop.f32.mrb[0].mxu0
      %v692 = vadd.f32 %v238, %v691
      %v693 = vpop.f32.mrb[0].mxu0
      %694 = vmatprep.mubr.bf16.mxu0 0
      %695 = vmatmul.mubr.bf16.gmra.mrb[0].mxu0 %v464
      %v696 = vpop.f32.mrb[0].mxu0
      %v697 = vadd.f32 %v238, %v696
      %v698 = vpop.f32.mrb[0].mxu0
      %v699 = vpop.f32.mrb[0].mxu0
      %v700 = vpop.f32.mrb[0].mxu0
      %701 = vdwg.mxu0
      %vm702 = vcmask 261120
      %703 = vst.msk [vmem:[%s172] sm:$0xff] %vm702, %v505
      %704 = vst.msk [vmem:[%s172 + $0x8] sm:$0xff] %vm702, %v508
      %705 = vst.msk [vmem:[%s172 + $0x10] sm:$0xff] %vm702, %v513
      %706 = vst.msk [vmem:[%s172 + $0x18] sm:$0xff] %vm702, %v516
      %707 = vst.msk [vmem:[%s172 + $0x20] sm:$0xff] %vm702, %v521
      %708 = vst.msk [vmem:[%s172 + $0x28] sm:$0xff] %vm702, %v524
      %709 = vst.msk [vmem:[%s172 + $0x30] sm:$0xff] %vm702, %v529
      %710 = vst.msk [vmem:[%s172 + $0x38] sm:$0xff] %vm702, %v532
      %711 = vst.msk [vmem:[%s172 + $0x40] sm:$0xff] %vm702, %v537
      %712 = vst.msk [vmem:[%s172 + $0x48] sm:$0xff] %vm702, %v540
      %713 = vst.msk [vmem:[%s172 + $0x50] sm:$0xff] %vm702, %v545
      %714 = vst.msk [vmem:[%s172 + $0x58] sm:$0xff] %vm702, %v548
      %715 = vst.msk [vmem:[%s172 + $0x60] sm:$0xff] %vm702, %v553
      %716 = vst.msk [vmem:[%s172 + $0x68] sm:$0xff] %vm702, %v556
      %717 = vst.msk [vmem:[%s172 + $0x70] sm:$0xff] %vm702, %v561
      %718 = vst.msk [vmem:[%s172 + $0x78] sm:$0xff] %vm702, %v564
      %719 = vst.msk [vmem:[%s172 + $0x80] sm:$0xff] %vm702, %v569
      %720 = vst.msk [vmem:[%s172 + $0x88] sm:$0xff] %vm702, %v572
      %721 = vst.msk [vmem:[%s172 + $0x90] sm:$0xff] %vm702, %v577
      %722 = vst.msk [vmem:[%s172 + $0x98] sm:$0xff] %vm702, %v580
      %723 = vst.msk [vmem:[%s172 + $0xa0] sm:$0xff] %vm702, %v585
      %724 = vst.msk [vmem:[%s172 + $0xa8] sm:$0xff] %vm702, %v588
      %725 = vst.msk [vmem:[%s172 + $0xb0] sm:$0xff] %vm702, %v593
      %726 = vst.msk [vmem:[%s172 + $0xb8] sm:$0xff] %vm702, %v596
      %727 = vst.msk [vmem:[%s172 + $0xc0] sm:$0xff] %vm702, %v601
      %728 = vst.msk [vmem:[%s172 + $0xc8] sm:$0xff] %vm702, %v604
      %729 = vst.msk [vmem:[%s172 + $0xd0] sm:$0xff] %vm702, %v609
      %730 = vst.msk [vmem:[%s172 + $0xd8] sm:$0xff] %vm702, %v612
      %731 = vst.msk [vmem:[%s172 + $0xe0] sm:$0xff] %vm702, %v617
      %732 = vst.msk [vmem:[%s172 + $0xe8] sm:$0xff] %vm702, %v620
      %733 = vst.msk [vmem:[%s172 + $0xf0] sm:$0xff] %vm702, %v625
      %734 = vst.msk [vmem:[%s172 + $0xf8] sm:$0xff] %vm702, %v628
      %735 = vst.msk [vmem:[%s172 + $0x100] sm:$0xff] %vm702, %v633
      %736 = vst.msk [vmem:[%s172 + $0x108] sm:$0xff] %vm702, %v636
      %737 = vst.msk [vmem:[%s172 + $0x110] sm:$0xff] %vm702, %v641
      %738 = vst.msk [vmem:[%s172 + $0x118] sm:$0xff] %vm702, %v644
      %739 = vst.msk [vmem:[%s172 + $0x120] sm:$0xff] %vm702, %v649
      %740 = vst.msk [vmem:[%s172 + $0x128] sm:$0xff] %vm702, %v652
      %741 = vst.msk [vmem:[%s172 + $0x130] sm:$0xff] %vm702, %v657
      %742 = vst.msk [vmem:[%s172 + $0x138] sm:$0xff] %vm702, %v660
      %743 = vst.msk [vmem:[%s172 + $0x140] sm:$0xff] %vm702, %v665
      %744 = vst.msk [vmem:[%s172 + $0x148] sm:$0xff] %vm702, %v668
      %745 = vst.msk [vmem:[%s172 + $0x150] sm:$0xff] %vm702, %v673
      %746 = vst.msk [vmem:[%s172 + $0x158] sm:$0xff] %vm702, %v676
      %747 = vst.msk [vmem:[%s172 + $0x160] sm:$0xff] %vm702, %v681
      %748 = vst.msk [vmem:[%s172 + $0x168] sm:$0xff] %vm702, %v684
      %749 = vst.msk [vmem:[%s172 + $0x170] sm:$0xff] %vm702, %v689
      %750 = vst.msk [vmem:[%s172 + $0x178] sm:$0xff] %vm702, %v692
      %751 = vst.msk [vmem:[%s172 + $0x180] sm:$0xff] %vm702, %v697
      %s752 = smul.u32 49, %s14
      %p753 = scmp.lt.s32.totalorder %s752, 195
      %s754 = scalar_select %p753, %s752, 195
      %s755 = smul.addr %s754, 8
      %s756 = scalar_lea.vmem %s3, %s755
      // Predicated region
      $region33: #{resnet_forward.11} parent=31 // pred_check
        %p757 = pneg %p100
      $region34: #{resnet_forward.11} parent=31 // pred_check_branch
        %759 = sbr.rel (%p757) target = $region36
      $region35: #{resnet_forward.11} parent=31 // pred_region
        %s760 = smul.u32 49, %s14
      $region36: #{resnet_forward.11} parent=31 // pred_fallthru
        _
    $region32: #{resnet_forward.11} parent=5 // pred_fallthru
      _
    %p761 = scmp.le.s32.totalorder 2, %s9
    // Predicated region
    $region37: #{resnet_forward.11} parent=5 // pred_check
      %p762 = pneg %p761
    $region38: #{resnet_forward.11} parent=5 // pred_check_branch
      %764 = sbr.rel (%p762) target = $region40
    $region39: #{resnet_forward.11} parent=5 // pred_region
      %s765 = ssub.s32 %s9, 2
      // Predicated region
      $region41: #{resnet_forward.11} parent=39 // pred_check
        %p766 = pneg %p106
      $region42: #{resnet_forward.11} parent=39 // pred_check_branch
        %768 = sbr.rel (%p766) target = $region44
      $region43: #{resnet_forward.11} parent=39 // pred_region
        %s769 = smul.u32 49, %s15
        %p770 = scmp.lt.s32.totalorder %s769, 195
        %s771 = scalar_select %p770, %s769, 195
        %s772 = smul.addr %s771, 8
        %s773 = scalar_lea.vmem %s3, %s772
      $region44: #{resnet_forward.11} parent=39 // pred_fallthru
        _
    $region40: #{resnet_forward.11} parent=5 // pred_fallthru
      _
  $region6: #{resnet_forward.11} parent=0 // loop_footer
    %s13 = sadd.s32 1, %s9
  $region7: #{resnet_forward.11} parent=0 // loop_footer_branch
    %8 = sbr.rel target = $region3
  $region8: #{resnet_forward.11} parent=0 // loop_exit
    _

// kernel: resnet_forward.13
$region0: #{resnet_forward.13}
  #allocation0 [shape = 'u32[]', space=smem, size = 0x4, offset = 0x4, fixed_abs, tag = 'smem constant byte address 0x4 - core index']
  #allocation1 [shape = 'u32[144,128]{1,0:T(1,128)}', space=vmem, size = 0x12000, scoped, tag = 'internal scratch']
  %s0 = inlined_call_operand.vmem [shape: f32[1568,32], index: 0, kind: input, shape index: {}]
  %s1 = inlined_call_operand.vmem [shape: f32[1,32], index: 1, kind: input, shape index: {}]
  %s2 = inlined_call_operand.vmem [shape: f32[1,32], index: 2, kind: input, shape index: {}]
  %s3 = inlined_call_operand.vmem [shape: f32[1568,32], index: 3, kind: output, shape index: {}]
  %s4 = sld [smem:[#allocation0]]
  $region45: #{resnet_forward.13} parent=0
    _
  %s6 = ssub.s32 1, %s4
  %s7 = scalar_select 0, %s6, %s4
  loop: start=0, step=1, limit=6
  $region2: #{resnet_forward.13} parent=0 // loop_pre_header
    _
  $region3: #{resnet_forward.13} parent=0 // loop_header
    %s9 = sphi 0, %s13
    %p10 = scmp.ge.s32.totalorder %s9, 6
    %s19 = sphi 0, %s21
    %s22 = sphi 0, %s19
    %s23 = sphi 0, %s22
    %s39 = sphi 0, %s23
    %s43 = sphi 0, %s43
    %s45 = sphi 0, %s43
    %s46 = sphi 0, %s45
    %s60 = sphi 0, %s46
    %s64 = sphi 0, %s64
    %s66 = sphi 0, %s64
    %s67 = sphi 0, %s66
    %s81 = sphi 0, %s67
    %s87 = sphi 0, %s89
    %s90 = sphi 0, %s87
    %s91 = sphi 0, %s90
    %s107 = sphi 0, %s91
  $region4: #{resnet_forward.13} parent=0 // loop_header_branch
    %12 = sbr.rel (%p10) target = $region8
  $region5: #{resnet_forward.13} parent=0 // loop_body
    %s14 = ssub.s32 %s9, 1
    %s15 = ssub.s32 %s9, 2
    %s16 = sadd.s32 %s9, 1
    %s17 = ssub.s32 %s9, %s16
    %p18 = scmp.eq.s32.totalorder %s17, 0
    %s20 = sadd.s32 %s19, 1
    %s21 = scalar_select %p18, %s19, %s20
    %p24 = pneg %p18
    %p25 = scmp.eq.s32.totalorder %s9, 3
    %p26 = por %p24, %p25
    %p27 = scmp.ne.s32.totalorder %s19, %s22
    %p28 = scmp.eq.s32.totalorder %s9, 0
    %p29 = por %p27, %p28
    %p30 = scmp.ne.s32.totalorder %s19, %s22
    %p31 = scmp.eq.s32.totalorder %s14, 3
    %p32 = por %p30, %p31
    %p33 = scmp.ne.s32.totalorder %s22, %s23
    %p34 = scmp.eq.s32.totalorder %s14, 0
    %p35 = por %p33, %p34
    %p36 = scmp.ne.s32.totalorder %s22, %s23
    %p37 = scmp.eq.s32.totalorder %s15, 3
    %p38 = por %p36, %p37
    %p40 = scmp.ne.s32.totalorder %s23, %s39
    %p41 = scmp.eq.s32.totalorder %s15, 0
    %p42 = por %p40, %p41
    %s44 = sadd.s32 %s43, 1
    %p47 = scmp.eq.s32.totalorder %s9, 3
    %p48 = scmp.ne.s32.totalorder %s43, %s45
    %p49 = scmp.eq.s32.totalorder %s9, 0
    %p50 = por %p48, %p49
    %p51 = scmp.ne.s32.totalorder %s43, %s45
    %p52 = scmp.eq.s32.totalorder %s14, 3
    %p53 = por %p51, %p52
    %p54 = scmp.ne.s32.totalorder %s45, %s46
    %p55 = scmp.eq.s32.totalorder %s14, 0
    %p56 = por %p54, %p55
    %p57 = scmp.ne.s32.totalorder %s45, %s46
    %p58 = scmp.eq.s32.totalorder %s15, 3
    %p59 = por %p57, %p58
    %p61 = scmp.ne.s32.totalorder %s46, %s60
    %p62 = scmp.eq.s32.totalorder %s15, 0
    %p63 = por %p61, %p62
    %s65 = sadd.s32 %s64, 1
    %p68 = scmp.eq.s32.totalorder %s9, 3
    %p69 = scmp.ne.s32.totalorder %s64, %s66
    %p70 = scmp.eq.s32.totalorder %s9, 0
    %p71 = por %p69, %p70
    %p72 = scmp.ne.s32.totalorder %s64, %s66
    %p73 = scmp.eq.s32.totalorder %s14, 3
    %p74 = por %p72, %p73
    %p75 = scmp.ne.s32.totalorder %s66, %s67
    %p76 = scmp.eq.s32.totalorder %s14, 0
    %p77 = por %p75, %p76
    %p78 = scmp.ne.s32.totalorder %s66, %s67
    %p79 = scmp.eq.s32.totalorder %s15, 3
    %p80 = por %p78, %p79
    %p82 = scmp.ne.s32.totalorder %s67, %s81
    %p83 = scmp.eq.s32.totalorder %s15, 0
    %p84 = por %p82, %p83
    %s85 = ssub.s32 %s9, %s16
    %p86 = scmp.eq.s32.totalorder %s85, 0
    %s88 = sadd.s32 %s87, 1
    %s89 = scalar_select %p86, %s87, %s88
    %p92 = pneg %p86
    %p93 = scmp.eq.s32.totalorder %s9, 3
    %p94 = por %p92, %p93
    %p95 = scmp.ne.s32.totalorder %s87, %s90
    %p96 = scmp.eq.s32.totalorder %s9, 0
    %p97 = por %p95, %p96
    %p98 = scmp.ne.s32.totalorder %s87, %s90
    %p99 = scmp.eq.s32.totalorder %s14, 3
    %p100 = por %p98, %p99
    %p101 = scmp.ne.s32.totalorder %s90, %s91
    %p102 = scmp.eq.s32.totalorder %s14, 0
    %p103 = por %p101, %p102
    %p104 = scmp.ne.s32.totalorder %s90, %s91
    %p105 = scmp.eq.s32.totalorder %s15, 3
    %p106 = por %p104, %p105
    %p108 = scmp.ne.s32.totalorder %s91, %s107
    %p109 = scmp.eq.s32.totalorder %s15, 0
    %p110 = por %p108, %p109
    %p111 = scmp.le.s32.totalorder 1, %s9
    %p112 = scmp.lt.s32.totalorder %s9, 5
    %p113 = pnand %p111, %p112
    %p114 = pneg %p113
    // Predicated region
    $region9: #{resnet_forward.13} parent=5 // pred_check
      _
    $region10: #{resnet_forward.13} parent=5 // pred_check_branch
      %116 = sbr.rel (%p113) target = $region12
    $region11: #{resnet_forward.13} parent=5 // pred_region
      %s117 = ssub.s32 %s9, 1
      // Predicated region
      $region13: #{resnet_forward.13} parent=11 // pred_check
        %p118 = pneg %p56
      $region14: #{resnet_forward.13} parent=11 // pred_check_branch
        %120 = sbr.rel (%p118) target = $region16
      $region15: #{resnet_forward.13} parent=11 // pred_region
        _
      $region16: #{resnet_forward.13} parent=11 // pred_fallthru
        _
      // Predicated region
      $region17: #{resnet_forward.13} parent=11 // pred_check
        %p121 = pneg %p77
      $region18: #{resnet_forward.13} parent=11 // pred_check_branch
        %123 = sbr.rel (%p121) target = $region20
      $region19: #{resnet_forward.13} parent=11 // pred_region
        _
      $region20: #{resnet_forward.13} parent=11 // pred_fallthru
        _
    $region12: #{resnet_forward.13} parent=5 // pred_fallthru
      _
    %p124 = scmp.lt.s32.totalorder %s9, 4
    // Predicated region
    $region21: #{resnet_forward.13} parent=5 // pred_check
      %p125 = pneg %p124
    $region22: #{resnet_forward.13} parent=5 // pred_check_branch
      %127 = sbr.rel (%p125) target = $region24
    $region23: #{resnet_forward.13} parent=5 // pred_region
      // Predicated region
      $region25: #{resnet_forward.13} parent=23 // pred_check
        %p128 = pneg %p29
      $region26: #{resnet_forward.13} parent=23 // pred_check_branch
        %130 = sbr.rel (%p128) target = $region28
      $region27: #{resnet_forward.13} parent=23 // pred_region
        %s131 = smul.u32 49, %s9
        %p132 = scmp.lt.s32.totalorder %s131, 195
        %s133 = scalar_select %p132, %s131, 195
        %s134 = smul.addr %s133, 8
        %s135 = scalar_lea.vmem %s0, %s134
        %s136 = smul.u32 49, %s9
      $region28: #{resnet_forward.13} parent=23 // pred_fallthru
        _
    $region24: #{resnet_forward.13} parent=5 // pred_fallthru
      _
    %p137 = scmp.le.s32.totalorder 1, %s9
    %p138 = scmp.lt.s32.totalorder %s9, 5
    %p139 = pnand %p137, %p138
    %p140 = pneg %p139
    // Predicated region
    $region29: #{resnet_forward.13} parent=5 // pred_check
      _
    $region30: #{resnet_forward.13} parent=5 // pred_check_branch
      %142 = sbr.rel (%p139) target = $region32
    $region31: #{resnet_forward.13} parent=5 // pred_region
      %s143 = ssub.s32 %s9, 1
      %s144 = smul.u32 49, %s14
      %p145 = scmp.lt.s32.totalorder %s144, 195
      %s146 = scalar_select %p145, %s144, 195
      %s147 = smul.addr %s146, 8
      %s148 = scalar_lea.vmem %s0, %s147
      %p149 = pneg %p35
      %p150 = pneg %p32
      %p151 = pneg %p56
      %p152 = pneg %p53
      %p153 = pneg %p77
      %p154 = pneg %p74
      %p155 = pneg %p103
      %p156 = pneg %p100
      %s157 = smul.u32 49, %s14
      %p158 = scmp.lt.s32.totalorder %s157, 195
      %s159 = scalar_select %p158, %s157, 195
      %s160 = smul.addr %s159, 8
      %s161 = scalar_lea.vmem %s3, %s160
      %s162 = smul.u32 49, %s14
      %p163 = scmp.lt.s32.totalorder %s162, 195
      %s164 = scalar_select %p163, %s162, 195
      %s165 = smul.addr %s164, 8
      %s166 = scalar_lea.vmem %s0, %s165
      %s167 = smul.u32 49, %s14
      %s168 = smul.u32 49, %s14
      %p169 = scmp.lt.s32.totalorder %s168, 195
      %s170 = scalar_select %p169, %s168, 195
      %s171 = smul.addr %s170, 8
      %s172 = scalar_lea.vmem %s3, %s171
      %s173 = smul.u32 49, %s14
      %v174 = vld [vmem:[%s166] sm:$0xff]
      %v175 = vld [vmem:[%s166 + $0x8] sm:$0xff]
      %v176 = vld [vmem:[%s166 + $0x10] sm:$0xff]
      %v177 = vld [vmem:[%s166 + $0x18] sm:$0xff]
      %v178 = vld [vmem:[%s166 + $0x20] sm:$0xff]
      %v179 = vld [vmem:[%s166 + $0x28] sm:$0xff]
      %v180 = vld [vmem:[%s166 + $0x30] sm:$0xff]
      %v181 = vld [vmem:[%s166 + $0x38] sm:$0xff]
      %v182 = vld [vmem:[%s166 + $0x40] sm:$0xff]
      %v183 = vld [vmem:[%s166 + $0x48] sm:$0xff]
      %v184 = vld [vmem:[%s166 + $0x50] sm:$0xff]
      %v185 = vld [vmem:[%s166 + $0x58] sm:$0xff]
      %v186 = vld [vmem:[%s166 + $0x60] sm:$0xff]
      %v187 = vld [vmem:[%s166 + $0x68] sm:$0xff]
      %v188 = vld [vmem:[%s166 + $0x70] sm:$0xff]
      %v189 = vld [vmem:[%s166 + $0x78] sm:$0xff]
      %v190 = vld [vmem:[%s166 + $0x80] sm:$0xff]
      %v191 = vld [vmem:[%s166 + $0x88] sm:$0xff]
      %v192 = vld [vmem:[%s166 + $0x90] sm:$0xff]
      %v193 = vld [vmem:[%s166 + $0x98] sm:$0xff]
      %v194 = vld [vmem:[%s166 + $0xa0] sm:$0xff]
      %v195 = vld [vmem:[%s166 + $0xa8] sm:$0xff]
      %v196 = vld [vmem:[%s166 + $0xb0] sm:$0xff]
      %v197 = vld [vmem:[%s166 + $0xb8] sm:$0xff]
      %v198 = vld [vmem:[%s166 + $0xc0] sm:$0xff]
      %v199 = vld [vmem:[%s166 + $0xc8] sm:$0xff]
      %v200 = vld [vmem:[%s166 + $0xd0] sm:$0xff]
      %v201 = vld [vmem:[%s166 + $0xd8] sm:$0xff]
      %v202 = vld [vmem:[%s166 + $0xe0] sm:$0xff]
      %v203 = vld [vmem:[%s166 + $0xe8] sm:$0xff]
      %v204 = vld [vmem:[%s166 + $0xf0] sm:$0xff]
      %v205 = vld [vmem:[%s166 + $0xf8] sm:$0xff]
      %v206 = vld [vmem:[%s166 + $0x100] sm:$0xff]
      %v207 = vld [vmem:[%s166 + $0x108] sm:$0xff]
      %v208 = vld [vmem:[%s166 + $0x110] sm:$0xff]
      %v209 = vld [vmem:[%s166 + $0x118] sm:$0xff]
      %v210 = vld [vmem:[%s166 + $0x120] sm:$0xff]
      %v211 = vld [vmem:[%s166 + $0x128] sm:$0xff]
      %v212 = vld [vmem:[%s166 + $0x130] sm:$0xff]
      %v213 = vld [vmem:[%s166 + $0x138] sm:$0xff]
      %v214 = vld [vmem:[%s166 + $0x140] sm:$0xff]
      %v215 = vld [vmem:[%s166 + $0x148] sm:$0xff]
      %v216 = vld [vmem:[%s166 + $0x150] sm:$0xff]
      %v217 = vld [vmem:[%s166 + $0x158] sm:$0xff]
      %v218 = vld [vmem:[%s166 + $0x160] sm:$0xff]
      %v219 = vld [vmem:[%s166 + $0x168] sm:$0xff]
      %v220 = vld [vmem:[%s166 + $0x170] sm:$0xff]
      %v221 = vld [vmem:[%s166 + $0x178] sm:$0xff]
      %v222 = vld [vmem:[%s166 + $0x180] sm:$0xff]
      %v223 = vld [vmem:[%s1] sm:$0x1]
      %v225 = vlaneseq
      %v226 = vshrl.u32 %v225, 7
      %v227 = vsub.s32 0, %v226
      %v228 = vrot.slane %v223, %v227
      %v230 = vmul.f32 %v174, %v228
      %v231 = vmul.f32 %v175, %v228
      %v232 = vmul.f32 %v176, %v228
      %v233 = vmul.f32 %v177, %v228
      %v234 = vmul.f32 %v178, %v228
      %v235 = vmul.f32 %v179, %v228
      %v236 = vmul.f32 %v180, %v228
      %v237 = vmul.f32 %v181, %v228
      %v238 = vmul.f32 %v182, %v228
      %v239 = vmul.f32 %v183, %v228
      %v240 = vmul.f32 %v184, %v228
      %v241 = vmul.f32 %v185, %v228
      %v242 = vmul.f32 %v186, %v228
      %v243 = vmul.f32 %v187, %v228
      %v244 = vmul.f32 %v188, %v228
      %v245 = vmul.f32 %v189, %v228
      %v246 = vmul.f32 %v190, %v228
      %v247 = vmul.f32 %v191, %v228
      %v248 = vmul.f32 %v192, %v228
      %v249 = vmul.f32 %v193, %v228
      %v250 = vmul.f32 %v194, %v228
      %v251 = vmul.f32 %v195, %v228
      %v252 = vmul.f32 %v196, %v228
      %v253 = vmul.f32 %v197, %v228
      %v254 = vmul.f32 %v198, %v228
      %v255 = vmul.f32 %v199, %v228
      %v256 = vmul.f32 %v200, %v228
      %v257 = vmul.f32 %v201, %v228
      %v258 = vmul.f32 %v202, %v228
      %v259 = vmul.f32 %v203, %v228
      %v260 = vmul.f32 %v204, %v228
      %v261 = vmul.f32 %v205, %v228
      %v262 = vmul.f32 %v206, %v228
      %v263 = vmul.f32 %v207, %v228
      %v264 = vmul.f32 %v208, %v228
      %v265 = vmul.f32 %v209, %v228
      %v266 = vmul.f32 %v210, %v228
      %v267 = vmul.f32 %v211, %v228
      %v268 = vmul.f32 %v212, %v228
      %v269 = vmul.f32 %v213, %v228
      %v270 = vmul.f32 %v214, %v228
      %v271 = vmul.f32 %v215, %v228
      %v272 = vmul.f32 %v216, %v228
      %v273 = vmul.f32 %v217, %v228
      %v274 = vmul.f32 %v218, %v228
      %v275 = vmul.f32 %v219, %v228
      %v276 = vmul.f32 %v220, %v228
      %v277 = vmul.f32 %v221, %v228
      %v278 = vmul.f32 %v222, %v228
      %v279 = vld [vmem:[%s2] sm:$0x1]
      %v281 = vlaneseq
      %v282 = vshrl.u32 %v281, 7
      %v283 = vsub.s32 0, %v282
      %v284 = vrot.slane %v279, %v283
      %v286 = vadd.f32 %v230, %v284
      %v287 = vadd.f32 %v231, %v284
      %v288 = vadd.f32 %v232, %v284
      %v289 = vadd.f32 %v233, %v284
      %v290 = vadd.f32 %v234, %v284
      %v291 = vadd.f32 %v235, %v284
      %v292 = vadd.f32 %v236, %v284
      %v293 = vadd.f32 %v237, %v284
      %v294 = vadd.f32 %v238, %v284
      %v295 = vadd.f32 %v239, %v284
      %v296 = vadd.f32 %v240, %v284
      %v297 = vadd.f32 %v241, %v284
      %v298 = vadd.f32 %v242, %v284
      %v299 = vadd.f32 %v243, %v284
      %v300 = vadd.f32 %v244, %v284
      %v301 = vadd.f32 %v245, %v284
      %v302 = vadd.f32 %v246, %v284
      %v303 = vadd.f32 %v247, %v284
      %v304 = vadd.f32 %v248, %v284
      %v305 = vadd.f32 %v249, %v284
      %v306 = vadd.f32 %v250, %v284
      %v307 = vadd.f32 %v251, %v284
      %v308 = vadd.f32 %v252, %v284
      %v309 = vadd.f32 %v253, %v284
      %v310 = vadd.f32 %v254, %v284
      %v311 = vadd.f32 %v255, %v284
      %v312 = vadd.f32 %v256, %v284
      %v313 = vadd.f32 %v257, %v284
      %v314 = vadd.f32 %v258, %v284
      %v315 = vadd.f32 %v259, %v284
      %v316 = vadd.f32 %v260, %v284
      %v317 = vadd.f32 %v261, %v284
      %v318 = vadd.f32 %v262, %v284
      %v319 = vadd.f32 %v263, %v284
      %v320 = vadd.f32 %v264, %v284
      %v321 = vadd.f32 %v265, %v284
      %v322 = vadd.f32 %v266, %v284
      %v323 = vadd.f32 %v267, %v284
      %v324 = vadd.f32 %v268, %v284
      %v325 = vadd.f32 %v269, %v284
      %v326 = vadd.f32 %v270, %v284
      %v327 = vadd.f32 %v271, %v284
      %v328 = vadd.f32 %v272, %v284
      %v329 = vadd.f32 %v273, %v284
      %v330 = vadd.f32 %v274, %v284
      %v331 = vadd.f32 %v275, %v284
      %v332 = vadd.f32 %v276, %v284
      %v333 = vadd.f32 %v277, %v284
      %v334 = vadd.f32 %v278, %v284
      %v335 = vmax.f32 %v286, 0.0
      %v336 = vmax.f32 %v287, 0.0
      %v337 = vmax.f32 %v288, 0.0
      %v338 = vmax.f32 %v289, 0.0
      %v339 = vmax.f32 %v290, 0.0
      %v340 = vmax.f32 %v291, 0.0
      %v341 = vmax.f32 %v292, 0.0
      %v342 = vmax.f32 %v293, 0.0
      %v343 = vmax.f32 %v294, 0.0
      %v344 = vmax.f32 %v295, 0.0
      %v345 = vmax.f32 %v296, 0.0
      %v346 = vmax.f32 %v297, 0.0
      %v347 = vmax.f32 %v298, 0.0
      %v348 = vmax.f32 %v299, 0.0
      %v349 = vmax.f32 %v300, 0.0
      %v350 = vmax.f32 %v301, 0.0
      %v351 = vmax.f32 %v302, 0.0
      %v352 = vmax.f32 %v303, 0.0
      %v353 = vmax.f32 %v304, 0.0
      %v354 = vmax.f32 %v305, 0.0
      %v355 = vmax.f32 %v306, 0.0
      %v356 = vmax.f32 %v307, 0.0
      %v357 = vmax.f32 %v308, 0.0
      %v358 = vmax.f32 %v309, 0.0
      %v359 = vmax.f32 %v310, 0.0
      %v360 = vmax.f32 %v311, 0.0
      %v361 = vmax.f32 %v312, 0.0
      %v362 = vmax.f32 %v313, 0.0
      %v363 = vmax.f32 %v314, 0.0
      %v364 = vmax.f32 %v315, 0.0
      %v365 = vmax.f32 %v316, 0.0
      %v366 = vmax.f32 %v317, 0.0
      %v367 = vmax.f32 %v318, 0.0
      %v368 = vmax.f32 %v319, 0.0
      %v369 = vmax.f32 %v320, 0.0
      %v370 = vmax.f32 %v321, 0.0
      %v371 = vmax.f32 %v322, 0.0
      %v372 = vmax.f32 %v323, 0.0
      %v373 = vmax.f32 %v324, 0.0
      %v374 = vmax.f32 %v325, 0.0
      %v375 = vmax.f32 %v326, 0.0
      %v376 = vmax.f32 %v327, 0.0
      %v377 = vmax.f32 %v328, 0.0
      %v378 = vmax.f32 %v329, 0.0
      %v379 = vmax.f32 %v330, 0.0
      %v380 = vmax.f32 %v331, 0.0
      %v381 = vmax.f32 %v332, 0.0
      %v382 = vmax.f32 %v333, 0.0
      %v383 = vmax.f32 %v334, 0.0
      %vm384 = vcmask 261120
      %385 = vst.msk [vmem:[%s172] sm:$0xff] %vm384, %v335
      %386 = vst.msk [vmem:[%s172 + $0x8] sm:$0xff] %vm384, %v336
      %387 = vst.msk [vmem:[%s172 + $0x10] sm:$0xff] %vm384, %v337
      %388 = vst.msk [vmem:[%s172 + $0x18] sm:$0xff] %vm384, %v338
      %389 = vst.msk [vmem:[%s172 + $0x20] sm:$0xff] %vm384, %v339
      %390 = vst.msk [vmem:[%s172 + $0x28] sm:$0xff] %vm384, %v340
      %391 = vst.msk [vmem:[%s172 + $0x30] sm:$0xff] %vm384, %v341
      %392 = vst.msk [vmem:[%s172 + $0x38] sm:$0xff] %vm384, %v342
      %393 = vst.msk [vmem:[%s172 + $0x40] sm:$0xff] %vm384, %v343
      %394 = vst.msk [vmem:[%s172 + $0x48] sm:$0xff] %vm384, %v344
      %395 = vst.msk [vmem:[%s172 + $0x50] sm:$0xff] %vm384, %v345
      %396 = vst.msk [vmem:[%s172 + $0x58] sm:$0xff] %vm384, %v346
      %397 = vst.msk [vmem:[%s172 + $0x60] sm:$0xff] %vm384, %v347
      %398 = vst.msk [vmem:[%s172 + $0x68] sm:$0xff] %vm384, %v348
      %399 = vst.msk [vmem:[%s172 + $0x70] sm:$0xff] %vm384, %v349
      %400 = vst.msk [vmem:[%s172 + $0x78] sm:$0xff] %vm384, %v350
      %401 = vst.msk [vmem:[%s172 + $0x80] sm:$0xff] %vm384, %v351
      %402 = vst.msk [vmem:[%s172 + $0x88] sm:$0xff] %vm384, %v352
      %403 = vst.msk [vmem:[%s172 + $0x90] sm:$0xff] %vm384, %v353
      %404 = vst.msk [vmem:[%s172 + $0x98] sm:$0xff] %vm384, %v354
      %405 = vst.msk [vmem:[%s172 + $0xa0] sm:$0xff] %vm384, %v355
      %406 = vst.msk [vmem:[%s172 + $0xa8] sm:$0xff] %vm384, %v356
      %407 = vst.msk [vmem:[%s172 + $0xb0] sm:$0xff] %vm384, %v357
      %408 = vst.msk [vmem:[%s172 + $0xb8] sm:$0xff] %vm384, %v358
      %409 = vst.msk [vmem:[%s172 + $0xc0] sm:$0xff] %vm384, %v359
      %410 = vst.msk [vmem:[%s172 + $0xc8] sm:$0xff] %vm384, %v360
      %411 = vst.msk [vmem:[%s172 + $0xd0] sm:$0xff] %vm384, %v361
      %412 = vst.msk [vmem:[%s172 + $0xd8] sm:$0xff] %vm384, %v362
      %413 = vst.msk [vmem:[%s172 + $0xe0] sm:$0xff] %vm384, %v363
      %414 = vst.msk [vmem:[%s172 + $0xe8] sm:$0xff] %vm384, %v364
      %415 = vst.msk [vmem:[%s172 + $0xf0] sm:$0xff] %vm384, %v365
      %416 = vst.msk [vmem:[%s172 + $0xf8] sm:$0xff] %vm384, %v366
      %417 = vst.msk [vmem:[%s172 + $0x100] sm:$0xff] %vm384, %v367
      %418 = vst.msk [vmem:[%s172 + $0x108] sm:$0xff] %vm384, %v368
      %419 = vst.msk [vmem:[%s172 + $0x110] sm:$0xff] %vm384, %v369
      %420 = vst.msk [vmem:[%s172 + $0x118] sm:$0xff] %vm384, %v370
      %421 = vst.msk [vmem:[%s172 + $0x120] sm:$0xff] %vm384, %v371
      %422 = vst.msk [vmem:[%s172 + $0x128] sm:$0xff] %vm384, %v372
      %423 = vst.msk [vmem:[%s172 + $0x130] sm:$0xff] %vm384, %v373
      %424 = vst.msk [vmem:[%s172 + $0x138] sm:$0xff] %vm384, %v374
      %425 = vst.msk [vmem:[%s172 + $0x140] sm:$0xff] %vm384, %v375
      %426 = vst.msk [vmem:[%s172 + $0x148] sm:$0xff] %vm384, %v376
      %427 = vst.msk [vmem:[%s172 + $0x150] sm:$0xff] %vm384, %v377
      %428 = vst.msk [vmem:[%s172 + $0x158] sm:$0xff] %vm384, %v378
      %429 = vst.msk [vmem:[%s172 + $0x160] sm:$0xff] %vm384, %v379
      %430 = vst.msk [vmem:[%s172 + $0x168] sm:$0xff] %vm384, %v380
      %431 = vst.msk [vmem:[%s172 + $0x170] sm:$0xff] %vm384, %v381
      %432 = vst.msk [vmem:[%s172 + $0x178] sm:$0xff] %vm384, %v382
      %433 = vst.msk [vmem:[%s172 + $0x180] sm:$0xff] %vm384, %v383
      %s434 = smul.u32 49, %s14
      %p435 = scmp.lt.s32.totalorder %s434, 195
      %s436 = scalar_select %p435, %s434, 195
      %s437 = smul.addr %s436, 8
      %s438 = scalar_lea.vmem %s3, %s437
      // Predicated region
      $region33: #{resnet_forward.13} parent=31 // pred_check
        %p439 = pneg %p100
      $region34: #{resnet_forward.13} parent=31 // pred_check_branch
        %441 = sbr.rel (%p439) target = $region36
      $region35: #{resnet_forward.13} parent=31 // pred_region
        %s442 = smul.u32 49, %s14
      $region36: #{resnet_forward.13} parent=31 // pred_fallthru
        _
    $region32: #{resnet_forward.13} parent=5 // pred_fallthru
      _
    %p443 = scmp.le.s32.totalorder 2, %s9
    // Predicated region
    $region37: #{resnet_forward.13} parent=5 // pred_check
      %p444 = pneg %p443
    $region38: #{resnet_forward.13} parent=5 // pred_check_branch
      %446 = sbr.rel (%p444) target = $region40
    $region39: #{resnet_forward.13} parent=5 // pred_region
      %s447 = ssub.s32 %s9, 2
      // Predicated region
      $region41: #{resnet_forward.13} parent=39 // pred_check
        %p448 = pneg %p106
      $region42: #{resnet_forward.13} parent=39 // pred_check_branch
        %450 = sbr.rel (%p448) target = $region44
      $region43: #{resnet_forward.13} parent=39 // pred_region
        %s451 = smul.u32 49, %s15
        %p452 = scmp.lt.s32.totalorder %s451, 195
        %s453 = scalar_select %p452, %s451, 195
        %s454 = smul.addr %s453, 8
        %s455 = scalar_lea.vmem %s3, %s454
      $region44: #{resnet_forward.13} parent=39 // pred_fallthru
        _
    $region40: #{resnet_forward.13} parent=5 // pred_fallthru
      _
  $region6: #{resnet_forward.13} parent=0 // loop_footer
    %s13 = sadd.s32 1, %s9
  $region7: #{resnet_forward.13} parent=0 // loop_footer_branch
    %8 = sbr.rel target = $region3
  $region8: #{resnet_forward.13} parent=0 // loop_exit
    _

// kernel: resnet_forward.12
$region0: #{resnet_forward.12}
  #allocation0 [shape = 'u32[]', space=smem, size = 0x4, offset = 0x4, fixed_abs, tag = 'smem constant byte address 0x4 - core index']
  #allocation1 [shape = 'u32[144,128]{1,0:T(1,128)}', space=vmem, size = 0x12000, scoped, tag = 'internal scratch']
  %s0 = inlined_call_operand.vmem [shape: bf16[1568,288], index: 0, kind: input, shape index: {}]
  %s1 = inlined_call_operand.vmem [shape: bf16[288,32], index: 1, kind: input, shape index: {}]
  %s2 = inlined_call_operand.vmem [shape: f32[1,32], index: 2, kind: input, shape index: {}]
  %s3 = inlined_call_operand.vmem [shape: f32[1568,32], index: 3, kind: output, shape index: {0}]
  %s4 = inlined_call_operand.vmem [shape: f32[4,2,32], index: 4, kind: output, shape index: {1}]
  %5 = xla_tuple %s3, %s4
  %s6 = sld [smem:[#allocation0]]
  $region53: #{resnet_forward.12} parent=0
    _
  %s8 = ssub.s32 1, %s6
  %s9 = scalar_select 0, %s8, %s6
  loop: start=0, step=1, limit=6
  $region2: #{resnet_forward.12} parent=0 // loop_pre_header
    _
  $region3: #{resnet_forward.12} parent=0 // loop_header
    %s11 = sphi 0, %s15
    %p12 = scmp.ge.s32.totalorder %s11, 6
    %s21 = sphi 0, %s23
    %s24 = sphi 0, %s21
    %s25 = sphi 0, %s24
    %s41 = sphi 0, %s25
    %s45 = sphi 0, %s45
    %s47 = sphi 0, %s45
    %s48 = sphi 0, %s47
    %s62 = sphi 0, %s48
    %s66 = sphi 0, %s66
    %s68 = sphi 0, %s66
    %s69 = sphi 0, %s68
    %s83 = sphi 0, %s69
    %s89 = sphi 0, %s91
    %s92 = sphi 0, %s89
    %s93 = sphi 0, %s92
    %s109 = sphi 0, %s93
    %s115 = sphi 0, %s117
    %s118 = sphi 0, %s115
    %s119 = sphi 0, %s118
    %s135 = sphi 0, %s119
  $region4: #{resnet_forward.12} parent=0 // loop_header_branch
    %14 = sbr.rel (%p12) target = $region8
  $region5: #{resnet_forward.12} parent=0 // loop_body
    %s16 = ssub.s32 %s11, 1
    %s17 = ssub.s32 %s11, 2
    %s18 = sadd.s32 %s11, 1
    %s19 = ssub.s32 %s11, %s18
    %p20 = scmp.eq.s32.totalorder %s19, 0
    %s22 = sadd.s32 %s21, 1
    %s23 = scalar_select %p20, %s21, %s22
    %p26 = pneg %p20
    %p27 = scmp.eq.s32.totalorder %s11, 3
    %p28 = por %p26, %p27
    %p29 = scmp.ne.s32.totalorder %s21, %s24
    %p30 = scmp.eq.s32.totalorder %s11, 0
    %p31 = por %p29, %p30
    %p32 = scmp.ne.s32.totalorder %s21, %s24
    %p33 = scmp.eq.s32.totalorder %s16, 3
    %p34 = por %p32, %p33
    %p35 = scmp.ne.s32.totalorder %s24, %s25
    %p36 = scmp.eq.s32.totalorder %s16, 0
    %p37 = por %p35, %p36
    %p38 = scmp.ne.s32.totalorder %s24, %s25
    %p39 = scmp.eq.s32.totalorder %s17, 3
    %p40 = por %p38, %p39
    %p42 = scmp.ne.s32.totalorder %s25, %s41
    %p43 = scmp.eq.s32.totalorder %s17, 0
    %p44 = por %p42, %p43
    %s46 = sadd.s32 %s45, 1
    %p49 = scmp.eq.s32.totalorder %s11, 3
    %p50 = scmp.ne.s32.totalorder %s45, %s47
    %p51 = scmp.eq.s32.totalorder %s11, 0
    %p52 = por %p50, %p51
    %p53 = scmp.ne.s32.totalorder %s45, %s47
    %p54 = scmp.eq.s32.totalorder %s16, 3
    %p55 = por %p53, %p54
    %p56 = scmp.ne.s32.totalorder %s47, %s48
    %p57 = scmp.eq.s32.totalorder %s16, 0
    %p58 = por %p56, %p57
    %p59 = scmp.ne.s32.totalorder %s47, %s48
    %p60 = scmp.eq.s32.totalorder %s17, 3
    %p61 = por %p59, %p60
    %p63 = scmp.ne.s32.totalorder %s48, %s62
    %p64 = scmp.eq.s32.totalorder %s17, 0
    %p65 = por %p63, %p64
    %s67 = sadd.s32 %s66, 1
    %p70 = scmp.eq.s32.totalorder %s11, 3
    %p71 = scmp.ne.s32.totalorder %s66, %s68
    %p72 = scmp.eq.s32.totalorder %s11, 0
    %p73 = por %p71, %p72
    %p74 = scmp.ne.s32.totalorder %s66, %s68
    %p75 = scmp.eq.s32.totalorder %s16, 3
    %p76 = por %p74, %p75
    %p77 = scmp.ne.s32.totalorder %s68, %s69
    %p78 = scmp.eq.s32.totalorder %s16, 0
    %p79 = por %p77, %p78
    %p80 = scmp.ne.s32.totalorder %s68, %s69
    %p81 = scmp.eq.s32.totalorder %s17, 3
    %p82 = por %p80, %p81
    %p84 = scmp.ne.s32.totalorder %s69, %s83
    %p85 = scmp.eq.s32.totalorder %s17, 0
    %p86 = por %p84, %p85
    %s87 = ssub.s32 %s11, %s18
    %p88 = scmp.eq.s32.totalorder %s87, 0
    %s90 = sadd.s32 %s89, 1
    %s91 = scalar_select %p88, %s89, %s90
    %p94 = pneg %p88
    %p95 = scmp.eq.s32.totalorder %s11, 3
    %p96 = por %p94, %p95
    %p97 = scmp.ne.s32.totalorder %s89, %s92
    %p98 = scmp.eq.s32.totalorder %s11, 0
    %p99 = por %p97, %p98
    %p100 = scmp.ne.s32.totalorder %s89, %s92
    %p101 = scmp.eq.s32.totalorder %s16, 3
    %p102 = por %p100, %p101
    %p103 = scmp.ne.s32.totalorder %s92, %s93
    %p104 = scmp.eq.s32.totalorder %s16, 0
    %p105 = por %p103, %p104
    %p106 = scmp.ne.s32.totalorder %s92, %s93
    %p107 = scmp.eq.s32.totalorder %s17, 3
    %p108 = por %p106, %p107
    %p110 = scmp.ne.s32.totalorder %s93, %s109
    %p111 = scmp.eq.s32.totalorder %s17, 0
    %p112 = por %p110, %p111
    %s113 = ssub.s32 %s11, %s18
    %p114 = scmp.eq.s32.totalorder %s113, 0
    %s116 = sadd.s32 %s115, 1
    %s117 = scalar_select %p114, %s115, %s116
    %p120 = pneg %p114
    %p121 = scmp.eq.s32.totalorder %s11, 3
    %p122 = por %p120, %p121
    %p123 = scmp.ne.s32.totalorder %s115, %s118
    %p124 = scmp.eq.s32.totalorder %s11, 0
    %p125 = por %p123, %p124
    %p126 = scmp.ne.s32.totalorder %s115, %s118
    %p127 = scmp.eq.s32.totalorder %s16, 3
    %p128 = por %p126, %p127
    %p129 = scmp.ne.s32.totalorder %s118, %s119
    %p130 = scmp.eq.s32.totalorder %s16, 0
    %p131 = por %p129, %p130
    %p132 = scmp.ne.s32.totalorder %s118, %s119
    %p133 = scmp.eq.s32.totalorder %s17, 3
    %p134 = por %p132, %p133
    %p136 = scmp.ne.s32.totalorder %s119, %s135
    %p137 = scmp.eq.s32.totalorder %s17, 0
    %p138 = por %p136, %p137
    %p139 = scmp.le.s32.totalorder 1, %s11
    %p140 = scmp.lt.s32.totalorder %s11, 5
    %p141 = pnand %p139, %p140
    %p142 = pneg %p141
    // Predicated region
    $region9: #{resnet_forward.12} parent=5 // pred_check
      _
    $region10: #{resnet_forward.12} parent=5 // pred_check_branch
      %144 = sbr.rel (%p141) target = $region12
    $region11: #{resnet_forward.12} parent=5 // pred_region
      %s145 = ssub.s32 %s11, 1
      // Predicated region
      $region13: #{resnet_forward.12} parent=11 // pred_check
        %p146 = pneg %p58
      $region14: #{resnet_forward.12} parent=11 // pred_check_branch
        %148 = sbr.rel (%p146) target = $region16
      $region15: #{resnet_forward.12} parent=11 // pred_region
        _
      $region16: #{resnet_forward.12} parent=11 // pred_fallthru
        _
      // Predicated region
      $region17: #{resnet_forward.12} parent=11 // pred_check
        %p149 = pneg %p79
      $region18: #{resnet_forward.12} parent=11 // pred_check_branch
        %151 = sbr.rel (%p149) target = $region20
      $region19: #{resnet_forward.12} parent=11 // pred_region
        _
      $region20: #{resnet_forward.12} parent=11 // pred_fallthru
        _
    $region12: #{resnet_forward.12} parent=5 // pred_fallthru
      _
    %p152 = scmp.lt.s32.totalorder %s11, 4
    // Predicated region
    $region21: #{resnet_forward.12} parent=5 // pred_check
      %p153 = pneg %p152
    $region22: #{resnet_forward.12} parent=5 // pred_check_branch
      %155 = sbr.rel (%p153) target = $region24
    $region23: #{resnet_forward.12} parent=5 // pred_region
      // Predicated region
      $region25: #{resnet_forward.12} parent=23 // pred_check
        %p156 = pneg %p31
      $region26: #{resnet_forward.12} parent=23 // pred_check_branch
        %158 = sbr.rel (%p156) target = $region28
      $region27: #{resnet_forward.12} parent=23 // pred_region
        %s159 = smul.u32 49, %s11
        %p160 = scmp.lt.s32.totalorder %s159, 195
        %s161 = scalar_select %p160, %s159, 195
        %s162 = smul.addr %s161, 3
        %s163 = smul.addr %s162, 4
        %s164 = scalar_lea.vmem %s0, %s163
        %s165 = smul.u32 49, %s11
      $region28: #{resnet_forward.12} parent=23 // pred_fallthru
        _
    $region24: #{resnet_forward.12} parent=5 // pred_fallthru
      _
    %p166 = scmp.le.s32.totalorder 1, %s11
    %p167 = scmp.lt.s32.totalorder %s11, 5
    %p168 = pnand %p166, %p167
    %p169 = pneg %p168
    // Predicated region
    $region29: #{resnet_forward.12} parent=5 // pred_check
      _
    $region30: #{resnet_forward.12} parent=5 // pred_check_branch
      %171 = sbr.rel (%p168) target = $region32
    $region31: #{resnet_forward.12} parent=5 // pred_region
      %s172 = ssub.s32 %s11, 1
      %s173 = smul.u32 49, %s16
      %p174 = scmp.lt.s32.totalorder %s173, 195
      %s175 = scalar_select %p174, %s173, 195
      %s176 = smul.addr %s175, 3
      %s177 = smul.addr %s176, 4
      %s178 = scalar_lea.vmem %s0, %s177
      %p179 = pneg %p37
      %p180 = pneg %p34
      %p181 = pneg %p58
      %p182 = pneg %p55
      %p183 = pneg %p79
      %p184 = pneg %p76
      %p185 = pneg %p105
      %p186 = pneg %p102
      %s187 = smul.u32 49, %s16
      %p188 = scmp.lt.s32.totalorder %s187, 195
      %s189 = scalar_select %p188, %s187, 195
      %s190 = smul.addr %s189, 8
      %s191 = scalar_lea.vmem %s3, %s190
      %p192 = pneg %p131
      %p193 = pneg %p128
      %p194 = scmp.lt.s32.totalorder %s16, 3
      %s195 = scalar_select %p194, %s16, 3
      %s196 = smul.addr %s195, 2
      %s197 = scalar_lea.vmem %s4, %s196
      %s198 = smul.u32 49, %s16
      %p199 = scmp.lt.s32.totalorder %s198, 195
      %s200 = scalar_select %p199, %s198, 195
      %s201 = smul.addr %s200, 3
      %s202 = smul.addr %s201, 4
      %s203 = scalar_lea.vmem %s0, %s202
      %s204 = smul.u32 49, %s16
      %s205 = smul.u32 49, %s16
      %p206 = scmp.lt.s32.totalorder %s205, 195
      %s207 = scalar_select %p206, %s205, 195
      %s208 = smul.addr %s207, 8
      %s209 = scalar_lea.vmem %s3, %s208
      %s210 = smul.u32 49, %s16
      %p211 = scmp.lt.s32.totalorder %s16, 3
      %s212 = scalar_select %p211, %s16, 3
      %s213 = smul.addr %s212, 2
      %s214 = scalar_lea.vmem %s4, %s213
      %v216 = vld [vmem:[%s203] sm:$0xff]
      %v217 = vld [vmem:[%s203 + $0x8] sm:$0xf]
      %v218 = vld [vmem:[%s203 + $0xc] sm:$0xff]
      %v219 = vld [vmem:[%s203 + $0x14] sm:$0xf]
      %v220 = vld [vmem:[%s203 + $0x18] sm:$0xff]
      %v221 = vld [vmem:[%s203 + $0x20] sm:$0xf]
      %v222 = vld [vmem:[%s203 + $0x24] sm:$0xff]
      %v223 = vld [vmem:[%s203 + $0x2c] sm:$0xf]
      %v224 = vld [vmem:[%s203 + $0x30] sm:$0xff]
      %v225 = vld [vmem:[%s203 + $0x38] sm:$0xf]
      %v226 = vld [vmem:[%s203 + $0x3c] sm:$0xff]
      %v227 = vld [vmem:[%s203 + $0x44] sm:$0xf]
      %v228 = vld [vmem:[%s203 + $0x48] sm:$0xff]
      %v229 = vld [vmem:[%s203 + $0x50] sm:$0xf]
      %v230 = vld [vmem:[%s203 + $0x54] sm:$0xff]
      %v231 = vld [vmem:[%s203 + $0x5c] sm:$0xf]
      %v232 = vld [vmem:[%s203 + $0x60] sm:$0xff]
      %v233 = vld [vmem:[%s203 + $0x68] sm:$0xf]
      %v234 = vld [vmem:[%s203 + $0x6c] sm:$0xff]
      %v235 = vld [vmem:[%s203 + $0x74] sm:$0xf]
      %v236 = vld [vmem:[%s203 + $0x78] sm:$0xff]
      %v237 = vld [vmem:[%s203 + $0x80] sm:$0xf]
      %v238 = vld [vmem:[%s203 + $0x84] sm:$0xff]
      %v239 = vld [vmem:[%s203 + $0x8c] sm:$0xf]
      %v240 = vld [vmem:[%s203 + $0x90] sm:$0xff]
      %v241 = vld [vmem:[%s203 + $0x98] sm:$0xf]
      %v242 = vld [vmem:[%s203 + $0x9c] sm:$0xff]
      %v243 = vld [vmem:[%s203 + $0xa4] sm:$0xf]
      %v244 = vld [vmem:[%s203 + $0xa8] sm:$0xff]
      %v245 = vld [vmem:[%s203 + $0xb0] sm:$0xf]
      %v246 = vld [vmem:[%s203 + $0xb4] sm:$0xff]
      %v247 = vld [vmem:[%s203 + $0xbc] sm:$0xf]
      %v248 = vld [vmem:[%s203 + $0xc0] sm:$0xff]
      %v249 = vld [vmem:[%s203 + $0xc8] sm:$0xf]
      %v250 = vld [vmem:[%s203 + $0xcc] sm:$0xff]
      %v251 = vld [vmem:[%s203 + $0xd4] sm:$0xf]
      %v252 = vld [vmem:[%s203 + $0xd8] sm:$0xff]
      %v253 = vld [vmem:[%s203 + $0xe0] sm:$0xf]
      %v254 = vld [vmem:[%s203 + $0xe4] sm:$0xff]
      %v255 = vld [vmem:[%s203 + $0xec] sm:$0xf]
      %v256 = vld [vmem:[%s203 + $0xf0] sm:$0xff]
      %v257 = vld [vmem:[%s203 + $0xf8] sm:$0xf]
      %v258 = vld [vmem:[%s203 + $0xfc] sm:$0xff]
      %v259 = vld [vmem:[%s203 + $0x104] sm:$0xf]
      %v260 = vld [vmem:[%s203 + $0x108] sm:$0xff]
      %v261 = vld [vmem:[%s203 + $0x110] sm:$0xf]
      %v262 = vld [vmem:[%s203 + $0x114] sm:$0xff]
      %v263 = vld [vmem:[%s203 + $0x11c] sm:$0xf]
      %v264 = vld [vmem:[%s203 + $0x120] sm:$0xff]
      %v265 = vld [vmem:[%s203 + $0x128] sm:$0xf]
      %v266 = vld [vmem:[%s203 + $0x12c] sm:$0xff]
      %v267 = vld [vmem:[%s203 + $0x134] sm:$0xf]
      %v268 = vld [vmem:[%s203 + $0x138] sm:$0xff]
      %v269 = vld [vmem:[%s203 + $0x140] sm:$0xf]
      %v270 = vld [vmem:[%s203 + $0x144] sm:$0xff]
      %v271 = vld [vmem:[%s203 + $0x14c] sm:$0xf]
      %v272 = vld [vmem:[%s203 + $0x150] sm:$0xff]
      %v273 = vld [vmem:[%s203 + $0x158] sm:$0xf]
      %v274 = vld [vmem:[%s203 + $0x15c] sm:$0xff]
      %v275 = vld [vmem:[%s203 + $0x164] sm:$0xf]
      %v276 = vld [vmem:[%s203 + $0x168] sm:$0xff]
      %v277 = vld [vmem:[%s203 + $0x170] sm:$0xf]
      %v278 = vld [vmem:[%s203 + $0x174] sm:$0xff]
      %v279 = vld [vmem:[%s203 + $0x17c] sm:$0xf]
      %v280 = vld [vmem:[%s203 + $0x180] sm:$0xff]
      %v281 = vld [vmem:[%s203 + $0x188] sm:$0xf]
      %v282 = vld [vmem:[%s203 + $0x18c] sm:$0xff]
      %v283 = vld [vmem:[%s203 + $0x194] sm:$0xf]
      %v284 = vld [vmem:[%s203 + $0x198] sm:$0xff]
      %v285 = vld [vmem:[%s203 + $0x1a0] sm:$0xf]
      %v286 = vld [vmem:[%s203 + $0x1a4] sm:$0xff]
      %v287 = vld [vmem:[%s203 + $0x1ac] sm:$0xf]
      %v288 = vld [vmem:[%s203 + $0x1b0] sm:$0xff]
      %v289 = vld [vmem:[%s203 + $0x1b8] sm:$0xf]
      %v290 = vld [vmem:[%s203 + $0x1bc] sm:$0xff]
      %v291 = vld [vmem:[%s203 + $0x1c4] sm:$0xf]
      %v292 = vld [vmem:[%s203 + $0x1c8] sm:$0xff]
      %v293 = vld [vmem:[%s203 + $0x1d0] sm:$0xf]
      %v294 = vld [vmem:[%s203 + $0x1d4] sm:$0xff]
      %v295 = vld [vmem:[%s203 + $0x1dc] sm:$0xf]
      %v296 = vld [vmem:[%s203 + $0x1e0] sm:$0xff]
      %v297 = vld [vmem:[%s203 + $0x1e8] sm:$0xf]
      %v298 = vld [vmem:[%s203 + $0x1ec] sm:$0xff]
      %v299 = vld [vmem:[%s203 + $0x1f4] sm:$0xf]
      %v300 = vld [vmem:[%s203 + $0x1f8] sm:$0xff]
      %v301 = vld [vmem:[%s203 + $0x200] sm:$0xf]
      %v302 = vld [vmem:[%s203 + $0x204] sm:$0xff]
      %v303 = vld [vmem:[%s203 + $0x20c] sm:$0xf]
      %v304 = vld [vmem:[%s203 + $0x210] sm:$0xff]
      %v305 = vld [vmem:[%s203 + $0x218] sm:$0xf]
      %v306 = vld [vmem:[%s203 + $0x21c] sm:$0xff]
      %v307 = vld [vmem:[%s203 + $0x224] sm:$0xf]
      %v308 = vld [vmem:[%s203 + $0x228] sm:$0xff]
      %v309 = vld [vmem:[%s203 + $0x230] sm:$0xf]
      %v310 = vld [vmem:[%s203 + $0x234] sm:$0xff]
      %v311 = vld [vmem:[%s203 + $0x23c] sm:$0xf]
      %v312 = vld [vmem:[%s203 + $0x240] sm:$0xff]
      %v313 = vld [vmem:[%s203 + $0x248] sm:$0xf]
      %v314 = vld [vmem:[%s1] sm:$0xf]
      %v315 = vld [vmem:[%s1 + $0x4] sm:$0xf]
      %v316 = vld [vmem:[%s1 + $0x8] sm:$0xf]
      %v317 = vld [vmem:[%s1 + $0xc] sm:$0xf]
      %v318 = vld [vmem:[%s1 + $0x10] sm:$0xf]
      %v319 = vld [vmem:[%s1 + $0x14] sm:$0xf]
      %v320 = vld [vmem:[%s1 + $0x18] sm:$0xf]
      %v321 = vld [vmem:[%s1 + $0x1c] sm:$0xf]
      %v322 = vld [vmem:[%s1 + $0x20] sm:$0xf]
      %v323 = vld [vmem:[%s1 + $0x24] sm:$0xf]
      %v324 = vld [vmem:[%s1 + $0x28] sm:$0xf]
      %v325 = vld [vmem:[%s1 + $0x2c] sm:$0xf]
      %v326 = vld [vmem:[%s1 + $0x30] sm:$0xf]
      %v327 = vld [vmem:[%s1 + $0x34] sm:$0xf]
      %v328 = vld [vmem:[%s1 + $0x38] sm:$0xf]
      %v329 = vld [vmem:[%s1 + $0x3c] sm:$0xf]
      %v330 = vld [vmem:[%s1 + $0x40] sm:$0xf]
      %v331 = vld [vmem:[%s1 + $0x44] sm:$0xf]
      %v332 = vld [vmem:[%s1 + $0x48] sm:$0xf]
      %v333 = vld [vmem:[%s1 + $0x4c] sm:$0xf]
      %v334 = vld [vmem:[%s1 + $0x50] sm:$0xf]
      %v335 = vld [vmem:[%s1 + $0x54] sm:$0xf]
      %v336 = vld [vmem:[%s1 + $0x58] sm:$0xf]
      %v337 = vld [vmem:[%s1 + $0x5c] sm:$0xf]
      %v338 = vld [vmem:[%s1 + $0x60] sm:$0xf]
      %v339 = vld [vmem:[%s1 + $0x64] sm:$0xf]
      %v340 = vld [vmem:[%s1 + $0x68] sm:$0xf]
      %v341 = vld [vmem:[%s1 + $0x6c] sm:$0xf]
      %v342 = vld [vmem:[%s1 + $0x70] sm:$0xf]
      %v343 = vld [vmem:[%s1 + $0x74] sm:$0xf]
      %v344 = vld [vmem:[%s1 + $0x78] sm:$0xf]
      %v345 = vld [vmem:[%s1 + $0x7c] sm:$0xf]
      %v346 = vld [vmem:[%s1 + $0x80] sm:$0xf]
      %v347 = vld [vmem:[%s1 + $0x84] sm:$0xf]
      %v348 = vld [vmem:[%s1 + $0x88] sm:$0xf]
      %v349 = vld [vmem:[%s1 + $0x8c] sm:$0xf]
      %v350 = vld [vmem:[%s2] sm:$0x1]
      %v352 = vlaneseq
      %v353 = vshrl.u32 %v352, 7
      %v354 = vsub.s32 0, %v353
      %v355 = vrot.slane %v350, %v354
      %v455 = vunpack.c.l.b16 %v216
      %v456 = vunpack.c.h.b16 %v216
      %v457 = vunpack.c.l.b16 %v217
      %v458 = vunpack.c.l.b16 %v218
      %v459 = vunpack.c.h.b16 %v218
      %v460 = vunpack.c.l.b16 %v219
      %v461 = vunpack.c.l.b16 %v220
      %v462 = vunpack.c.h.b16 %v220
      %v463 = vunpack.c.l.b16 %v221
      %v464 = vunpack.c.l.b16 %v222
      %v465 = vunpack.c.h.b16 %v222
      %v466 = vunpack.c.l.b16 %v223
      %v467 = vunpack.c.l.b16 %v224
      %v468 = vunpack.c.h.b16 %v224
      %v469 = vunpack.c.l.b16 %v225
      %v470 = vunpack.c.l.b16 %v226
      %v471 = vunpack.c.h.b16 %v226
      %v472 = vunpack.c.l.b16 %v227
      %v473 = vunpack.c.l.b16 %v228
      %v474 = vunpack.c.h.b16 %v228
      %v475 = vunpack.c.l.b16 %v229
      %v476 = vunpack.c.l.b16 %v230
      %v477 = vunpack.c.h.b16 %v230
      %v478 = vunpack.c.l.b16 %v231
      %v479 = vunpack.c.l.b16 %v232
      %v480 = vunpack.c.h.b16 %v232
      %v481 = vunpack.c.l.b16 %v233
      %v482 = vunpack.c.l.b16 %v234
      %v483 = vunpack.c.h.b16 %v234
      %v484 = vunpack.c.l.b16 %v235
      %v485 = vunpack.c.l.b16 %v236
      %v486 = vunpack.c.h.b16 %v236
      %v487 = vunpack.c.l.b16 %v237
      %v488 = vunpack.c.l.b16 %v238
      %v489 = vunpack.c.h.b16 %v238
      %v490 = vunpack.c.l.b16 %v239
      %v491 = vunpack.c.l.b16 %v240
      %v492 = vunpack.c.h.b16 %v240
      %v493 = vunpack.c.l.b16 %v241
      %v494 = vunpack.c.l.b16 %v242
      %v495 = vunpack.c.h.b16 %v242
      %v496 = vunpack.c.l.b16 %v243
      %v497 = vunpack.c.l.b16 %v244
      %v498 = vunpack.c.h.b16 %v244
      %v499 = vunpack.c.l.b16 %v245
      %v500 = vunpack.c.l.b16 %v246
      %v501 = vunpack.c.h.b16 %v246
      %v502 = vunpack.c.l.b16 %v247
      %v503 = vunpack.c.l.b16 %v248
      %v504 = vunpack.c.h.b16 %v248
      %v505 = vunpack.c.l.b16 %v249
      %v506 = vunpack.c.l.b16 %v250
      %v507 = vunpack.c.h.b16 %v250
      %v508 = vunpack.c.l.b16 %v251
      %v509 = vunpack.c.l.b16 %v252
      %v510 = vunpack.c.h.b16 %v252
      %v511 = vunpack.c.l.b16 %v253
      %v512 = vunpack.c.l.b16 %v254
      %v513 = vunpack.c.h.b16 %v254
      %v514 = vunpack.c.l.b16 %v255
      %v515 = vunpack.c.l.b16 %v256
      %v516 = vunpack.c.h.b16 %v256
      %v517 = vunpack.c.l.b16 %v257
      %v518 = vunpack.c.l.b16 %v258
      %v519 = vunpack.c.h.b16 %v258
      %v520 = vunpack.c.l.b16 %v259
      %v521 = vunpack.c.l.b16 %v260
      %v522 = vunpack.c.h.b16 %v260
      %v523 = vunpack.c.l.b16 %v261
      %v524 = vunpack.c.l.b16 %v262
      %v525 = vunpack.c.h.b16 %v262
      %v526 = vunpack.c.l.b16 %v263
      %v527 = vunpack.c.l.b16 %v264
      %v528 = vunpack.c.h.b16 %v264
      %v529 = vunpack.c.l.b16 %v265
      %v530 = vunpack.c.l.b16 %v266
      %v531 = vunpack.c.h.b16 %v266
      %v532 = vunpack.c.l.b16 %v267
      %v533 = vunpack.c.l.b16 %v268
      %v534 = vunpack.c.h.b16 %v268
      %v535 = vunpack.c.l.b16 %v269
      %v536 = vunpack.c.l.b16 %v270
      %v537 = vunpack.c.h.b16 %v270
      %v538 = vunpack.c.l.b16 %v271
      %v539 = vunpack.c.l.b16 %v272
      %v540 = vunpack.c.h.b16 %v272
      %v541 = vunpack.c.l.b16 %v273
      %v542 = vunpack.c.l.b16 %v274
      %v543 = vunpack.c.h.b16 %v274
      %v544 = vunpack.c.l.b16 %v275
      %v545 = vunpack.c.l.b16 %v276
      %v546 = vunpack.c.h.b16 %v276
      %v547 = vunpack.c.l.b16 %v277
      %v548 = vunpack.c.l.b16 %v278
      %v549 = vunpack.c.h.b16 %v278
      %v550 = vunpack.c.l.b16 %v279
      %v551 = vunpack.c.l.b16 %v280
      %v552 = vunpack.c.h.b16 %v280
      %v553 = vunpack.c.l.b16 %v281
      %v554 = vunpack.c.l.b16 %v282
      %v555 = vunpack.c.h.b16 %v282
      %v556 = vunpack.c.l.b16 %v283
      %v557 = vunpack.c.l.b16 %v284
      %v558 = vunpack.c.h.b16 %v284
      %v559 = vunpack.c.l.b16 %v285
      %v560 = vunpack.c.l.b16 %v286
      %v561 = vunpack.c.h.b16 %v286
      %v562 = vunpack.c.l.b16 %v287
      %v563 = vunpack.c.l.b16 %v288
      %v564 = vunpack.c.h.b16 %v288
      %v565 = vunpack.c.l.b16 %v289
      %v566 = vunpack.c.l.b16 %v290
      %v567 = vunpack.c.h.b16 %v290
      %v568 = vunpack.c.l.b16 %v291
      %v569 = vunpack.c.l.b16 %v292
      %v570 = vunpack.c.h.b16 %v292
      %v571 = vunpack.c.l.b16 %v293
      %v572 = vunpack.c.l.b16 %v294
      %v573 = vunpack.c.h.b16 %v294
      %v574 = vunpack.c.l.b16 %v295
      %v575 = vunpack.c.l.b16 %v296
      %v576 = vunpack.c.h.b16 %v296
      %v577 = vunpack.c.l.b16 %v297
      %v578 = vunpack.c.l.b16 %v298
      %v579 = vunpack.c.h.b16 %v298
      %v580 = vunpack.c.l.b16 %v299
      %v581 = vunpack.c.l.b16 %v300
      %v582 = vunpack.c.h.b16 %v300
      %v583 = vunpack.c.l.b16 %v301
      %v584 = vunpack.c.l.b16 %v302
      %v585 = vunpack.c.h.b16 %v302
      %v586 = vunpack.c.l.b16 %v303
      %v587 = vunpack.c.l.b16 %v304
      %v588 = vunpack.c.h.b16 %v304
      %v589 = vunpack.c.l.b16 %v305
      %v590 = vunpack.c.l.b16 %v306
      %v591 = vunpack.c.h.b16 %v306
      %v592 = vunpack.c.l.b16 %v307
      %v593 = vunpack.c.l.b16 %v308
      %v594 = vunpack.c.h.b16 %v308
      %v595 = vunpack.c.l.b16 %v309
      %v596 = vunpack.c.l.b16 %v310
      %v597 = vunpack.c.h.b16 %v310
      %v598 = vunpack.c.l.b16 %v311
      %v599 = vunpack.c.l.b16 %v312
      %v600 = vunpack.c.h.b16 %v312
      %v601 = vunpack.c.l.b16 %v313
      %v602 = vpack.c.b16 %v458, %v455
      %v603 = vpack.c.b16 %v459, %v456
      %v604 = vpack.c.b16 %v460, %v457
      %v605 = vpack.c.b16 %v464, %v461
      %v606 = vpack.c.b16 %v465, %v462
      %v607 = vpack.c.b16 %v466, %v463
      %v608 = vpack.c.b16 %v470, %v467
      %v609 = vpack.c.b16 %v471, %v468
      %v610 = vpack.c.b16 %v472, %v469
      %v611 = vpack.c.b16 %v476, %v473
      %v612 = vpack.c.b16 %v477, %v474
      %v613 = vpack.c.b16 %v478, %v475
      %v614 = vpack.c.b16 %v482, %v479
      %v615 = vpack.c.b16 %v483, %v480
      %v616 = vpack.c.b16 %v484, %v481
      %v617 = vpack.c.b16 %v488, %v485
      %v618 = vpack.c.b16 %v489, %v486
      %v619 = vpack.c.b16 %v490, %v487
      %v620 = vpack.c.b16 %v494, %v491
      %v621 = vpack.c.b16 %v495, %v492
      %v622 = vpack.c.b16 %v496, %v493
      %v623 = vpack.c.b16 %v500, %v497
      %v624 = vpack.c.b16 %v501, %v498
      %v625 = vpack.c.b16 %v502, %v499
      %v626 = vpack.c.b16 %v506, %v503
      %v627 = vpack.c.b16 %v507, %v504
      %v628 = vpack.c.b16 %v508, %v505
      %v629 = vpack.c.b16 %v512, %v509
      %v630 = vpack.c.b16 %v513, %v510
      %v631 = vpack.c.b16 %v514, %v511
      %v632 = vpack.c.b16 %v518, %v515
      %v633 = vpack.c.b16 %v519, %v516
      %v634 = vpack.c.b16 %v520, %v517
      %v635 = vpack.c.b16 %v524, %v521
      %v636 = vpack.c.b16 %v525, %v522
      %v637 = vpack.c.b16 %v526, %v523
      %v638 = vpack.c.b16 %v530, %v527
      %v639 = vpack.c.b16 %v531, %v528
      %v640 = vpack.c.b16 %v532, %v529
      %v641 = vpack.c.b16 %v536, %v533
      %v642 = vpack.c.b16 %v537, %v534
      %v643 = vpack.c.b16 %v538, %v535
      %v644 = vpack.c.b16 %v542, %v539
      %v645 = vpack.c.b16 %v543, %v540
      %v646 = vpack.c.b16 %v544, %v541
      %v647 = vpack.c.b16 %v548, %v545
      %v648 = vpack.c.b16 %v549, %v546
      %v649 = vpack.c.b16 %v550, %v547
      %v650 = vpack.c.b16 %v554, %v551
      %v651 = vpack.c.b16 %v555, %v552
      %v652 = vpack.c.b16 %v556, %v553
      %v653 = vpack.c.b16 %v560, %v557
      %v654 = vpack.c.b16 %v561, %v558
      %v655 = vpack.c.b16 %v562, %v559
      %v656 = vpack.c.b16 %v566, %v563
      %v657 = vpack.c.b16 %v567, %v564
      %v658 = vpack.c.b16 %v568, %v565
      %v659 = vpack.c.b16 %v572, %v569
      %v660 = vpack.c.b16 %v573, %v570
      %v661 = vpack.c.b16 %v574, %v571
      %v662 = vpack.c.b16 %v578, %v575
      %v663 = vpack.c.b16 %v579, %v576
      %v664 = vpack.c.b16 %v580, %v577
      %v665 = vpack.c.b16 %v584, %v581
      %v666 = vpack.c.b16 %v585, %v582
      %v667 = vpack.c.b16 %v586, %v583
      %v668 = vpack.c.b16 %v590, %v587
      %v669 = vpack.c.b16 %v591, %v588
      %v670 = vpack.c.b16 %v592, %v589
      %v671 = vpack.c.b16 %v596, %v593
      %v672 = vpack.c.b16 %v597, %v594
      %v673 = vpack.c.b16 %v598, %v595
      %v674 = vpack.c.b16 %v599, %v599
      %v675 = vpack.c.b16 %v600, %v600
      %v676 = vpack.c.b16 %v601, %v601
      %v763 = vunpack.c.l.b16 %v314
      %v764 = vunpack.c.l.b16 %v315
      %v765 = vunpack.c.l.b16 %v316
      %v766 = vunpack.c.l.b16 %v317
      %v767 = vunpack.c.l.b16 %v318
      %v768 = vunpack.c.l.b16 %v319
      %v769 = vunpack.c.l.b16 %v320
      %v770 = vunpack.c.l.b16 %v321
      %v771 = vunpack.c.l.b16 %v322
      %v772 = vunpack.c.l.b16 %v323
      %v773 = vunpack.c.l.b16 %v324
      %v774 = vunpack.c.l.b16 %v325
      %v775 = vunpack.c.l.b16 %v326
      %v776 = vunpack.c.l.b16 %v327
      %v777 = vunpack.c.l.b16 %v328
      %v778 = vunpack.c.l.b16 %v329
      %v779 = vunpack.c.l.b16 %v330
      %v780 = vunpack.c.l.b16 %v331
      %v781 = vunpack.c.l.b16 %v332
      %v782 = vunpack.c.l.b16 %v333
      %v783 = vunpack.c.l.b16 %v334
      %v784 = vunpack.c.l.b16 %v335
      %v785 = vunpack.c.l.b16 %v336
      %v786 = vunpack.c.l.b16 %v337
      %v787 = vunpack.c.l.b16 %v338
      %v788 = vunpack.c.l.b16 %v339
      %v789 = vunpack.c.l.b16 %v340
      %v790 = vunpack.c.l.b16 %v341
      %v791 = vunpack.c.l.b16 %v342
      %v792 = vunpack.c.l.b16 %v343
      %v793 = vunpack.c.l.b16 %v344
      %v794 = vunpack.c.l.b16 %v345
      %v795 = vunpack.c.l.b16 %v346
      %v796 = vunpack.c.l.b16 %v347
      %v797 = vunpack.c.l.b16 %v348
      %v798 = vunpack.c.l.b16 %v349
      %v799 = vpack.c.b16 %v764, %v763
      %v800 = vpack.c.b16 %v766, %v765
      %v801 = vpack.c.b16 %v768, %v767
      %v802 = vpack.c.b16 %v770, %v769
      %v803 = vpack.c.b16 %v772, %v771
      %v804 = vpack.c.b16 %v774, %v773
      %v805 = vpack.c.b16 %v776, %v775
      %v806 = vpack.c.b16 %v778, %v777
      %v807 = vpack.c.b16 %v780, %v779
      %v808 = vpack.c.b16 %v782, %v781
      %v809 = vpack.c.b16 %v784, %v783
      %v810 = vpack.c.b16 %v786, %v785
      %v811 = vpack.c.b16 %v788, %v787
      %v812 = vpack.c.b16 %v790, %v789
      %v813 = vpack.c.b16 %v792, %v791
      %v814 = vpack.c.b16 %v794, %v793
      %v815 = vpack.c.b16 %v796, %v795
      %v816 = vpack.c.b16 %v798, %v797
      %vm835 = vcmask 261120
      %v837 = vsel %vm835, %v604, 0
      %v840 = vsel %vm835, %v607, 0
      %v843 = vsel %vm835, %v610, 0
      %v846 = vsel %vm835, %v613, 0
      %v849 = vsel %vm835, %v616, 0
      %v852 = vsel %vm835, %v619, 0
      %v855 = vsel %vm835, %v622, 0
      %v858 = vsel %vm835, %v625, 0
      %v861 = vsel %vm835, %v628, 0
      %v864 = vsel %vm835, %v631, 0
      %v867 = vsel %vm835, %v634, 0
      %v870 = vsel %vm835, %v637, 0
      %v873 = vsel %vm835, %v640, 0
      %v876 = vsel %vm835, %v643, 0
      %v879 = vsel %vm835, %v646, 0
      %v882 = vsel %vm835, %v649, 0
      %v885 = vsel %vm835, %v652, 0
      %v888 = vsel %vm835, %v655, 0
      %v891 = vsel %vm835, %v658, 0
      %v894 = vsel %vm835, %v661, 0
      %v897 = vsel %vm835, %v664, 0
      %v900 = vsel %vm835, %v667, 0
      %v903 = vsel %vm835, %v670, 0
      %v906 = vsel %vm835, %v673, 0
      %v909 = vsel %vm835, %v676, 0
      %911 = vmatprep.subr.bf16.mxu0 0
      %912 = vmatpush1.bf16.msra.mxu0 %v799
      %913 = vmatprep.subr.bf16.mxu0 0
      %914 = vmatpush1.bf16.msra.mxu0 %v800
      %915 = vmatprep.subr.bf16.mxu0 0
      %916 = vmatpush1.bf16.msra.mxu0 %v801
      %917 = vmatprep.subr.bf16.mxu0 0
      %918 = vmatpush1.bf16.msra.mxu0 %v802
      %919 = vmatprep.subr.bf16.mxu0 0
      %920 = vmatpush1.bf16.msra.mxu0 %v803
      %921 = vmatprep.subr.bf16.mxu0 0
      %922 = vmatpush1.bf16.msra.mxu0 %v804
      %923 = vmatprep.subr.bf16.mxu0 0
      %924 = vmatpush1.bf16.msra.mxu0 %v805
      %925 = vmatprep.subr.bf16.mxu0 0
      %926 = vmatpush1.bf16.msra.mxu0 %v806
      %927 = vmatprep.subr.bf16.mxu0 0
      %928 = vmatpush1.bf16.msra.mxu0 %v807
      %929 = vmatprep.subr.bf16.mxu0 0
      %930 = vmatpush1.bf16.msra.mxu0 %v808
      %931 = vmatprep.subr.bf16.mxu0 0
      %932 = vmatpush1.bf16.msra.mxu0 %v809
      %933 = vmatprep.subr.bf16.mxu0 0
      %934 = vmatpush1.bf16.msra.mxu0 %v810
      %935 = vmatprep.subr.bf16.mxu0 0
      %936 = vmatpush1.bf16.msra.mxu0 %v811
      %937 = vmatprep.subr.bf16.mxu0 0
      %938 = vmatpush1.bf16.msra.mxu0 %v812
      %939 = vmatprep.subr.bf16.mxu0 0
      %940 = vmatpush1.bf16.msra.mxu0 %v813
      %941 = vmatprep.subr.bf16.mxu0 0
      %942 = vmatpush1.bf16.msra.mxu0 %v814
      %943 = vmatprep.mubr.bf16.mxu0 %v603
      %944 = vmatmul.mubr.bf16.gmra.mrb[0].mxu0 %v602
      %v945 = vpop.f32.mrb[0].mxu0
      %v946 = vadd.f32 %v355, %v945
      %v947 = vpop.f32.mrb[0].mxu0
      %v948 = vpop.f32.mrb[0].mxu0
      %v949 = vadd.f32 %v355, %v948
      %v950 = vpop.f32.mrb[0].mxu0
      %951 = vmatprep.mubr.bf16.mxu0 %v606
      %952 = vmatmul.mubr.bf16.gmra.mrb[0].mxu0 %v605
      %v953 = vpop.f32.mrb[0].mxu0
      %v954 = vadd.f32 %v355, %v953
      %v955 = vpop.f32.mrb[0].mxu0
      %v956 = vpop.f32.mrb[0].mxu0
      %v957 = vadd.f32 %v355, %v956
      %v958 = vpop.f32.mrb[0].mxu0
      %959 = vmatprep.mubr.bf16.mxu0 %v609
      %960 = vmatmul.mubr.bf16.gmra.mrb[0].mxu0 %v608
      %v961 = vpop.f32.mrb[0].mxu0
      %v962 = vadd.f32 %v355, %v961
      %v963 = vpop.f32.mrb[0].mxu0
      %v964 = vpop.f32.mrb[0].mxu0
      %v965 = vadd.f32 %v355, %v964
      %v966 = vpop.f32.mrb[0].mxu0
      %967 = vmatprep.mubr.bf16.mxu0 %v612
      %968 = vmatmul.mubr.bf16.gmra.mrb[0].mxu0 %v611
      %v969 = vpop.f32.mrb[0].mxu0
      %v970 = vadd.f32 %v355, %v969
      %v971 = vpop.f32.mrb[0].mxu0
      %v972 = vpop.f32.mrb[0].mxu0
      %v973 = vadd.f32 %v355, %v972
      %v974 = vpop.f32.mrb[0].mxu0
      %975 = vmatprep.mubr.bf16.mxu0 %v615
      %976 = vmatmul.mubr.bf16.gmra.mrb[0].mxu0 %v614
      %v977 = vpop.f32.mrb[0].mxu0
      %v978 = vadd.f32 %v355, %v977
      %v979 = vpop.f32.mrb[0].mxu0
      %v980 = vpop.f32.mrb[0].mxu0
      %v981 = vadd.f32 %v355, %v980
      %v982 = vpop.f32.mrb[0].mxu0
      %983 = vmatprep.mubr.bf16.mxu0 %v618
      %984 = vmatmul.mubr.bf16.gmra.mrb[0].mxu0 %v617
      %v985 = vpop.f32.mrb[0].mxu0
      %v986 = vadd.f32 %v355, %v985
      %v987 = vpop.f32.mrb[0].mxu0
      %v988 = vpop.f32.mrb[0].mxu0
      %v989 = vadd.f32 %v355, %v988
      %v990 = vpop.f32.mrb[0].mxu0
      %991 = vmatprep.mubr.bf16.mxu0 %v621
      %992 = vmatmul.mubr.bf16.gmra.mrb[0].mxu0 %v620
      %v993 = vpop.f32.mrb[0].mxu0
      %v994 = vadd.f32 %v355, %v993
      %v995 = vpop.f32.mrb[0].mxu0
      %v996 = vpop.f32.mrb[0].mxu0
      %v997 = vadd.f32 %v355, %v996
      %v998 = vpop.f32.mrb[0].mxu0
      %999 = vmatprep.mubr.bf16.mxu0 %v624
      %1000 = vmatmul.mubr.bf16.gmra.mrb[0].mxu0 %v623
      %v1001 = vpop.f32.mrb[0].mxu0
      %v1002 = vadd.f32 %v355, %v1001
      %v1003 = vpop.f32.mrb[0].mxu0
      %v1004 = vpop.f32.mrb[0].mxu0
      %v1005 = vadd.f32 %v355, %v1004
      %v1006 = vpop.f32.mrb[0].mxu0
      %1007 = vmatprep.mubr.bf16.mxu0 %v627
      %1008 = vmatmul.mubr.bf16.gmra.mrb[0].mxu0 %v626
      %v1009 = vpop.f32.mrb[0].mxu0
      %v1010 = vadd.f32 %v355, %v1009
      %v1011 = vpop.f32.mrb[0].mxu0
      %v1012 = vpop.f32.mrb[0].mxu0
      %v1013 = vadd.f32 %v355, %v1012
      %v1014 = vpop.f32.mrb[0].mxu0
      %1015 = vmatprep.mubr.bf16.mxu0 %v630
      %1016 = vmatmul.mubr.bf16.gmra.mrb[0].mxu0 %v629
      %v1017 = vpop.f32.mrb[0].mxu0
      %v1018 = vadd.f32 %v355, %v1017
      %v1019 = vpop.f32.mrb[0].mxu0
      %v1020 = vpop.f32.mrb[0].mxu0
      %v1021 = vadd.f32 %v355, %v1020
      %v1022 = vpop.f32.mrb[0].mxu0
      %1023 = vmatprep.mubr.bf16.mxu0 %v633
      %1024 = vmatmul.mubr.bf16.gmra.mrb[0].mxu0 %v632
      %v1025 = vpop.f32.mrb[0].mxu0
      %v1026 = vadd.f32 %v355, %v1025
      %v1027 = vpop.f32.mrb[0].mxu0
      %v1028 = vpop.f32.mrb[0].mxu0
      %v1029 = vadd.f32 %v355, %v1028
      %v1030 = vpop.f32.mrb[0].mxu0
      %1031 = vmatprep.mubr.bf16.mxu0 %v636
      %1032 = vmatmul.mubr.bf16.gmra.mrb[0].mxu0 %v635
      %v1033 = vpop.f32.mrb[0].mxu0
      %v1034 = vadd.f32 %v355, %v1033
      %v1035 = vpop.f32.mrb[0].mxu0
      %v1036 = vpop.f32.mrb[0].mxu0
      %v1037 = vadd.f32 %v355, %v1036
      %v1038 = vpop.f32.mrb[0].mxu0
      %1039 = vmatprep.mubr.bf16.mxu0 %v639
      %1040 = vmatmul.mubr.bf16.gmra.mrb[0].mxu0 %v638
      %v1041 = vpop.f32.mrb[0].mxu0
      %v1042 = vadd.f32 %v355, %v1041
      %v1043 = vpop.f32.mrb[0].mxu0
      %v1044 = vpop.f32.mrb[0].mxu0
      %v1045 = vadd.f32 %v355, %v1044
      %v1046 = vpop.f32.mrb[0].mxu0
      %1047 = vmatprep.mubr.bf16.mxu0 %v642
      %1048 = vmatmul.mubr.bf16.gmra.mrb[0].mxu0 %v641
      %v1049 = vpop.f32.mrb[0].mxu0
      %v1050 = vadd.f32 %v355, %v1049
      %v1051 = vpop.f32.mrb[0].mxu0
      %v1052 = vpop.f32.mrb[0].mxu0
      %v1053 = vadd.f32 %v355, %v1052
      %v1054 = vpop.f32.mrb[0].mxu0
      %1055 = vmatprep.mubr.bf16.mxu0 %v645
      %1056 = vmatmul.mubr.bf16.gmra.mrb[0].mxu0 %v644
      %v1057 = vpop.f32.mrb[0].mxu0
      %v1058 = vadd.f32 %v355, %v1057
      %v1059 = vpop.f32.mrb[0].mxu0
      %v1060 = vpop.f32.mrb[0].mxu0
      %v1061 = vadd.f32 %v355, %v1060
      %v1062 = vpop.f32.mrb[0].mxu0
      %1063 = vmatprep.mubr.bf16.mxu0 %v648
      %1064 = vmatmul.mubr.bf16.gmra.mrb[0].mxu0 %v647
      %v1065 = vpop.f32.mrb[0].mxu0
      %v1066 = vadd.f32 %v355, %v1065
      %v1067 = vpop.f32.mrb[0].mxu0
      %v1068 = vpop.f32.mrb[0].mxu0
      %v1069 = vadd.f32 %v355, %v1068
      %v1070 = vpop.f32.mrb[0].mxu0
      %1071 = vmatprep.mubr.bf16.mxu0 %v651
      %1072 = vmatmul.mubr.bf16.gmra.mrb[0].mxu0 %v650
      %v1073 = vpop.f32.mrb[0].mxu0
      %v1074 = vadd.f32 %v355, %v1073
      %v1075 = vpop.f32.mrb[0].mxu0
      %v1076 = vpop.f32.mrb[0].mxu0
      %v1077 = vadd.f32 %v355, %v1076
      %v1078 = vpop.f32.mrb[0].mxu0
      %1079 = vmatprep.mubr.bf16.mxu0 %v654
      %1080 = vmatmul.mubr.bf16.gmra.mrb[0].mxu0 %v653
      %v1081 = vpop.f32.mrb[0].mxu0
      %v1082 = vadd.f32 %v355, %v1081
      %v1083 = vpop.f32.mrb[0].mxu0
      %v1084 = vpop.f32.mrb[0].mxu0
      %v1085 = vadd.f32 %v355, %v1084
      %v1086 = vpop.f32.mrb[0].mxu0
      %1087 = vmatprep.mubr.bf16.mxu0 %v657
      %1088 = vmatmul.mubr.bf16.gmra.mrb[0].mxu0 %v656
      %v1089 = vpop.f32.mrb[0].mxu0
      %v1090 = vadd.f32 %v355, %v1089
      %v1091 = vpop.f32.mrb[0].mxu0
      %v1092 = vpop.f32.mrb[0].mxu0
      %v1093 = vadd.f32 %v355, %v1092
      %v1094 = vpop.f32.mrb[0].mxu0
      %1095 = vmatprep.mubr.bf16.mxu0 %v660
      %1096 = vmatmul.mubr.bf16.gmra.mrb[0].mxu0 %v659
      %v1097 = vpop.f32.mrb[0].mxu0
      %v1098 = vadd.f32 %v355, %v1097
      %v1099 = vpop.f32.mrb[0].mxu0
      %v1100 = vpop.f32.mrb[0].mxu0
      %v1101 = vadd.f32 %v355, %v1100
      %v1102 = vpop.f32.mrb[0].mxu0
      %1103 = vmatprep.mubr.bf16.mxu0 %v663
      %1104 = vmatmul.mubr.bf16.gmra.mrb[0].mxu0 %v662
      %v1105 = vpop.f32.mrb[0].mxu0
      %v1106 = vadd.f32 %v355, %v1105
      %v1107 = vpop.f32.mrb[0].mxu0
      %v1108 = vpop.f32.mrb[0].mxu0
      %v1109 = vadd.f32 %v355, %v1108
      %v1110 = vpop.f32.mrb[0].mxu0
      %1111 = vmatprep.mubr.bf16.mxu0 %v666
      %1112 = vmatmul.mubr.bf16.gmra.mrb[0].mxu0 %v665
      %v1113 = vpop.f32.mrb[0].mxu0
      %v1114 = vadd.f32 %v355, %v1113
      %v1115 = vpop.f32.mrb[0].mxu0
      %v1116 = vpop.f32.mrb[0].mxu0
      %v1117 = vadd.f32 %v355, %v1116
      %v1118 = vpop.f32.mrb[0].mxu0
      %1119 = vmatprep.mubr.bf16.mxu0 %v669
      %1120 = vmatmul.mubr.bf16.gmra.mrb[0].mxu0 %v668
      %v1121 = vpop.f32.mrb[0].mxu0
      %v1122 = vadd.f32 %v355, %v1121
      %v1123 = vpop.f32.mrb[0].mxu0
      %v1124 = vpop.f32.mrb[0].mxu0
      %v1125 = vadd.f32 %v355, %v1124
      %v1126 = vpop.f32.mrb[0].mxu0
      %1127 = vmatprep.mubr.bf16.mxu0 %v672
      %1128 = vmatmul.mubr.bf16.gmra.mrb[0].mxu0 %v671
      %v1129 = vpop.f32.mrb[0].mxu0
      %v1130 = vadd.f32 %v355, %v1129
      %v1131 = vpop.f32.mrb[0].mxu0
      %v1132 = vpop.f32.mrb[0].mxu0
      %v1133 = vadd.f32 %v355, %v1132
      %v1134 = vpop.f32.mrb[0].mxu0
      %1135 = vmatprep.mubr.bf16.mxu0 %v675
      %1136 = vmatmul.mubr.bf16.gmra.mrb[0].mxu0 %v674
      %v1137 = vpop.f32.mrb[0].mxu0
      %v1138 = vadd.f32 %v355, %v1137
      %v1139 = vpop.f32.mrb[0].mxu0
      %v1140 = vpop.f32.mrb[0].mxu0
      %v1141 = vpop.f32.mrb[0].mxu0
      %1142 = vdwg.mxu0
      %1143 = vmatprep.subr.bf16.mxu0 0
      %1144 = vmatpush1.bf16.msra.mxu0 %v815
      %1145 = vmatprep.subr.bf16.mxu0 0
      %1146 = vmatpush1.bf16.msra.mxu0 %v816
      %1147 = vmatprep.subr.bf16.mxu0 0
      %1148 = vmatpush1.bf16.msra.mxu0 0
      %1149 = vmatprep.subr.bf16.mxu0 0
      %1150 = vmatpush1.bf16.msra.mxu0 0
      %1151 = vmatprep.subr.bf16.mxu0 0
      %1152 = vmatpush1.bf16.msra.mxu0 0
      %1153 = vmatprep.subr.bf16.mxu0 0
      %1154 = vmatpush1.bf16.msra.mxu0 0
      %1155 = vmatprep.subr.bf16.mxu0 0
      %1156 = vmatpush1.bf16.msra.mxu0 0
      %1157 = vmatprep.subr.bf16.mxu0 0
      %1158 = vmatpush1.bf16.msra.mxu0 0
      %1159 = vmatprep.subr.bf16.mxu0 0
      %1160 = vmatpush1.bf16.msra.mxu0 0
      %1161 = vmatprep.subr.bf16.mxu0 0
      %1162 = vmatpush1.bf16.msra.mxu0 0
      %1163 = vmatprep.subr.bf16.mxu0 0
      %1164 = vmatpush1.bf16.msra.mxu0 0
      %1165 = vmatprep.subr.bf16.mxu0 0
      %1166 = vmatpush1.bf16.msra.mxu0 0
      %1167 = vmatprep.subr.bf16.mxu0 0
      %1168 = vmatpush1.bf16.msra.mxu0 0
      %1169 = vmatprep.subr.bf16.mxu0 0
      %1170 = vmatpush1.bf16.msra.mxu0 0
      %1171 = vmatprep.subr.bf16.mxu0 0
      %1172 = vmatpush1.bf16.msra.mxu0 0
      %1173 = vmatprep.subr.bf16.mxu0 0
      %1174 = vmatpush1.bf16.msra.mxu0 0
      %1175 = vmatprep.mubr.bf16.mxu0 0
      %1176 = vmatmul.mubr.bf16.gmra.mrb[0].mxu0 %v837
      %v1177 = vpop.f32.mrb[0].mxu0
      %v1178 = vadd.f32 %v946, %v1177
      %v1179 = vpop.f32.mrb[0].mxu0
      %v1180 = vpop.f32.mrb[0].mxu0
      %v1181 = vadd.f32 %v949, %v1180
      %v1182 = vpop.f32.mrb[0].mxu0
      %1183 = vmatprep.mubr.bf16.mxu0 0
      %1184 = vmatmul.mubr.bf16.gmra.mrb[0].mxu0 %v840
      %v1185 = vpop.f32.mrb[0].mxu0
      %v1186 = vadd.f32 %v954, %v1185
      %v1187 = vpop.f32.mrb[0].mxu0
      %v1188 = vpop.f32.mrb[0].mxu0
      %v1189 = vadd.f32 %v957, %v1188
      %v1190 = vpop.f32.mrb[0].mxu0
      %1191 = vmatprep.mubr.bf16.mxu0 0
      %1192 = vmatmul.mubr.bf16.gmra.mrb[0].mxu0 %v843
      %v1193 = vpop.f32.mrb[0].mxu0
      %v1194 = vadd.f32 %v962, %v1193
      %v1195 = vpop.f32.mrb[0].mxu0
      %v1196 = vpop.f32.mrb[0].mxu0
      %v1197 = vadd.f32 %v965, %v1196
      %v1198 = vpop.f32.mrb[0].mxu0
      %1199 = vmatprep.mubr.bf16.mxu0 0
      %1200 = vmatmul.mubr.bf16.gmra.mrb[0].mxu0 %v846
      %v1201 = vpop.f32.mrb[0].mxu0
      %v1202 = vadd.f32 %v970, %v1201
      %v1203 = vpop.f32.mrb[0].mxu0
      %v1204 = vpop.f32.mrb[0].mxu0
      %v1205 = vadd.f32 %v973, %v1204
      %v1206 = vpop.f32.mrb[0].mxu0
      %1207 = vmatprep.mubr.bf16.mxu0 0
      %1208 = vmatmul.mubr.bf16.gmra.mrb[0].mxu0 %v849
      %v1209 = vpop.f32.mrb[0].mxu0
      %v1210 = vadd.f32 %v978, %v1209
      %v1211 = vpop.f32.mrb[0].mxu0
      %v1212 = vpop.f32.mrb[0].mxu0
      %v1213 = vadd.f32 %v981, %v1212
      %v1214 = vpop.f32.mrb[0].mxu0
      %1215 = vmatprep.mubr.bf16.mxu0 0
      %1216 = vmatmul.mubr.bf16.gmra.mrb[0].mxu0 %v852
      %v1217 = vpop.f32.mrb[0].mxu0
      %v1218 = vadd.f32 %v986, %v1217
      %v1219 = vpop.f32.mrb[0].mxu0
      %v1220 = vpop.f32.mrb[0].mxu0
      %v1221 = vadd.f32 %v989, %v1220
      %v1222 = vpop.f32.mrb[0].mxu0
      %1223 = vmatprep.mubr.bf16.mxu0 0
      %1224 = vmatmul.mubr.bf16.gmra.mrb[0].mxu0 %v855
      %v1225 = vpop.f32.mrb[0].mxu0
      %v1226 = vadd.f32 %v994, %v1225
      %v1227 = vpop.f32.mrb[0].mxu0
      %v1228 = vpop.f32.mrb[0].mxu0
      %v1229 = vadd.f32 %v997, %v1228
      %v1230 = vpop.f32.mrb[0].mxu0
      %1231 = vmatprep.mubr.bf16.mxu0 0
      %1232 = vmatmul.mubr.bf16.gmra.mrb[0].mxu0 %v858
      %v1233 = vpop.f32.mrb[0].mxu0
      %v1234 = vadd.f32 %v1002, %v1233
      %v1235 = vpop.f32.mrb[0].mxu0
      %v1236 = vpop.f32.mrb[0].mxu0
      %v1237 = vadd.f32 %v1005, %v1236
      %v1238 = vpop.f32.mrb[0].mxu0
      %1239 = vmatprep.mubr.bf16.mxu0 0
      %1240 = vmatmul.mubr.bf16.gmra.mrb[0].mxu0 %v861
      %v1241 = vpop.f32.mrb[0].mxu0
      %v1242 = vadd.f32 %v1010, %v1241
      %v1243 = vpop.f32.mrb[0].mxu0
      %v1244 = vpop.f32.mrb[0].mxu0
      %v1245 = vadd.f32 %v1013, %v1244
      %v1246 = vpop.f32.mrb[0].mxu0
      %1247 = vmatprep.mubr.bf16.mxu0 0
      %1248 = vmatmul.mubr.bf16.gmra.mrb[0].mxu0 %v864
      %v1249 = vpop.f32.mrb[0].mxu0
      %v1250 = vadd.f32 %v1018, %v1249
      %v1251 = vpop.f32.mrb[0].mxu0
      %v1252 = vpop.f32.mrb[0].mxu0
      %v1253 = vadd.f32 %v1021, %v1252
      %v1254 = vpop.f32.mrb[0].mxu0
      %1255 = vmatprep.mubr.bf16.mxu0 0
      %1256 = vmatmul.mubr.bf16.gmra.mrb[0].mxu0 %v867
      %v1257 = vpop.f32.mrb[0].mxu0
      %v1258 = vadd.f32 %v1026, %v1257
      %v1259 = vpop.f32.mrb[0].mxu0
      %v1260 = vpop.f32.mrb[0].mxu0
      %v1261 = vadd.f32 %v1029, %v1260
      %v1262 = vpop.f32.mrb[0].mxu0
      %1263 = vmatprep.mubr.bf16.mxu0 0
      %1264 = vmatmul.mubr.bf16.gmra.mrb[0].mxu0 %v870
      %v1265 = vpop.f32.mrb[0].mxu0
      %v1266 = vadd.f32 %v1034, %v1265
      %v1267 = vpop.f32.mrb[0].mxu0
      %v1268 = vpop.f32.mrb[0].mxu0
      %v1269 = vadd.f32 %v1037, %v1268
      %v1270 = vpop.f32.mrb[0].mxu0
      %1271 = vmatprep.mubr.bf16.mxu0 0
      %1272 = vmatmul.mubr.bf16.gmra.mrb[0].mxu0 %v873
      %v1273 = vpop.f32.mrb[0].mxu0
      %v1274 = vadd.f32 %v1042, %v1273
      %v1275 = vpop.f32.mrb[0].mxu0
      %v1276 = vpop.f32.mrb[0].mxu0
      %v1277 = vadd.f32 %v1045, %v1276
      %v1278 = vpop.f32.mrb[0].mxu0
      %1279 = vmatprep.mubr.bf16.mxu0 0
      %1280 = vmatmul.mubr.bf16.gmra.mrb[0].mxu0 %v876
      %v1281 = vpop.f32.mrb[0].mxu0
      %v1282 = vadd.f32 %v1050, %v1281
      %v1283 = vpop.f32.mrb[0].mxu0
      %v1284 = vpop.f32.mrb[0].mxu0
      %v1285 = vadd.f32 %v1053, %v1284
      %v1286 = vpop.f32.mrb[0].mxu0
      %1287 = vmatprep.mubr.bf16.mxu0 0
      %1288 = vmatmul.mubr.bf16.gmra.mrb[0].mxu0 %v879
      %v1289 = vpop.f32.mrb[0].mxu0
      %v1290 = vadd.f32 %v1058, %v1289
      %v1291 = vpop.f32.mrb[0].mxu0
      %v1292 = vpop.f32.mrb[0].mxu0
      %v1293 = vadd.f32 %v1061, %v1292
      %v1294 = vpop.f32.mrb[0].mxu0
      %1295 = vmatprep.mubr.bf16.mxu0 0
      %1296 = vmatmul.mubr.bf16.gmra.mrb[0].mxu0 %v882
      %v1297 = vpop.f32.mrb[0].mxu0
      %v1298 = vadd.f32 %v1066, %v1297
      %v1299 = vpop.f32.mrb[0].mxu0
      %v1300 = vpop.f32.mrb[0].mxu0
      %v1301 = vadd.f32 %v1069, %v1300
      %v1302 = vpop.f32.mrb[0].mxu0
      %1303 = vmatprep.mubr.bf16.mxu0 0
      %1304 = vmatmul.mubr.bf16.gmra.mrb[0].mxu0 %v885
      %v1305 = vpop.f32.mrb[0].mxu0
      %v1306 = vadd.f32 %v1074, %v1305
      %v1307 = vpop.f32.mrb[0].mxu0
      %v1308 = vpop.f32.mrb[0].mxu0
      %v1309 = vadd.f32 %v1077, %v1308
      %v1310 = vpop.f32.mrb[0].mxu0
      %1311 = vmatprep.mubr.bf16.mxu0 0
      %1312 = vmatmul.mubr.bf16.gmra.mrb[0].mxu0 %v888
      %v1313 = vpop.f32.mrb[0].mxu0
      %v1314 = vadd.f32 %v1082, %v1313
      %v1315 = vpop.f32.mrb[0].mxu0
      %v1316 = vpop.f32.mrb[0].mxu0
      %v1317 = vadd.f32 %v1085, %v1316
      %v1318 = vpop.f32.mrb[0].mxu0
      %1319 = vmatprep.mubr.bf16.mxu0 0
      %1320 = vmatmul.mubr.bf16.gmra.mrb[0].mxu0 %v891
      %v1321 = vpop.f32.mrb[0].mxu0
      %v1322 = vadd.f32 %v1090, %v1321
      %v1323 = vpop.f32.mrb[0].mxu0
      %v1324 = vpop.f32.mrb[0].mxu0
      %v1325 = vadd.f32 %v1093, %v1324
      %v1326 = vpop.f32.mrb[0].mxu0
      %1327 = vmatprep.mubr.bf16.mxu0 0
      %1328 = vmatmul.mubr.bf16.gmra.mrb[0].mxu0 %v894
      %v1329 = vpop.f32.mrb[0].mxu0
      %v1330 = vadd.f32 %v1098, %v1329
      %v1331 = vpop.f32.mrb[0].mxu0
      %v1332 = vpop.f32.mrb[0].mxu0
      %v1333 = vadd.f32 %v1101, %v1332
      %v1334 = vpop.f32.mrb[0].mxu0
      %1335 = vmatprep.mubr.bf16.mxu0 0
      %1336 = vmatmul.mubr.bf16.gmra.mrb[0].mxu0 %v897
      %v1337 = vpop.f32.mrb[0].mxu0
      %v1338 = vadd.f32 %v1106, %v1337
      %v1339 = vpop.f32.mrb[0].mxu0
      %v1340 = vpop.f32.mrb[0].mxu0
      %v1341 = vadd.f32 %v1109, %v1340
      %v1342 = vpop.f32.mrb[0].mxu0
      %1343 = vmatprep.mubr.bf16.mxu0 0
      %1344 = vmatmul.mubr.bf16.gmra.mrb[0].mxu0 %v900
      %v1345 = vpop.f32.mrb[0].mxu0
      %v1346 = vadd.f32 %v1114, %v1345
      %v1347 = vpop.f32.mrb[0].mxu0
      %v1348 = vpop.f32.mrb[0].mxu0
      %v1349 = vadd.f32 %v1117, %v1348
      %v1350 = vpop.f32.mrb[0].mxu0
      %1351 = vmatprep.mubr.bf16.mxu0 0
      %1352 = vmatmul.mubr.bf16.gmra.mrb[0].mxu0 %v903
      %v1353 = vpop.f32.mrb[0].mxu0
      %v1354 = vadd.f32 %v1122, %v1353
      %v1355 = vpop.f32.mrb[0].mxu0
      %v1356 = vpop.f32.mrb[0].mxu0
      %v1357 = vadd.f32 %v1125, %v1356
      %v1358 = vpop.f32.mrb[0].mxu0
      %1359 = vmatprep.mubr.bf16.mxu0 0
      %1360 = vmatmul.mubr.bf16.gmra.mrb[0].mxu0 %v906
      %v1361 = vpop.f32.mrb[0].mxu0
      %v1362 = vadd.f32 %v1130, %v1361
      %v1363 = vpop.f32.mrb[0].mxu0
      %v1364 = vpop.f32.mrb[0].mxu0
      %v1365 = vadd.f32 %v1133, %v1364
      %v1366 = vpop.f32.mrb[0].mxu0
      %1367 = vmatprep.mubr.bf16.mxu0 0
      %1368 = vmatmul.mubr.bf16.gmra.mrb[0].mxu0 %v909
      %v1369 = vpop.f32.mrb[0].mxu0
      %v1370 = vadd.f32 %v1138, %v1369
      %v1371 = vpop.f32.mrb[0].mxu0
      %v1372 = vpop.f32.mrb[0].mxu0
      %v1373 = vpop.f32.mrb[0].mxu0
      %1374 = vdwg.mxu0
      %1375 = vst.msk [vmem:[%s209] sm:$0xff] %vm835, %v1178
      %1376 = vst.msk [vmem:[%s209 + $0x8] sm:$0xff] %vm835, %v1181
      %1377 = vst.msk [vmem:[%s209 + $0x10] sm:$0xff] %vm835, %v1186
      %1378 = vst.msk [vmem:[%s209 + $0x18] sm:$0xff] %vm835, %v1189
      %1379 = vst.msk [vmem:[%s209 + $0x20] sm:$0xff] %vm835, %v1194
      %1380 = vst.msk [vmem:[%s209 + $0x28] sm:$0xff] %vm835, %v1197
      %1381 = vst.msk [vmem:[%s209 + $0x30] sm:$0xff] %vm835, %v1202
      %1382 = vst.msk [vmem:[%s209 + $0x38] sm:$0xff] %vm835, %v1205
      %1383 = vst.msk [vmem:[%s209 + $0x40] sm:$0xff] %vm835, %v1210
      %1384 = vst.msk [vmem:[%s209 + $0x48] sm:$0xff] %vm835, %v1213
      %1385 = vst.msk [vmem:[%s209 + $0x50] sm:$0xff] %vm835, %v1218
      %1386 = vst.msk [vmem:[%s209 + $0x58] sm:$0xff] %vm835, %v1221
      %1387 = vst.msk [vmem:[%s209 + $0x60] sm:$0xff] %vm835, %v1226
      %1388 = vst.msk [vmem:[%s209 + $0x68] sm:$0xff] %vm835, %v1229
      %1389 = vst.msk [vmem:[%s209 + $0x70] sm:$0xff] %vm835, %v1234
      %1390 = vst.msk [vmem:[%s209 + $0x78] sm:$0xff] %vm835, %v1237
      %1391 = vst.msk [vmem:[%s209 + $0x80] sm:$0xff] %vm835, %v1242
      %1392 = vst.msk [vmem:[%s209 + $0x88] sm:$0xff] %vm835, %v1245
      %1393 = vst.msk [vmem:[%s209 + $0x90] sm:$0xff] %vm835, %v1250
      %1394 = vst.msk [vmem:[%s209 + $0x98] sm:$0xff] %vm835, %v1253
      %1395 = vst.msk [vmem:[%s209 + $0xa0] sm:$0xff] %vm835, %v1258
      %1396 = vst.msk [vmem:[%s209 + $0xa8] sm:$0xff] %vm835, %v1261
      %1397 = vst.msk [vmem:[%s209 + $0xb0] sm:$0xff] %vm835, %v1266
      %1398 = vst.msk [vmem:[%s209 + $0xb8] sm:$0xff] %vm835, %v1269
      %1399 = vst.msk [vmem:[%s209 + $0xc0] sm:$0xff] %vm835, %v1274
      %1400 = vst.msk [vmem:[%s209 + $0xc8] sm:$0xff] %vm835, %v1277
      %1401 = vst.msk [vmem:[%s209 + $0xd0] sm:$0xff] %vm835, %v1282
      %1402 = vst.msk [vmem:[%s209 + $0xd8] sm:$0xff] %vm835, %v1285
      %1403 = vst.msk [vmem:[%s209 + $0xe0] sm:$0xff] %vm835, %v1290
      %1404 = vst.msk [vmem:[%s209 + $0xe8] sm:$0xff] %vm835, %v1293
      %1405 = vst.msk [vmem:[%s209 + $0xf0] sm:$0xff] %vm835, %v1298
      %1406 = vst.msk [vmem:[%s209 + $0xf8] sm:$0xff] %vm835, %v1301
      %1407 = vst.msk [vmem:[%s209 + $0x100] sm:$0xff] %vm835, %v1306
      %1408 = vst.msk [vmem:[%s209 + $0x108] sm:$0xff] %vm835, %v1309
      %1409 = vst.msk [vmem:[%s209 + $0x110] sm:$0xff] %vm835, %v1314
      %1410 = vst.msk [vmem:[%s209 + $0x118] sm:$0xff] %vm835, %v1317
      %1411 = vst.msk [vmem:[%s209 + $0x120] sm:$0xff] %vm835, %v1322
      %1412 = vst.msk [vmem:[%s209 + $0x128] sm:$0xff] %vm835, %v1325
      %1413 = vst.msk [vmem:[%s209 + $0x130] sm:$0xff] %vm835, %v1330
      %1414 = vst.msk [vmem:[%s209 + $0x138] sm:$0xff] %vm835, %v1333
      %1415 = vst.msk [vmem:[%s209 + $0x140] sm:$0xff] %vm835, %v1338
      %1416 = vst.msk [vmem:[%s209 + $0x148] sm:$0xff] %vm835, %v1341
      %1417 = vst.msk [vmem:[%s209 + $0x150] sm:$0xff] %vm835, %v1346
      %1418 = vst.msk [vmem:[%s209 + $0x158] sm:$0xff] %vm835, %v1349
      %1419 = vst.msk [vmem:[%s209 + $0x160] sm:$0xff] %vm835, %v1354
      %1420 = vst.msk [vmem:[%s209 + $0x168] sm:$0xff] %vm835, %v1357
      %1421 = vst.msk [vmem:[%s209 + $0x170] sm:$0xff] %vm835, %v1362
      %1422 = vst.msk [vmem:[%s209 + $0x178] sm:$0xff] %vm835, %v1365
      %1423 = vst.msk [vmem:[%s209 + $0x180] sm:$0xff] %vm835, %v1370
      %v1424 = vsel %vm835, %v1178, 0.0
      %v1425 = vsel %vm835, %v1181, 0.0
      %v1426 = vadd.f32 %v1424, %v1425
      %v1427 = vsel %vm835, %v1186, 0.0
      %v1428 = vadd.f32 %v1426, %v1427
      %v1429 = vsel %vm835, %v1189, 0.0
      %v1430 = vadd.f32 %v1428, %v1429
      %v1431 = vsel %vm835, %v1194, 0.0
      %v1432 = vadd.f32 %v1430, %v1431
      %v1433 = vsel %vm835, %v1197, 0.0
      %v1434 = vadd.f32 %v1432, %v1433
      %v1435 = vsel %vm835, %v1202, 0.0
      %v1436 = vadd.f32 %v1434, %v1435
      %v1437 = vsel %vm835, %v1205, 0.0
      %v1438 = vadd.f32 %v1436, %v1437
      %v1439 = vsel %vm835, %v1210, 0.0
      %v1440 = vadd.f32 %v1438, %v1439
      %v1441 = vsel %vm835, %v1213, 0.0
      %v1442 = vadd.f32 %v1440, %v1441
      %v1443 = vsel %vm835, %v1218, 0.0
      %v1444 = vadd.f32 %v1442, %v1443
      %v1445 = vsel %vm835, %v1221, 0.0
      %v1446 = vadd.f32 %v1444, %v1445
      %v1447 = vsel %vm835, %v1226, 0.0
      %v1448 = vadd.f32 %v1446, %v1447
      %v1449 = vsel %vm835, %v1229, 0.0
      %v1450 = vadd.f32 %v1448, %v1449
      %v1451 = vsel %vm835, %v1234, 0.0
      %v1452 = vadd.f32 %v1450, %v1451
      %v1453 = vsel %vm835, %v1237, 0.0
      %v1454 = vadd.f32 %v1452, %v1453
      %v1455 = vsel %vm835, %v1242, 0.0
      %v1456 = vadd.f32 %v1454, %v1455
      %v1457 = vsel %vm835, %v1245, 0.0
      %v1458 = vadd.f32 %v1456, %v1457
      %v1459 = vsel %vm835, %v1250, 0.0
      %v1460 = vadd.f32 %v1458, %v1459
      %v1461 = vsel %vm835, %v1253, 0.0
      %v1462 = vadd.f32 %v1460, %v1461
      %v1463 = vsel %vm835, %v1258, 0.0
      %v1464 = vadd.f32 %v1462, %v1463
      %v1465 = vsel %vm835, %v1261, 0.0
      %v1466 = vadd.f32 %v1464, %v1465
      %v1467 = vsel %vm835, %v1266, 0.0
      %v1468 = vadd.f32 %v1466, %v1467
      %v1469 = vsel %vm835, %v1269, 0.0
      %v1470 = vadd.f32 %v1468, %v1469
      %v1471 = vsel %vm835, %v1274, 0.0
      %v1472 = vadd.f32 %v1470, %v1471
      %v1473 = vsel %vm835, %v1277, 0.0
      %v1474 = vadd.f32 %v1472, %v1473
      %v1475 = vsel %vm835, %v1282, 0.0
      %v1476 = vadd.f32 %v1474, %v1475
      %v1477 = vsel %vm835, %v1285, 0.0
      %v1478 = vadd.f32 %v1476, %v1477
      %v1479 = vsel %vm835, %v1290, 0.0
      %v1480 = vadd.f32 %v1478, %v1479
      %v1481 = vsel %vm835, %v1293, 0.0
      %v1482 = vadd.f32 %v1480, %v1481
      %v1483 = vsel %vm835, %v1298, 0.0
      %v1484 = vadd.f32 %v1482, %v1483
      %v1485 = vsel %vm835, %v1301, 0.0
      %v1486 = vadd.f32 %v1484, %v1485
      %v1487 = vsel %vm835, %v1306, 0.0
      %v1488 = vadd.f32 %v1486, %v1487
      %v1489 = vsel %vm835, %v1309, 0.0
      %v1490 = vadd.f32 %v1488, %v1489
      %v1491 = vsel %vm835, %v1314, 0.0
      %v1492 = vadd.f32 %v1490, %v1491
      %v1493 = vsel %vm835, %v1317, 0.0
      %v1494 = vadd.f32 %v1492, %v1493
      %v1495 = vsel %vm835, %v1322, 0.0
      %v1496 = vadd.f32 %v1494, %v1495
      %v1497 = vsel %vm835, %v1325, 0.0
      %v1498 = vadd.f32 %v1496, %v1497
      %v1499 = vsel %vm835, %v1330, 0.0
      %v1500 = vadd.f32 %v1498, %v1499
      %v1501 = vsel %vm835, %v1333, 0.0
      %v1502 = vadd.f32 %v1500, %v1501
      %v1503 = vsel %vm835, %v1338, 0.0
      %v1504 = vadd.f32 %v1502, %v1503
      %v1505 = vsel %vm835, %v1341, 0.0
      %v1506 = vadd.f32 %v1504, %v1505
      %v1507 = vsel %vm835, %v1346, 0.0
      %v1508 = vadd.f32 %v1506, %v1507
      %v1509 = vsel %vm835, %v1349, 0.0
      %v1510 = vadd.f32 %v1508, %v1509
      %v1511 = vsel %vm835, %v1354, 0.0
      %v1512 = vadd.f32 %v1510, %v1511
      %v1513 = vsel %vm835, %v1357, 0.0
      %v1514 = vadd.f32 %v1512, %v1513
      %v1515 = vsel %vm835, %v1362, 0.0
      %v1516 = vadd.f32 %v1514, %v1515
      %v1517 = vsel %vm835, %v1365, 0.0
      %v1518 = vadd.f32 %v1516, %v1517
      %v1519 = vsel %vm835, %v1370, 0.0
      %v1520 = vadd.f32 %v1518, %v1519
      %v1521 = vrot.slane %v1520, 4
      %v1522 = vadd.f32 %v1520, %v1521
      %v1523 = vrot.slane %v1522, 2
      %v1524 = vadd.f32 %v1522, %v1523
      %v1525 = vrot.slane %v1524, 1
      %v1526 = vadd.f32 %v1524, %v1525
      %v1527 = vmul.f32 %v1178, %v1178
      %v1528 = vmul.f32 %v1181, %v1181
      %v1529 = vmul.f32 %v1186, %v1186
      %v1530 = vmul.f32 %v1189, %v1189
      %v1531 = vmul.f32 %v1194, %v1194
      %v1532 = vmul.f32 %v1197, %v1197
      %v1533 = vmul.f32 %v1202, %v1202
      %v1534 = vmul.f32 %v1205, %v1205
      %v1535 = vmul.f32 %v1210, %v1210
      %v1536 = vmul.f32 %v1213, %v1213
      %v1537 = vmul.f32 %v1218, %v1218
      %v1538 = vmul.f32 %v1221, %v1221
      %v1539 = vmul.f32 %v1226, %v1226
      %v1540 = vmul.f32 %v1229, %v1229
      %v1541 = vmul.f32 %v1234, %v1234
      %v1542 = vmul.f32 %v1237, %v1237
      %v1543 = vmul.f32 %v1242, %v1242
      %v1544 = vmul.f32 %v1245, %v1245
      %v1545 = vmul.f32 %v1250, %v1250
      %v1546 = vmul.f32 %v1253, %v1253
      %v1547 = vmul.f32 %v1258, %v1258
      %v1548 = vmul.f32 %v1261, %v1261
      %v1549 = vmul.f32 %v1266, %v1266
      %v1550 = vmul.f32 %v1269, %v1269
      %v1551 = vmul.f32 %v1274, %v1274
      %v1552 = vmul.f32 %v1277, %v1277
      %v1553 = vmul.f32 %v1282, %v1282
      %v1554 = vmul.f32 %v1285, %v1285
      %v1555 = vmul.f32 %v1290, %v1290
      %v1556 = vmul.f32 %v1293, %v1293
      %v1557 = vmul.f32 %v1298, %v1298
      %v1558 = vmul.f32 %v1301, %v1301
      %v1559 = vmul.f32 %v1306, %v1306
      %v1560 = vmul.f32 %v1309, %v1309
      %v1561 = vmul.f32 %v1314, %v1314
      %v1562 = vmul.f32 %v1317, %v1317
      %v1563 = vmul.f32 %v1322, %v1322
      %v1564 = vmul.f32 %v1325, %v1325
      %v1565 = vmul.f32 %v1330, %v1330
      %v1566 = vmul.f32 %v1333, %v1333
      %v1567 = vmul.f32 %v1338, %v1338
      %v1568 = vmul.f32 %v1341, %v1341
      %v1569 = vmul.f32 %v1346, %v1346
      %v1570 = vmul.f32 %v1349, %v1349
      %v1571 = vmul.f32 %v1354, %v1354
      %v1572 = vmul.f32 %v1357, %v1357
      %v1573 = vmul.f32 %v1362, %v1362
      %v1574 = vmul.f32 %v1365, %v1365
      %v1575 = vmul.f32 %v1370, %v1370
      %v1576 = vsel %vm835, %v1527, 0.0
      %v1577 = vsel %vm835, %v1528, 0.0
      %v1578 = vadd.f32 %v1576, %v1577
      %v1579 = vsel %vm835, %v1529, 0.0
      %v1580 = vadd.f32 %v1578, %v1579
      %v1581 = vsel %vm835, %v1530, 0.0
      %v1582 = vadd.f32 %v1580, %v1581
      %v1583 = vsel %vm835, %v1531, 0.0
      %v1584 = vadd.f32 %v1582, %v1583
      %v1585 = vsel %vm835, %v1532, 0.0
      %v1586 = vadd.f32 %v1584, %v1585
      %v1587 = vsel %vm835, %v1533, 0.0
      %v1588 = vadd.f32 %v1586, %v1587
      %v1589 = vsel %vm835, %v1534, 0.0
      %v1590 = vadd.f32 %v1588, %v1589
      %v1591 = vsel %vm835, %v1535, 0.0
      %v1592 = vadd.f32 %v1590, %v1591
      %v1593 = vsel %vm835, %v1536, 0.0
      %v1594 = vadd.f32 %v1592, %v1593
      %v1595 = vsel %vm835, %v1537, 0.0
      %v1596 = vadd.f32 %v1594, %v1595
      %v1597 = vsel %vm835, %v1538, 0.0
      %v1598 = vadd.f32 %v1596, %v1597
      %v1599 = vsel %vm835, %v1539, 0.0
      %v1600 = vadd.f32 %v1598, %v1599
      %v1601 = vsel %vm835, %v1540, 0.0
      %v1602 = vadd.f32 %v1600, %v1601
      %v1603 = vsel %vm835, %v1541, 0.0
      %v1604 = vadd.f32 %v1602, %v1603
      %v1605 = vsel %vm835, %v1542, 0.0
      %v1606 = vadd.f32 %v1604, %v1605
      %v1607 = vsel %vm835, %v1543, 0.0
      %v1608 = vadd.f32 %v1606, %v1607
      %v1609 = vsel %vm835, %v1544, 0.0
      %v1610 = vadd.f32 %v1608, %v1609
      %v1611 = vsel %vm835, %v1545, 0.0
      %v1612 = vadd.f32 %v1610, %v1611
      %v1613 = vsel %vm835, %v1546, 0.0
      %v1614 = vadd.f32 %v1612, %v1613
      %v1615 = vsel %vm835, %v1547, 0.0
      %v1616 = vadd.f32 %v1614, %v1615
      %v1617 = vsel %vm835, %v1548, 0.0
      %v1618 = vadd.f32 %v1616, %v1617
      %v1619 = vsel %vm835, %v1549, 0.0
      %v1620 = vadd.f32 %v1618, %v1619
      %v1621 = vsel %vm835, %v1550, 0.0
      %v1622 = vadd.f32 %v1620, %v1621
      %v1623 = vsel %vm835, %v1551, 0.0
      %v1624 = vadd.f32 %v1622, %v1623
      %v1625 = vsel %vm835, %v1552, 0.0
      %v1626 = vadd.f32 %v1624, %v1625
      %v1627 = vsel %vm835, %v1553, 0.0
      %v1628 = vadd.f32 %v1626, %v1627
      %v1629 = vsel %vm835, %v1554, 0.0
      %v1630 = vadd.f32 %v1628, %v1629
      %v1631 = vsel %vm835, %v1555, 0.0
      %v1632 = vadd.f32 %v1630, %v1631
      %v1633 = vsel %vm835, %v1556, 0.0
      %v1634 = vadd.f32 %v1632, %v1633
      %v1635 = vsel %vm835, %v1557, 0.0
      %v1636 = vadd.f32 %v1634, %v1635
      %v1637 = vsel %vm835, %v1558, 0.0
      %v1638 = vadd.f32 %v1636, %v1637
      %v1639 = vsel %vm835, %v1559, 0.0
      %v1640 = vadd.f32 %v1638, %v1639
      %v1641 = vsel %vm835, %v1560, 0.0
      %v1642 = vadd.f32 %v1640, %v1641
      %v1643 = vsel %vm835, %v1561, 0.0
      %v1644 = vadd.f32 %v1642, %v1643
      %v1645 = vsel %vm835, %v1562, 0.0
      %v1646 = vadd.f32 %v1644, %v1645
      %v1647 = vsel %vm835, %v1563, 0.0
      %v1648 = vadd.f32 %v1646, %v1647
      %v1649 = vsel %vm835, %v1564, 0.0
      %v1650 = vadd.f32 %v1648, %v1649
      %v1651 = vsel %vm835, %v1565, 0.0
      %v1652 = vadd.f32 %v1650, %v1651
      %v1653 = vsel %vm835, %v1566, 0.0
      %v1654 = vadd.f32 %v1652, %v1653
      %v1655 = vsel %vm835, %v1567, 0.0
      %v1656 = vadd.f32 %v1654, %v1655
      %v1657 = vsel %vm835, %v1568, 0.0
      %v1658 = vadd.f32 %v1656, %v1657
      %v1659 = vsel %vm835, %v1569, 0.0
      %v1660 = vadd.f32 %v1658, %v1659
      %v1661 = vsel %vm835, %v1570, 0.0
      %v1662 = vadd.f32 %v1660, %v1661
      %v1663 = vsel %vm835, %v1571, 0.0
      %v1664 = vadd.f32 %v1662, %v1663
      %v1665 = vsel %vm835, %v1572, 0.0
      %v1666 = vadd.f32 %v1664, %v1665
      %v1667 = vsel %vm835, %v1573, 0.0
      %v1668 = vadd.f32 %v1666, %v1667
      %v1669 = vsel %vm835, %v1574, 0.0
      %v1670 = vadd.f32 %v1668, %v1669
      %v1671 = vsel %vm835, %v1575, 0.0
      %v1672 = vadd.f32 %v1670, %v1671
      %v1673 = vrot.slane %v1672, 4
      %v1674 = vadd.f32 %v1672, %v1673
      %v1675 = vrot.slane %v1674, 2
      %v1676 = vadd.f32 %v1674, %v1675
      %v1677 = vrot.slane %v1676, 1
      %v1678 = vadd.f32 %v1676, %v1677
      %vm1679 = vcmask 1040384
      %v1680 = vsel %vm1679, %v1526, %v1678
      %vm1681 = vcmask 254976
      %1682 = vst.msk [vmem:[%s214] sm:$0x3] %vm1681, %v1680
      %s1683 = smul.u32 49, %s16
      %p1684 = scmp.lt.s32.totalorder %s1683, 195
      %s1685 = scalar_select %p1684, %s1683, 195
      %s1686 = smul.addr %s1685, 8
      %s1687 = scalar_lea.vmem %s3, %s1686
      %p1688 = scmp.lt.s32.totalorder %s16, 3
      %s1689 = scalar_select %p1688, %s16, 3
      %s1690 = smul.addr %s1689, 2
      %s1691 = scalar_lea.vmem %s4, %s1690
      // Predicated region
      $region33: #{resnet_forward.12} parent=31 // pred_check
        %p1692 = pneg %p102
      $region34: #{resnet_forward.12} parent=31 // pred_check_branch
        %1694 = sbr.rel (%p1692) target = $region36
      $region35: #{resnet_forward.12} parent=31 // pred_region
        %s1695 = smul.u32 49, %s16
      $region36: #{resnet_forward.12} parent=31 // pred_fallthru
        _
      // Predicated region
      $region37: #{resnet_forward.12} parent=31 // pred_check
        %p1696 = pneg %p128
      $region38: #{resnet_forward.12} parent=31 // pred_check_branch
        %1698 = sbr.rel (%p1696) target = $region40
      $region39: #{resnet_forward.12} parent=31 // pred_region
        _
      $region40: #{resnet_forward.12} parent=31 // pred_fallthru
        _
    $region32: #{resnet_forward.12} parent=5 // pred_fallthru
      _
    %p1699 = scmp.le.s32.totalorder 2, %s11
    // Predicated region
    $region41: #{resnet_forward.12} parent=5 // pred_check
      %p1700 = pneg %p1699
    $region42: #{resnet_forward.12} parent=5 // pred_check_branch
      %1702 = sbr.rel (%p1700) target = $region44
    $region43: #{resnet_forward.12} parent=5 // pred_region
      %s1703 = ssub.s32 %s11, 2
      // Predicated region
      $region45: #{resnet_forward.12} parent=43 // pred_check
        %p1704 = pneg %p108
      $region46: #{resnet_forward.12} parent=43 // pred_check_branch
        %1706 = sbr.rel (%p1704) target = $region48
      $region47: #{resnet_forward.12} parent=43 // pred_region
        %s1707 = smul.u32 49, %s17
        %p1708 = scmp.lt.s32.totalorder %s1707, 195
        %s1709 = scalar_select %p1708, %s1707, 195
        %s1710 = smul.addr %s1709, 8
        %s1711 = scalar_lea.vmem %s3, %s1710
      $region48: #{resnet_forward.12} parent=43 // pred_fallthru
        _
      // Predicated region
      $region49: #{resnet_forward.12} parent=43 // pred_check
        %p1712 = pneg %p134
      $region50: #{resnet_forward.12} parent=43 // pred_check_branch
        %1714 = sbr.rel (%p1712) target = $region52
      $region51: #{resnet_forward.12} parent=43 // pred_region
        %p1715 = scmp.lt.s32.totalorder %s17, 3
        %s1716 = scalar_select %p1715, %s17, 3
        %s1717 = smul.addr %s1716, 2
        %s1718 = scalar_lea.vmem %s4, %s1717
      $region52: #{resnet_forward.12} parent=43 // pred_fallthru
        _
    $region44: #{resnet_forward.12} parent=5 // pred_fallthru
      _
  $region6: #{resnet_forward.12} parent=0 // loop_footer
    %s15 = sadd.s32 1, %s11
  $region7: #{resnet_forward.12} parent=0 // loop_footer_branch
    %10 = sbr.rel target = $region3
  $region8: #{resnet_forward.12} parent=0 // loop_exit
    _

// kernel: resnet_forward.15
$region0: #{resnet_forward.15}
  #allocation0 [shape = 'u32[]', space=smem, size = 0x4, offset = 0x4, fixed_abs, tag = 'smem constant byte address 0x4 - core index']
  #allocation1 [shape = 'u32[144,128]{1,0:T(1,128)}', space=vmem, size = 0x12000, scoped, tag = 'internal scratch']
  %s0 = inlined_call_operand.vmem [shape: f32[1568,32], index: 0, kind: input, shape index: {}]
  %s1 = inlined_call_operand.vmem [shape: f32[1,32], index: 1, kind: input, shape index: {}]
  %s2 = inlined_call_operand.vmem [shape: f32[1,32], index: 2, kind: input, shape index: {}]
  %s3 = inlined_call_operand.vmem [shape: f32[1568,32], index: 3, kind: input, shape index: {}]
  %s4 = inlined_call_operand.vmem [shape: f32[1568,32], index: 4, kind: output, shape index: {}]
  %s5 = sld [smem:[#allocation0]]
  $region49: #{resnet_forward.15} parent=0
    _
  %s7 = ssub.s32 1, %s5
  %s8 = scalar_select 0, %s7, %s5
  loop: start=0, step=1, limit=6
  $region2: #{resnet_forward.15} parent=0 // loop_pre_header
    _
  $region3: #{resnet_forward.15} parent=0 // loop_header
    %s10 = sphi 0, %s14
    %p11 = scmp.ge.s32.totalorder %s10, 6
    %s20 = sphi 0, %s22
    %s23 = sphi 0, %s20
    %s24 = sphi 0, %s23
    %s40 = sphi 0, %s24
    %s44 = sphi 0, %s44
    %s46 = sphi 0, %s44
    %s47 = sphi 0, %s46
    %s61 = sphi 0, %s47
    %s65 = sphi 0, %s65
    %s67 = sphi 0, %s65
    %s68 = sphi 0, %s67
    %s82 = sphi 0, %s68
    %s88 = sphi 0, %s90
    %s91 = sphi 0, %s88
    %s92 = sphi 0, %s91
    %s108 = sphi 0, %s92
    %s114 = sphi 0, %s116
    %s117 = sphi 0, %s114
    %s118 = sphi 0, %s117
    %s134 = sphi 0, %s118
  $region4: #{resnet_forward.15} parent=0 // loop_header_branch
    %13 = sbr.rel (%p11) target = $region8
  $region5: #{resnet_forward.15} parent=0 // loop_body
    %s15 = ssub.s32 %s10, 1
    %s16 = ssub.s32 %s10, 2
    %s17 = sadd.s32 %s10, 1
    %s18 = ssub.s32 %s10, %s17
    %p19 = scmp.eq.s32.totalorder %s18, 0
    %s21 = sadd.s32 %s20, 1
    %s22 = scalar_select %p19, %s20, %s21
    %p25 = pneg %p19
    %p26 = scmp.eq.s32.totalorder %s10, 3
    %p27 = por %p25, %p26
    %p28 = scmp.ne.s32.totalorder %s20, %s23
    %p29 = scmp.eq.s32.totalorder %s10, 0
    %p30 = por %p28, %p29
    %p31 = scmp.ne.s32.totalorder %s20, %s23
    %p32 = scmp.eq.s32.totalorder %s15, 3
    %p33 = por %p31, %p32
    %p34 = scmp.ne.s32.totalorder %s23, %s24
    %p35 = scmp.eq.s32.totalorder %s15, 0
    %p36 = por %p34, %p35
    %p37 = scmp.ne.s32.totalorder %s23, %s24
    %p38 = scmp.eq.s32.totalorder %s16, 3
    %p39 = por %p37, %p38
    %p41 = scmp.ne.s32.totalorder %s24, %s40
    %p42 = scmp.eq.s32.totalorder %s16, 0
    %p43 = por %p41, %p42
    %s45 = sadd.s32 %s44, 1
    %p48 = scmp.eq.s32.totalorder %s10, 3
    %p49 = scmp.ne.s32.totalorder %s44, %s46
    %p50 = scmp.eq.s32.totalorder %s10, 0
    %p51 = por %p49, %p50
    %p52 = scmp.ne.s32.totalorder %s44, %s46
    %p53 = scmp.eq.s32.totalorder %s15, 3
    %p54 = por %p52, %p53
    %p55 = scmp.ne.s32.totalorder %s46, %s47
    %p56 = scmp.eq.s32.totalorder %s15, 0
    %p57 = por %p55, %p56
    %p58 = scmp.ne.s32.totalorder %s46, %s47
    %p59 = scmp.eq.s32.totalorder %s16, 3
    %p60 = por %p58, %p59
    %p62 = scmp.ne.s32.totalorder %s47, %s61
    %p63 = scmp.eq.s32.totalorder %s16, 0
    %p64 = por %p62, %p63
    %s66 = sadd.s32 %s65, 1
    %p69 = scmp.eq.s32.totalorder %s10, 3
    %p70 = scmp.ne.s32.totalorder %s65, %s67
    %p71 = scmp.eq.s32.totalorder %s10, 0
    %p72 = por %p70, %p71
    %p73 = scmp.ne.s32.totalorder %s65, %s67
    %p74 = scmp.eq.s32.totalorder %s15, 3
    %p75 = por %p73, %p74
    %p76 = scmp.ne.s32.totalorder %s67, %s68
    %p77 = scmp.eq.s32.totalorder %s15, 0
    %p78 = por %p76, %p77
    %p79 = scmp.ne.s32.totalorder %s67, %s68
    %p80 = scmp.eq.s32.totalorder %s16, 3
    %p81 = por %p79, %p80
    %p83 = scmp.ne.s32.totalorder %s68, %s82
    %p84 = scmp.eq.s32.totalorder %s16, 0
    %p85 = por %p83, %p84
    %s86 = ssub.s32 %s10, %s17
    %p87 = scmp.eq.s32.totalorder %s86, 0
    %s89 = sadd.s32 %s88, 1
    %s90 = scalar_select %p87, %s88, %s89
    %p93 = pneg %p87
    %p94 = scmp.eq.s32.totalorder %s10, 3
    %p95 = por %p93, %p94
    %p96 = scmp.ne.s32.totalorder %s88, %s91
    %p97 = scmp.eq.s32.totalorder %s10, 0
    %p98 = por %p96, %p97
    %p99 = scmp.ne.s32.totalorder %s88, %s91
    %p100 = scmp.eq.s32.totalorder %s15, 3
    %p101 = por %p99, %p100
    %p102 = scmp.ne.s32.totalorder %s91, %s92
    %p103 = scmp.eq.s32.totalorder %s15, 0
    %p104 = por %p102, %p103
    %p105 = scmp.ne.s32.totalorder %s91, %s92
    %p106 = scmp.eq.s32.totalorder %s16, 3
    %p107 = por %p105, %p106
    %p109 = scmp.ne.s32.totalorder %s92, %s108
    %p110 = scmp.eq.s32.totalorder %s16, 0
    %p111 = por %p109, %p110
    %s112 = ssub.s32 %s10, %s17
    %p113 = scmp.eq.s32.totalorder %s112, 0
    %s115 = sadd.s32 %s114, 1
    %s116 = scalar_select %p113, %s114, %s115
    %p119 = pneg %p113
    %p120 = scmp.eq.s32.totalorder %s10, 3
    %p121 = por %p119, %p120
    %p122 = scmp.ne.s32.totalorder %s114, %s117
    %p123 = scmp.eq.s32.totalorder %s10, 0
    %p124 = por %p122, %p123
    %p125 = scmp.ne.s32.totalorder %s114, %s117
    %p126 = scmp.eq.s32.totalorder %s15, 3
    %p127 = por %p125, %p126
    %p128 = scmp.ne.s32.totalorder %s117, %s118
    %p129 = scmp.eq.s32.totalorder %s15, 0
    %p130 = por %p128, %p129
    %p131 = scmp.ne.s32.totalorder %s117, %s118
    %p132 = scmp.eq.s32.totalorder %s16, 3
    %p133 = por %p131, %p132
    %p135 = scmp.ne.s32.totalorder %s118, %s134
    %p136 = scmp.eq.s32.totalorder %s16, 0
    %p137 = por %p135, %p136
    %p138 = scmp.le.s32.totalorder 1, %s10
    %p139 = scmp.lt.s32.totalorder %s10, 5
    %p140 = pnand %p138, %p139
    %p141 = pneg %p140
    // Predicated region
    $region9: #{resnet_forward.15} parent=5 // pred_check
      _
    $region10: #{resnet_forward.15} parent=5 // pred_check_branch
      %143 = sbr.rel (%p140) target = $region12
    $region11: #{resnet_forward.15} parent=5 // pred_region
      %s144 = ssub.s32 %s10, 1
      // Predicated region
      $region13: #{resnet_forward.15} parent=11 // pred_check
        %p145 = pneg %p57
      $region14: #{resnet_forward.15} parent=11 // pred_check_branch
        %147 = sbr.rel (%p145) target = $region16
      $region15: #{resnet_forward.15} parent=11 // pred_region
        _
      $region16: #{resnet_forward.15} parent=11 // pred_fallthru
        _
      // Predicated region
      $region17: #{resnet_forward.15} parent=11 // pred_check
        %p148 = pneg %p78
      $region18: #{resnet_forward.15} parent=11 // pred_check_branch
        %150 = sbr.rel (%p148) target = $region20
      $region19: #{resnet_forward.15} parent=11 // pred_region
        _
      $region20: #{resnet_forward.15} parent=11 // pred_fallthru
        _
    $region12: #{resnet_forward.15} parent=5 // pred_fallthru
      _
    %p151 = scmp.lt.s32.totalorder %s10, 4
    // Predicated region
    $region21: #{resnet_forward.15} parent=5 // pred_check
      %p152 = pneg %p151
    $region22: #{resnet_forward.15} parent=5 // pred_check_branch
      %154 = sbr.rel (%p152) target = $region24
    $region23: #{resnet_forward.15} parent=5 // pred_region
      // Predicated region
      $region25: #{resnet_forward.15} parent=23 // pred_check
        %p155 = pneg %p30
      $region26: #{resnet_forward.15} parent=23 // pred_check_branch
        %157 = sbr.rel (%p155) target = $region28
      $region27: #{resnet_forward.15} parent=23 // pred_region
        %s158 = smul.u32 49, %s10
        %p159 = scmp.lt.s32.totalorder %s158, 195
        %s160 = scalar_select %p159, %s158, 195
        %s161 = smul.addr %s160, 8
        %s162 = scalar_lea.vmem %s0, %s161
        %s163 = smul.u32 49, %s10
      $region28: #{resnet_forward.15} parent=23 // pred_fallthru
        _
      // Predicated region
      $region29: #{resnet_forward.15} parent=23 // pred_check
        %p164 = pneg %p98
      $region30: #{resnet_forward.15} parent=23 // pred_check_branch
        %166 = sbr.rel (%p164) target = $region32
      $region31: #{resnet_forward.15} parent=23 // pred_region
        %s167 = smul.u32 49, %s10
        %p168 = scmp.lt.s32.totalorder %s167, 195
        %s169 = scalar_select %p168, %s167, 195
        %s170 = smul.addr %s169, 8
        %s171 = scalar_lea.vmem %s3, %s170
        %s172 = smul.u32 49, %s10
      $region32: #{resnet_forward.15} parent=23 // pred_fallthru
        _
    $region24: #{resnet_forward.15} parent=5 // pred_fallthru
      _
    %p173 = scmp.le.s32.totalorder 1, %s10
    %p174 = scmp.lt.s32.totalorder %s10, 5
    %p175 = pnand %p173, %p174
    %p176 = pneg %p175
    // Predicated region
    $region33: #{resnet_forward.15} parent=5 // pred_check
      _
    $region34: #{resnet_forward.15} parent=5 // pred_check_branch
      %178 = sbr.rel (%p175) target = $region36
    $region35: #{resnet_forward.15} parent=5 // pred_region
      %s179 = ssub.s32 %s10, 1
      %s180 = smul.u32 49, %s15
      %p181 = scmp.lt.s32.totalorder %s180, 195
      %s182 = scalar_select %p181, %s180, 195
      %s183 = smul.addr %s182, 8
      %s184 = scalar_lea.vmem %s0, %s183
      %p185 = pneg %p36
      %p186 = pneg %p33
      %p187 = pneg %p57
      %p188 = pneg %p54
      %p189 = pneg %p78
      %p190 = pneg %p75
      %s191 = smul.u32 49, %s15
      %p192 = scmp.lt.s32.totalorder %s191, 195
      %s193 = scalar_select %p192, %s191, 195
      %s194 = smul.addr %s193, 8
      %s195 = scalar_lea.vmem %s3, %s194
      %p196 = pneg %p104
      %p197 = pneg %p101
      %p198 = pneg %p130
      %p199 = pneg %p127
      %s200 = smul.u32 49, %s15
      %p201 = scmp.lt.s32.totalorder %s200, 195
      %s202 = scalar_select %p201, %s200, 195
      %s203 = smul.addr %s202, 8
      %s204 = scalar_lea.vmem %s4, %s203
      %s205 = smul.u32 49, %s15
      %p206 = scmp.lt.s32.totalorder %s205, 195
      %s207 = scalar_select %p206, %s205, 195
      %s208 = smul.addr %s207, 8
      %s209 = scalar_lea.vmem %s0, %s208
      %s210 = smul.u32 49, %s15
      %s211 = smul.u32 49, %s15
      %p212 = scmp.lt.s32.totalorder %s211, 195
      %s213 = scalar_select %p212, %s211, 195
      %s214 = smul.addr %s213, 8
      %s215 = scalar_lea.vmem %s3, %s214
      %s216 = smul.u32 49, %s15
      %s217 = smul.u32 49, %s15
      %p218 = scmp.lt.s32.totalorder %s217, 195
      %s219 = scalar_select %p218, %s217, 195
      %s220 = smul.addr %s219, 8
      %s221 = scalar_lea.vmem %s4, %s220
      %s222 = smul.u32 49, %s15
      %v223 = vld [vmem:[%s209] sm:$0xff]
      %v224 = vld [vmem:[%s209 + $0x8] sm:$0xff]
      %v225 = vld [vmem:[%s209 + $0x10] sm:$0xff]
      %v226 = vld [vmem:[%s209 + $0x18] sm:$0xff]
      %v227 = vld [vmem:[%s209 + $0x20] sm:$0xff]
      %v228 = vld [vmem:[%s209 + $0x28] sm:$0xff]
      %v229 = vld [vmem:[%s209 + $0x30] sm:$0xff]
      %v230 = vld [vmem:[%s209 + $0x38] sm:$0xff]
      %v231 = vld [vmem:[%s209 + $0x40] sm:$0xff]
      %v232 = vld [vmem:[%s209 + $0x48] sm:$0xff]
      %v233 = vld [vmem:[%s209 + $0x50] sm:$0xff]
      %v234 = vld [vmem:[%s209 + $0x58] sm:$0xff]
      %v235 = vld [vmem:[%s209 + $0x60] sm:$0xff]
      %v236 = vld [vmem:[%s209 + $0x68] sm:$0xff]
      %v237 = vld [vmem:[%s209 + $0x70] sm:$0xff]
      %v238 = vld [vmem:[%s209 + $0x78] sm:$0xff]
      %v239 = vld [vmem:[%s209 + $0x80] sm:$0xff]
      %v240 = vld [vmem:[%s209 + $0x88] sm:$0xff]
      %v241 = vld [vmem:[%s209 + $0x90] sm:$0xff]
      %v242 = vld [vmem:[%s209 + $0x98] sm:$0xff]
      %v243 = vld [vmem:[%s209 + $0xa0] sm:$0xff]
      %v244 = vld [vmem:[%s209 + $0xa8] sm:$0xff]
      %v245 = vld [vmem:[%s209 + $0xb0] sm:$0xff]
      %v246 = vld [vmem:[%s209 + $0xb8] sm:$0xff]
      %v247 = vld [vmem:[%s209 + $0xc0] sm:$0xff]
      %v248 = vld [vmem:[%s209 + $0xc8] sm:$0xff]
      %v249 = vld [vmem:[%s209 + $0xd0] sm:$0xff]
      %v250 = vld [vmem:[%s209 + $0xd8] sm:$0xff]
      %v251 = vld [vmem:[%s209 + $0xe0] sm:$0xff]
      %v252 = vld [vmem:[%s209 + $0xe8] sm:$0xff]
      %v253 = vld [vmem:[%s209 + $0xf0] sm:$0xff]
      %v254 = vld [vmem:[%s209 + $0xf8] sm:$0xff]
      %v255 = vld [vmem:[%s209 + $0x100] sm:$0xff]
      %v256 = vld [vmem:[%s209 + $0x108] sm:$0xff]
      %v257 = vld [vmem:[%s209 + $0x110] sm:$0xff]
      %v258 = vld [vmem:[%s209 + $0x118] sm:$0xff]
      %v259 = vld [vmem:[%s209 + $0x120] sm:$0xff]
      %v260 = vld [vmem:[%s209 + $0x128] sm:$0xff]
      %v261 = vld [vmem:[%s209 + $0x130] sm:$0xff]
      %v262 = vld [vmem:[%s209 + $0x138] sm:$0xff]
      %v263 = vld [vmem:[%s209 + $0x140] sm:$0xff]
      %v264 = vld [vmem:[%s209 + $0x148] sm:$0xff]
      %v265 = vld [vmem:[%s209 + $0x150] sm:$0xff]
      %v266 = vld [vmem:[%s209 + $0x158] sm:$0xff]
      %v267 = vld [vmem:[%s209 + $0x160] sm:$0xff]
      %v268 = vld [vmem:[%s209 + $0x168] sm:$0xff]
      %v269 = vld [vmem:[%s209 + $0x170] sm:$0xff]
      %v270 = vld [vmem:[%s209 + $0x178] sm:$0xff]
      %v271 = vld [vmem:[%s209 + $0x180] sm:$0xff]
      %v272 = vld [vmem:[%s1] sm:$0x1]
      %v274 = vlaneseq
      %v275 = vshrl.u32 %v274, 7
      %v276 = vsub.s32 0, %v275
      %v277 = vrot.slane %v272, %v276
      %v279 = vmul.f32 %v223, %v277
      %v280 = vmul.f32 %v224, %v277
      %v281 = vmul.f32 %v225, %v277
      %v282 = vmul.f32 %v226, %v277
      %v283 = vmul.f32 %v227, %v277
      %v284 = vmul.f32 %v228, %v277
      %v285 = vmul.f32 %v229, %v277
      %v286 = vmul.f32 %v230, %v277
      %v287 = vmul.f32 %v231, %v277
      %v288 = vmul.f32 %v232, %v277
      %v289 = vmul.f32 %v233, %v277
      %v290 = vmul.f32 %v234, %v277
      %v291 = vmul.f32 %v235, %v277
      %v292 = vmul.f32 %v236, %v277
      %v293 = vmul.f32 %v237, %v277
      %v294 = vmul.f32 %v238, %v277
      %v295 = vmul.f32 %v239, %v277
      %v296 = vmul.f32 %v240, %v277
      %v297 = vmul.f32 %v241, %v277
      %v298 = vmul.f32 %v242, %v277
      %v299 = vmul.f32 %v243, %v277
      %v300 = vmul.f32 %v244, %v277
      %v301 = vmul.f32 %v245, %v277
      %v302 = vmul.f32 %v246, %v277
      %v303 = vmul.f32 %v247, %v277
      %v304 = vmul.f32 %v248, %v277
      %v305 = vmul.f32 %v249, %v277
      %v306 = vmul.f32 %v250, %v277
      %v307 = vmul.f32 %v251, %v277
      %v308 = vmul.f32 %v252, %v277
      %v309 = vmul.f32 %v253, %v277
      %v310 = vmul.f32 %v254, %v277
      %v311 = vmul.f32 %v255, %v277
      %v312 = vmul.f32 %v256, %v277
      %v313 = vmul.f32 %v257, %v277
      %v314 = vmul.f32 %v258, %v277
      %v315 = vmul.f32 %v259, %v277
      %v316 = vmul.f32 %v260, %v277
      %v317 = vmul.f32 %v261, %v277
      %v318 = vmul.f32 %v262, %v277
      %v319 = vmul.f32 %v263, %v277
      %v320 = vmul.f32 %v264, %v277
      %v321 = vmul.f32 %v265, %v277
      %v322 = vmul.f32 %v266, %v277
      %v323 = vmul.f32 %v267, %v277
      %v324 = vmul.f32 %v268, %v277
      %v325 = vmul.f32 %v269, %v277
      %v326 = vmul.f32 %v270, %v277
      %v327 = vmul.f32 %v271, %v277
      %v328 = vld [vmem:[%s2] sm:$0x1]
      %v330 = vlaneseq
      %v331 = vshrl.u32 %v330, 7
      %v332 = vsub.s32 0, %v331
      %v333 = vrot.slane %v328, %v332
      %v335 = vadd.f32 %v279, %v333
      %v336 = vadd.f32 %v280, %v333
      %v337 = vadd.f32 %v281, %v333
      %v338 = vadd.f32 %v282, %v333
      %v339 = vadd.f32 %v283, %v333
      %v340 = vadd.f32 %v284, %v333
      %v341 = vadd.f32 %v285, %v333
      %v342 = vadd.f32 %v286, %v333
      %v343 = vadd.f32 %v287, %v333
      %v344 = vadd.f32 %v288, %v333
      %v345 = vadd.f32 %v289, %v333
      %v346 = vadd.f32 %v290, %v333
      %v347 = vadd.f32 %v291, %v333
      %v348 = vadd.f32 %v292, %v333
      %v349 = vadd.f32 %v293, %v333
      %v350 = vadd.f32 %v294, %v333
      %v351 = vadd.f32 %v295, %v333
      %v352 = vadd.f32 %v296, %v333
      %v353 = vadd.f32 %v297, %v333
      %v354 = vadd.f32 %v298, %v333
      %v355 = vadd.f32 %v299, %v333
      %v356 = vadd.f32 %v300, %v333
      %v357 = vadd.f32 %v301, %v333
      %v358 = vadd.f32 %v302, %v333
      %v359 = vadd.f32 %v303, %v333
      %v360 = vadd.f32 %v304, %v333
      %v361 = vadd.f32 %v305, %v333
      %v362 = vadd.f32 %v306, %v333
      %v363 = vadd.f32 %v307, %v333
      %v364 = vadd.f32 %v308, %v333
      %v365 = vadd.f32 %v309, %v333
      %v366 = vadd.f32 %v310, %v333
      %v367 = vadd.f32 %v311, %v333
      %v368 = vadd.f32 %v312, %v333
      %v369 = vadd.f32 %v313, %v333
      %v370 = vadd.f32 %v314, %v333
      %v371 = vadd.f32 %v315, %v333
      %v372 = vadd.f32 %v316, %v333
      %v373 = vadd.f32 %v317, %v333
      %v374 = vadd.f32 %v318, %v333
      %v375 = vadd.f32 %v319, %v333
      %v376 = vadd.f32 %v320, %v333
      %v377 = vadd.f32 %v321, %v333
      %v378 = vadd.f32 %v322, %v333
      %v379 = vadd.f32 %v323, %v333
      %v380 = vadd.f32 %v324, %v333
      %v381 = vadd.f32 %v325, %v333
      %v382 = vadd.f32 %v326, %v333
      %v383 = vadd.f32 %v327, %v333
      %v384 = vld [vmem:[%s215] sm:$0xff]
      %v385 = vld [vmem:[%s215 + $0x8] sm:$0xff]
      %v386 = vld [vmem:[%s215 + $0x10] sm:$0xff]
      %v387 = vld [vmem:[%s215 + $0x18] sm:$0xff]
      %v388 = vld [vmem:[%s215 + $0x20] sm:$0xff]
      %v389 = vld [vmem:[%s215 + $0x28] sm:$0xff]
      %v390 = vld [vmem:[%s215 + $0x30] sm:$0xff]
      %v391 = vld [vmem:[%s215 + $0x38] sm:$0xff]
      %v392 = vld [vmem:[%s215 + $0x40] sm:$0xff]
      %v393 = vld [vmem:[%s215 + $0x48] sm:$0xff]
      %v394 = vld [vmem:[%s215 + $0x50] sm:$0xff]
      %v395 = vld [vmem:[%s215 + $0x58] sm:$0xff]
      %v396 = vld [vmem:[%s215 + $0x60] sm:$0xff]
      %v397 = vld [vmem:[%s215 + $0x68] sm:$0xff]
      %v398 = vld [vmem:[%s215 + $0x70] sm:$0xff]
      %v399 = vld [vmem:[%s215 + $0x78] sm:$0xff]
      %v400 = vld [vmem:[%s215 + $0x80] sm:$0xff]
      %v401 = vld [vmem:[%s215 + $0x88] sm:$0xff]
      %v402 = vld [vmem:[%s215 + $0x90] sm:$0xff]
      %v403 = vld [vmem:[%s215 + $0x98] sm:$0xff]
      %v404 = vld [vmem:[%s215 + $0xa0] sm:$0xff]
      %v405 = vld [vmem:[%s215 + $0xa8] sm:$0xff]
      %v406 = vld [vmem:[%s215 + $0xb0] sm:$0xff]
      %v407 = vld [vmem:[%s215 + $0xb8] sm:$0xff]
      %v408 = vld [vmem:[%s215 + $0xc0] sm:$0xff]
      %v409 = vld [vmem:[%s215 + $0xc8] sm:$0xff]
      %v410 = vld [vmem:[%s215 + $0xd0] sm:$0xff]
      %v411 = vld [vmem:[%s215 + $0xd8] sm:$0xff]
      %v412 = vld [vmem:[%s215 + $0xe0] sm:$0xff]
      %v413 = vld [vmem:[%s215 + $0xe8] sm:$0xff]
      %v414 = vld [vmem:[%s215 + $0xf0] sm:$0xff]
      %v415 = vld [vmem:[%s215 + $0xf8] sm:$0xff]
      %v416 = vld [vmem:[%s215 + $0x100] sm:$0xff]
      %v417 = vld [vmem:[%s215 + $0x108] sm:$0xff]
      %v418 = vld [vmem:[%s215 + $0x110] sm:$0xff]
      %v419 = vld [vmem:[%s215 + $0x118] sm:$0xff]
      %v420 = vld [vmem:[%s215 + $0x120] sm:$0xff]
      %v421 = vld [vmem:[%s215 + $0x128] sm:$0xff]
      %v422 = vld [vmem:[%s215 + $0x130] sm:$0xff]
      %v423 = vld [vmem:[%s215 + $0x138] sm:$0xff]
      %v424 = vld [vmem:[%s215 + $0x140] sm:$0xff]
      %v425 = vld [vmem:[%s215 + $0x148] sm:$0xff]
      %v426 = vld [vmem:[%s215 + $0x150] sm:$0xff]
      %v427 = vld [vmem:[%s215 + $0x158] sm:$0xff]
      %v428 = vld [vmem:[%s215 + $0x160] sm:$0xff]
      %v429 = vld [vmem:[%s215 + $0x168] sm:$0xff]
      %v430 = vld [vmem:[%s215 + $0x170] sm:$0xff]
      %v431 = vld [vmem:[%s215 + $0x178] sm:$0xff]
      %v432 = vld [vmem:[%s215 + $0x180] sm:$0xff]
      %v433 = vadd.f32 %v335, %v384
      %v434 = vadd.f32 %v336, %v385
      %v435 = vadd.f32 %v337, %v386
      %v436 = vadd.f32 %v338, %v387
      %v437 = vadd.f32 %v339, %v388
      %v438 = vadd.f32 %v340, %v389
      %v439 = vadd.f32 %v341, %v390
      %v440 = vadd.f32 %v342, %v391
      %v441 = vadd.f32 %v343, %v392
      %v442 = vadd.f32 %v344, %v393
      %v443 = vadd.f32 %v345, %v394
      %v444 = vadd.f32 %v346, %v395
      %v445 = vadd.f32 %v347, %v396
      %v446 = vadd.f32 %v348, %v397
      %v447 = vadd.f32 %v349, %v398
      %v448 = vadd.f32 %v350, %v399
      %v449 = vadd.f32 %v351, %v400
      %v450 = vadd.f32 %v352, %v401
      %v451 = vadd.f32 %v353, %v402
      %v452 = vadd.f32 %v354, %v403
      %v453 = vadd.f32 %v355, %v404
      %v454 = vadd.f32 %v356, %v405
      %v455 = vadd.f32 %v357, %v406
      %v456 = vadd.f32 %v358, %v407
      %v457 = vadd.f32 %v359, %v408
      %v458 = vadd.f32 %v360, %v409
      %v459 = vadd.f32 %v361, %v410
      %v460 = vadd.f32 %v362, %v411
      %v461 = vadd.f32 %v363, %v412
      %v462 = vadd.f32 %v364, %v413
      %v463 = vadd.f32 %v365, %v414
      %v464 = vadd.f32 %v366, %v415
      %v465 = vadd.f32 %v367, %v416
      %v466 = vadd.f32 %v368, %v417
      %v467 = vadd.f32 %v369, %v418
      %v468 = vadd.f32 %v370, %v419
      %v469 = vadd.f32 %v371, %v420
      %v470 = vadd.f32 %v372, %v421
      %v471 = vadd.f32 %v373, %v422
      %v472 = vadd.f32 %v374, %v423
      %v473 = vadd.f32 %v375, %v424
      %v474 = vadd.f32 %v376, %v425
      %v475 = vadd.f32 %v377, %v426
      %v476 = vadd.f32 %v378, %v427
      %v477 = vadd.f32 %v379, %v428
      %v478 = vadd.f32 %v380, %v429
      %v479 = vadd.f32 %v381, %v430
      %v480 = vadd.f32 %v382, %v431
      %v481 = vadd.f32 %v383, %v432
      %v482 = vmax.f32 %v433, 0.0
      %v483 = vmax.f32 %v434, 0.0
      %v484 = vmax.f32 %v435, 0.0
      %v485 = vmax.f32 %v436, 0.0
      %v486 = vmax.f32 %v437, 0.0
      %v487 = vmax.f32 %v438, 0.0
      %v488 = vmax.f32 %v439, 0.0
      %v489 = vmax.f32 %v440, 0.0
      %v490 = vmax.f32 %v441, 0.0
      %v491 = vmax.f32 %v442, 0.0
      %v492 = vmax.f32 %v443, 0.0
      %v493 = vmax.f32 %v444, 0.0
      %v494 = vmax.f32 %v445, 0.0
      %v495 = vmax.f32 %v446, 0.0
      %v496 = vmax.f32 %v447, 0.0
      %v497 = vmax.f32 %v448, 0.0
      %v498 = vmax.f32 %v449, 0.0
      %v499 = vmax.f32 %v450, 0.0
      %v500 = vmax.f32 %v451, 0.0
      %v501 = vmax.f32 %v452, 0.0
      %v502 = vmax.f32 %v453, 0.0
      %v503 = vmax.f32 %v454, 0.0
      %v504 = vmax.f32 %v455, 0.0
      %v505 = vmax.f32 %v456, 0.0
      %v506 = vmax.f32 %v457, 0.0
      %v507 = vmax.f32 %v458, 0.0
      %v508 = vmax.f32 %v459, 0.0
      %v509 = vmax.f32 %v460, 0.0
      %v510 = vmax.f32 %v461, 0.0
      %v511 = vmax.f32 %v462, 0.0
      %v512 = vmax.f32 %v463, 0.0
      %v513 = vmax.f32 %v464, 0.0
      %v514 = vmax.f32 %v465, 0.0
      %v515 = vmax.f32 %v466, 0.0
      %v516 = vmax.f32 %v467, 0.0
      %v517 = vmax.f32 %v468, 0.0
      %v518 = vmax.f32 %v469, 0.0
      %v519 = vmax.f32 %v470, 0.0
      %v520 = vmax.f32 %v471, 0.0
      %v521 = vmax.f32 %v472, 0.0
      %v522 = vmax.f32 %v473, 0.0
      %v523 = vmax.f32 %v474, 0.0
      %v524 = vmax.f32 %v475, 0.0
      %v525 = vmax.f32 %v476, 0.0
      %v526 = vmax.f32 %v477, 0.0
      %v527 = vmax.f32 %v478, 0.0
      %v528 = vmax.f32 %v479, 0.0
      %v529 = vmax.f32 %v480, 0.0
      %v530 = vmax.f32 %v481, 0.0
      %vm531 = vcmask 261120
      %532 = vst.msk [vmem:[%s221] sm:$0xff] %vm531, %v482
      %533 = vst.msk [vmem:[%s221 + $0x8] sm:$0xff] %vm531, %v483
      %534 = vst.msk [vmem:[%s221 + $0x10] sm:$0xff] %vm531, %v484
      %535 = vst.msk [vmem:[%s221 + $0x18] sm:$0xff] %vm531, %v485
      %536 = vst.msk [vmem:[%s221 + $0x20] sm:$0xff] %vm531, %v486
      %537 = vst.msk [vmem:[%s221 + $0x28] sm:$0xff] %vm531, %v487
      %538 = vst.msk [vmem:[%s221 + $0x30] sm:$0xff] %vm531, %v488
      %539 = vst.msk [vmem:[%s221 + $0x38] sm:$0xff] %vm531, %v489
      %540 = vst.msk [vmem:[%s221 + $0x40] sm:$0xff] %vm531, %v490
      %541 = vst.msk [vmem:[%s221 + $0x48] sm:$0xff] %vm531, %v491
      %542 = vst.msk [vmem:[%s221 + $0x50] sm:$0xff] %vm531, %v492
      %543 = vst.msk [vmem:[%s221 + $0x58] sm:$0xff] %vm531, %v493
      %544 = vst.msk [vmem:[%s221 + $0x60] sm:$0xff] %vm531, %v494
      %545 = vst.msk [vmem:[%s221 + $0x68] sm:$0xff] %vm531, %v495
      %546 = vst.msk [vmem:[%s221 + $0x70] sm:$0xff] %vm531, %v496
      %547 = vst.msk [vmem:[%s221 + $0x78] sm:$0xff] %vm531, %v497
      %548 = vst.msk [vmem:[%s221 + $0x80] sm:$0xff] %vm531, %v498
      %549 = vst.msk [vmem:[%s221 + $0x88] sm:$0xff] %vm531, %v499
      %550 = vst.msk [vmem:[%s221 + $0x90] sm:$0xff] %vm531, %v500
      %551 = vst.msk [vmem:[%s221 + $0x98] sm:$0xff] %vm531, %v501
      %552 = vst.msk [vmem:[%s221 + $0xa0] sm:$0xff] %vm531, %v502
      %553 = vst.msk [vmem:[%s221 + $0xa8] sm:$0xff] %vm531, %v503
      %554 = vst.msk [vmem:[%s221 + $0xb0] sm:$0xff] %vm531, %v504
      %555 = vst.msk [vmem:[%s221 + $0xb8] sm:$0xff] %vm531, %v505
      %556 = vst.msk [vmem:[%s221 + $0xc0] sm:$0xff] %vm531, %v506
      %557 = vst.msk [vmem:[%s221 + $0xc8] sm:$0xff] %vm531, %v507
      %558 = vst.msk [vmem:[%s221 + $0xd0] sm:$0xff] %vm531, %v508
      %559 = vst.msk [vmem:[%s221 + $0xd8] sm:$0xff] %vm531, %v509
      %560 = vst.msk [vmem:[%s221 + $0xe0] sm:$0xff] %vm531, %v510
      %561 = vst.msk [vmem:[%s221 + $0xe8] sm:$0xff] %vm531, %v511
      %562 = vst.msk [vmem:[%s221 + $0xf0] sm:$0xff] %vm531, %v512
      %563 = vst.msk [vmem:[%s221 + $0xf8] sm:$0xff] %vm531, %v513
      %564 = vst.msk [vmem:[%s221 + $0x100] sm:$0xff] %vm531, %v514
      %565 = vst.msk [vmem:[%s221 + $0x108] sm:$0xff] %vm531, %v515
      %566 = vst.msk [vmem:[%s221 + $0x110] sm:$0xff] %vm531, %v516
      %567 = vst.msk [vmem:[%s221 + $0x118] sm:$0xff] %vm531, %v517
      %568 = vst.msk [vmem:[%s221 + $0x120] sm:$0xff] %vm531, %v518
      %569 = vst.msk [vmem:[%s221 + $0x128] sm:$0xff] %vm531, %v519
      %570 = vst.msk [vmem:[%s221 + $0x130] sm:$0xff] %vm531, %v520
      %571 = vst.msk [vmem:[%s221 + $0x138] sm:$0xff] %vm531, %v521
      %572 = vst.msk [vmem:[%s221 + $0x140] sm:$0xff] %vm531, %v522
      %573 = vst.msk [vmem:[%s221 + $0x148] sm:$0xff] %vm531, %v523
      %574 = vst.msk [vmem:[%s221 + $0x150] sm:$0xff] %vm531, %v524
      %575 = vst.msk [vmem:[%s221 + $0x158] sm:$0xff] %vm531, %v525
      %576 = vst.msk [vmem:[%s221 + $0x160] sm:$0xff] %vm531, %v526
      %577 = vst.msk [vmem:[%s221 + $0x168] sm:$0xff] %vm531, %v527
      %578 = vst.msk [vmem:[%s221 + $0x170] sm:$0xff] %vm531, %v528
      %579 = vst.msk [vmem:[%s221 + $0x178] sm:$0xff] %vm531, %v529
      %580 = vst.msk [vmem:[%s221 + $0x180] sm:$0xff] %vm531, %v530
      %s581 = smul.u32 49, %s15
      %p582 = scmp.lt.s32.totalorder %s581, 195
      %s583 = scalar_select %p582, %s581, 195
      %s584 = smul.addr %s583, 8
      %s585 = scalar_lea.vmem %s4, %s584
      // Predicated region
      $region37: #{resnet_forward.15} parent=35 // pred_check
        %p586 = pneg %p127
      $region38: #{resnet_forward.15} parent=35 // pred_check_branch
        %588 = sbr.rel (%p586) target = $region40
      $region39: #{resnet_forward.15} parent=35 // pred_region
        %s589 = smul.u32 49, %s15
      $region40: #{resnet_forward.15} parent=35 // pred_fallthru
        _
    $region36: #{resnet_forward.15} parent=5 // pred_fallthru
      _
    %p590 = scmp.le.s32.totalorder 2, %s10
    // Predicated region
    $region41: #{resnet_forward.15} parent=5 // pred_check
      %p591 = pneg %p590
    $region42: #{resnet_forward.15} parent=5 // pred_check_branch
      %593 = sbr.rel (%p591) target = $region44
    $region43: #{resnet_forward.15} parent=5 // pred_region
      %s594 = ssub.s32 %s10, 2
      // Predicated region
      $region45: #{resnet_forward.15} parent=43 // pred_check
        %p595 = pneg %p133
      $region46: #{resnet_forward.15} parent=43 // pred_check_branch
        %597 = sbr.rel (%p595) target = $region48
      $region47: #{resnet_forward.15} parent=43 // pred_region
        %s598 = smul.u32 49, %s16
        %p599 = scmp.lt.s32.totalorder %s598, 195
        %s600 = scalar_select %p599, %s598, 195
        %s601 = smul.addr %s600, 8
        %s602 = scalar_lea.vmem %s4, %s601
      $region48: #{resnet_forward.15} parent=43 // pred_fallthru
        _
    $region44: #{resnet_forward.15} parent=5 // pred_fallthru
      _
  $region6: #{resnet_forward.15} parent=0 // loop_footer
    %s14 = sadd.s32 1, %s10
  $region7: #{resnet_forward.15} parent=0 // loop_footer_branch
    %9 = sbr.rel target = $region3
  $region8: #{resnet_forward.15} parent=0 // loop_exit
    _

// kernel: resnet_forward.20
$region0: #{resnet_forward.20}
  #allocation0 [shape = 'u32[]', space=smem, size = 0x4, offset = 0x4, fixed_abs, tag = 'smem constant byte address 0x4 - core index']
  #allocation1 [shape = 'u32[144,128]{1,0:T(1,128)}', space=vmem, size = 0x12000, scoped, tag = 'internal scratch']
  %s0 = inlined_call_operand.vmem [shape: bf16[1568,288], index: 0, kind: input, shape index: {}]
  %s1 = inlined_call_operand.vmem [shape: bf16[288,8], index: 1, kind: input, shape index: {}]
  %s2 = inlined_call_operand.vmem [shape: f32[1,8], index: 2, kind: input, shape index: {}]
  %s3 = inlined_call_operand.vmem [shape: f32[1568,8], index: 3, kind: output, shape index: {}]
  %s4 = sld [smem:[#allocation0]]
  $region45: #{resnet_forward.20} parent=0
    _
  %s6 = ssub.s32 1, %s4
  %s7 = scalar_select 0, %s6, %s4
  loop: start=0, step=1, limit=6
  $region2: #{resnet_forward.20} parent=0 // loop_pre_header
    _
  $region3: #{resnet_forward.20} parent=0 // loop_header
    %s9 = sphi 0, %s13
    %p10 = scmp.ge.s32.totalorder %s9, 6
    %s19 = sphi 0, %s21
    %s22 = sphi 0, %s19
    %s23 = sphi 0, %s22
    %s39 = sphi 0, %s23
    %s43 = sphi 0, %s43
    %s45 = sphi 0, %s43
    %s46 = sphi 0, %s45
    %s60 = sphi 0, %s46
    %s64 = sphi 0, %s64
    %s66 = sphi 0, %s64
    %s67 = sphi 0, %s66
    %s81 = sphi 0, %s67
    %s87 = sphi 0, %s89
    %s90 = sphi 0, %s87
    %s91 = sphi 0, %s90
    %s107 = sphi 0, %s91
  $region4: #{resnet_forward.20} parent=0 // loop_header_branch
    %12 = sbr.rel (%p10) target = $region8
  $region5: #{resnet_forward.20} parent=0 // loop_body
    %s14 = ssub.s32 %s9, 1
    %s15 = ssub.s32 %s9, 2
    %s16 = sadd.s32 %s9, 1
    %s17 = ssub.s32 %s9, %s16
    %p18 = scmp.eq.s32.totalorder %s17, 0
    %s20 = sadd.s32 %s19, 1
    %s21 = scalar_select %p18, %s19, %s20
    %p24 = pneg %p18
    %p25 = scmp.eq.s32.totalorder %s9, 3
    %p26 = por %p24, %p25
    %p27 = scmp.ne.s32.totalorder %s19, %s22
    %p28 = scmp.eq.s32.totalorder %s9, 0
    %p29 = por %p27, %p28
    %p30 = scmp.ne.s32.totalorder %s19, %s22
    %p31 = scmp.eq.s32.totalorder %s14, 3
    %p32 = por %p30, %p31
    %p33 = scmp.ne.s32.totalorder %s22, %s23
    %p34 = scmp.eq.s32.totalorder %s14, 0
    %p35 = por %p33, %p34
    %p36 = scmp.ne.s32.totalorder %s22, %s23
    %p37 = scmp.eq.s32.totalorder %s15, 3
    %p38 = por %p36, %p37
    %p40 = scmp.ne.s32.totalorder %s23, %s39
    %p41 = scmp.eq.s32.totalorder %s15, 0
    %p42 = por %p40, %p41
    %s44 = sadd.s32 %s43, 1
    %p47 = scmp.eq.s32.totalorder %s9, 3
    %p48 = scmp.ne.s32.totalorder %s43, %s45
    %p49 = scmp.eq.s32.totalorder %s9, 0
    %p50 = por %p48, %p49
    %p51 = scmp.ne.s32.totalorder %s43, %s45
    %p52 = scmp.eq.s32.totalorder %s14, 3
    %p53 = por %p51, %p52
    %p54 = scmp.ne.s32.totalorder %s45, %s46
    %p55 = scmp.eq.s32.totalorder %s14, 0
    %p56 = por %p54, %p55
    %p57 = scmp.ne.s32.totalorder %s45, %s46
    %p58 = scmp.eq.s32.totalorder %s15, 3
    %p59 = por %p57, %p58
    %p61 = scmp.ne.s32.totalorder %s46, %s60
    %p62 = scmp.eq.s32.totalorder %s15, 0
    %p63 = por %p61, %p62
    %s65 = sadd.s32 %s64, 1
    %p68 = scmp.eq.s32.totalorder %s9, 3
    %p69 = scmp.ne.s32.totalorder %s64, %s66
    %p70 = scmp.eq.s32.totalorder %s9, 0
    %p71 = por %p69, %p70
    %p72 = scmp.ne.s32.totalorder %s64, %s66
    %p73 = scmp.eq.s32.totalorder %s14, 3
    %p74 = por %p72, %p73
    %p75 = scmp.ne.s32.totalorder %s66, %s67
    %p76 = scmp.eq.s32.totalorder %s14, 0
    %p77 = por %p75, %p76
    %p78 = scmp.ne.s32.totalorder %s66, %s67
    %p79 = scmp.eq.s32.totalorder %s15, 3
    %p80 = por %p78, %p79
    %p82 = scmp.ne.s32.totalorder %s67, %s81
    %p83 = scmp.eq.s32.totalorder %s15, 0
    %p84 = por %p82, %p83
    %s85 = ssub.s32 %s9, %s16
    %p86 = scmp.eq.s32.totalorder %s85, 0
    %s88 = sadd.s32 %s87, 1
    %s89 = scalar_select %p86, %s87, %s88
    %p92 = pneg %p86
    %p93 = scmp.eq.s32.totalorder %s9, 3
    %p94 = por %p92, %p93
    %p95 = scmp.ne.s32.totalorder %s87, %s90
    %p96 = scmp.eq.s32.totalorder %s9, 0
    %p97 = por %p95, %p96
    %p98 = scmp.ne.s32.totalorder %s87, %s90
    %p99 = scmp.eq.s32.totalorder %s14, 3
    %p100 = por %p98, %p99
    %p101 = scmp.ne.s32.totalorder %s90, %s91
    %p102 = scmp.eq.s32.totalorder %s14, 0
    %p103 = por %p101, %p102
    %p104 = scmp.ne.s32.totalorder %s90, %s91
    %p105 = scmp.eq.s32.totalorder %s15, 3
    %p106 = por %p104, %p105
    %p108 = scmp.ne.s32.totalorder %s91, %s107
    %p109 = scmp.eq.s32.totalorder %s15, 0
    %p110 = por %p108, %p109
    %p111 = scmp.le.s32.totalorder 1, %s9
    %p112 = scmp.lt.s32.totalorder %s9, 5
    %p113 = pnand %p111, %p112
    %p114 = pneg %p113
    // Predicated region
    $region9: #{resnet_forward.20} parent=5 // pred_check
      _
    $region10: #{resnet_forward.20} parent=5 // pred_check_branch
      %116 = sbr.rel (%p113) target = $region12
    $region11: #{resnet_forward.20} parent=5 // pred_region
      %s117 = ssub.s32 %s9, 1
      // Predicated region
      $region13: #{resnet_forward.20} parent=11 // pred_check
        %p118 = pneg %p56
      $region14: #{resnet_forward.20} parent=11 // pred_check_branch
        %120 = sbr.rel (%p118) target = $region16
      $region15: #{resnet_forward.20} parent=11 // pred_region
        _
      $region16: #{resnet_forward.20} parent=11 // pred_fallthru
        _
      // Predicated region
      $region17: #{resnet_forward.20} parent=11 // pred_check
        %p121 = pneg %p77
      $region18: #{resnet_forward.20} parent=11 // pred_check_branch
        %123 = sbr.rel (%p121) target = $region20
      $region19: #{resnet_forward.20} parent=11 // pred_region
        _
      $region20: #{resnet_forward.20} parent=11 // pred_fallthru
        _
    $region12: #{resnet_forward.20} parent=5 // pred_fallthru
      _
    %p124 = scmp.lt.s32.totalorder %s9, 4
    // Predicated region
    $region21: #{resnet_forward.20} parent=5 // pred_check
      %p125 = pneg %p124
    $region22: #{resnet_forward.20} parent=5 // pred_check_branch
      %127 = sbr.rel (%p125) target = $region24
    $region23: #{resnet_forward.20} parent=5 // pred_region
      // Predicated region
      $region25: #{resnet_forward.20} parent=23 // pred_check
        %p128 = pneg %p29
      $region26: #{resnet_forward.20} parent=23 // pred_check_branch
        %130 = sbr.rel (%p128) target = $region28
      $region27: #{resnet_forward.20} parent=23 // pred_region
        %s131 = smul.u32 49, %s9
        %p132 = scmp.lt.s32.totalorder %s131, 195
        %s133 = scalar_select %p132, %s131, 195
        %s134 = smul.addr %s133, 3
        %s135 = smul.addr %s134, 4
        %s136 = scalar_lea.vmem %s0, %s135
        %s137 = smul.u32 49, %s9
      $region28: #{resnet_forward.20} parent=23 // pred_fallthru
        _
    $region24: #{resnet_forward.20} parent=5 // pred_fallthru
      _
    %p138 = scmp.le.s32.totalorder 1, %s9
    %p139 = scmp.lt.s32.totalorder %s9, 5
    %p140 = pnand %p138, %p139
    %p141 = pneg %p140
    // Predicated region
    $region29: #{resnet_forward.20} parent=5 // pred_check
      _
    $region30: #{resnet_forward.20} parent=5 // pred_check_branch
      %143 = sbr.rel (%p140) target = $region32
    $region31: #{resnet_forward.20} parent=5 // pred_region
      %s144 = ssub.s32 %s9, 1
      %s145 = smul.u32 49, %s14
      %p146 = scmp.lt.s32.totalorder %s145, 195
      %s147 = scalar_select %p146, %s145, 195
      %s148 = smul.addr %s147, 3
      %s149 = smul.addr %s148, 4
      %s150 = scalar_lea.vmem %s0, %s149
      %p151 = pneg %p35
      %p152 = pneg %p32
      %p153 = pneg %p56
      %p154 = pneg %p53
      %p155 = pneg %p77
      %p156 = pneg %p74
      %p157 = pneg %p103
      %p158 = pneg %p100
      %s159 = smul.u32 49, %s14
      %p160 = scmp.lt.s32.totalorder %s159, 195
      %s161 = scalar_select %p160, %s159, 195
      %s162 = smul.addr %s161, 8
      %s163 = scalar_lea.vmem %s3, %s162
      %s164 = smul.u32 49, %s14
      %p165 = scmp.lt.s32.totalorder %s164, 195
      %s166 = scalar_select %p165, %s164, 195
      %s167 = smul.addr %s166, 3
      %s168 = smul.addr %s167, 4
      %s169 = scalar_lea.vmem %s0, %s168
      %s170 = smul.u32 49, %s14
      %s171 = smul.u32 49, %s14
      %p172 = scmp.lt.s32.totalorder %s171, 195
      %s173 = scalar_select %p172, %s171, 195
      %s174 = smul.addr %s173, 8
      %s175 = scalar_lea.vmem %s3, %s174
      %s176 = smul.u32 49, %s14
      %v178 = vld [vmem:[%s169] sm:$0xff]
      %v179 = vld [vmem:[%s169 + $0x8] sm:$0xf]
      %v180 = vld [vmem:[%s169 + $0xc] sm:$0xff]
      %v181 = vld [vmem:[%s169 + $0x14] sm:$0xf]
      %v182 = vld [vmem:[%s169 + $0x18] sm:$0xff]
      %v183 = vld [vmem:[%s169 + $0x20] sm:$0xf]
      %v184 = vld [vmem:[%s169 + $0x24] sm:$0xff]
      %v185 = vld [vmem:[%s169 + $0x2c] sm:$0xf]
      %v186 = vld [vmem:[%s169 + $0x30] sm:$0xff]
      %v187 = vld [vmem:[%s169 + $0x38] sm:$0xf]
      %v188 = vld [vmem:[%s169 + $0x3c] sm:$0xff]
      %v189 = vld [vmem:[%s169 + $0x44] sm:$0xf]
      %v190 = vld [vmem:[%s169 + $0x48] sm:$0xff]
      %v191 = vld [vmem:[%s169 + $0x50] sm:$0xf]
      %v192 = vld [vmem:[%s169 + $0x54] sm:$0xff]
      %v193 = vld [vmem:[%s169 + $0x5c] sm:$0xf]
      %v194 = vld [vmem:[%s169 + $0x60] sm:$0xff]
      %v195 = vld [vmem:[%s169 + $0x68] sm:$0xf]
      %v196 = vld [vmem:[%s169 + $0x6c] sm:$0xff]
      %v197 = vld [vmem:[%s169 + $0x74] sm:$0xf]
      %v198 = vld [vmem:[%s169 + $0x78] sm:$0xff]
      %v199 = vld [vmem:[%s169 + $0x80] sm:$0xf]
      %v200 = vld [vmem:[%s169 + $0x84] sm:$0xff]
      %v201 = vld [vmem:[%s169 + $0x8c] sm:$0xf]
      %v202 = vld [vmem:[%s169 + $0x90] sm:$0xff]
      %v203 = vld [vmem:[%s169 + $0x98] sm:$0xf]
      %v204 = vld [vmem:[%s169 + $0x9c] sm:$0xff]
      %v205 = vld [vmem:[%s169 + $0xa4] sm:$0xf]
      %v206 = vld [vmem:[%s169 + $0xa8] sm:$0xff]
      %v207 = vld [vmem:[%s169 + $0xb0] sm:$0xf]
      %v208 = vld [vmem:[%s169 + $0xb4] sm:$0xff]
      %v209 = vld [vmem:[%s169 + $0xbc] sm:$0xf]
      %v210 = vld [vmem:[%s169 + $0xc0] sm:$0xff]
      %v211 = vld [vmem:[%s169 + $0xc8] sm:$0xf]
      %v212 = vld [vmem:[%s169 + $0xcc] sm:$0xff]
      %v213 = vld [vmem:[%s169 + $0xd4] sm:$0xf]
      %v214 = vld [vmem:[%s169 + $0xd8] sm:$0xff]
      %v215 = vld [vmem:[%s169 + $0xe0] sm:$0xf]
      %v216 = vld [vmem:[%s169 + $0xe4] sm:$0xff]
      %v217 = vld [vmem:[%s169 + $0xec] sm:$0xf]
      %v218 = vld [vmem:[%s169 + $0xf0] sm:$0xff]
      %v219 = vld [vmem:[%s169 + $0xf8] sm:$0xf]
      %v220 = vld [vmem:[%s169 + $0xfc] sm:$0xff]
      %v221 = vld [vmem:[%s169 + $0x104] sm:$0xf]
      %v222 = vld [vmem:[%s169 + $0x108] sm:$0xff]
      %v223 = vld [vmem:[%s169 + $0x110] sm:$0xf]
      %v224 = vld [vmem:[%s169 + $0x114] sm:$0xff]
      %v225 = vld [vmem:[%s169 + $0x11c] sm:$0xf]
      %v226 = vld [vmem:[%s169 + $0x120] sm:$0xff]
      %v227 = vld [vmem:[%s169 + $0x128] sm:$0xf]
      %v228 = vld [vmem:[%s169 + $0x12c] sm:$0xff]
      %v229 = vld [vmem:[%s169 + $0x134] sm:$0xf]
      %v230 = vld [vmem:[%s169 + $0x138] sm:$0xff]
      %v231 = vld [vmem:[%s169 + $0x140] sm:$0xf]
      %v232 = vld [vmem:[%s169 + $0x144] sm:$0xff]
      %v233 = vld [vmem:[%s169 + $0x14c] sm:$0xf]
      %v234 = vld [vmem:[%s169 + $0x150] sm:$0xff]
      %v235 = vld [vmem:[%s169 + $0x158] sm:$0xf]
      %v236 = vld [vmem:[%s169 + $0x15c] sm:$0xff]
      %v237 = vld [vmem:[%s169 + $0x164] sm:$0xf]
      %v238 = vld [vmem:[%s169 + $0x168] sm:$0xff]
      %v239 = vld [vmem:[%s169 + $0x170] sm:$0xf]
      %v240 = vld [vmem:[%s169 + $0x174] sm:$0xff]
      %v241 = vld [vmem:[%s169 + $0x17c] sm:$0xf]
      %v242 = vld [vmem:[%s169 + $0x180] sm:$0xff]
      %v243 = vld [vmem:[%s169 + $0x188] sm:$0xf]
      %v244 = vld [vmem:[%s169 + $0x18c] sm:$0xff]
      %v245 = vld [vmem:[%s169 + $0x194] sm:$0xf]
      %v246 = vld [vmem:[%s169 + $0x198] sm:$0xff]
      %v247 = vld [vmem:[%s169 + $0x1a0] sm:$0xf]
      %v248 = vld [vmem:[%s169 + $0x1a4] sm:$0xff]
      %v249 = vld [vmem:[%s169 + $0x1ac] sm:$0xf]
      %v250 = vld [vmem:[%s169 + $0x1b0] sm:$0xff]
      %v251 = vld [vmem:[%s169 + $0x1b8] sm:$0xf]
      %v252 = vld [vmem:[%s169 + $0x1bc] sm:$0xff]
      %v253 = vld [vmem:[%s169 + $0x1c4] sm:$0xf]
      %v254 = vld [vmem:[%s169 + $0x1c8] sm:$0xff]
      %v255 = vld [vmem:[%s169 + $0x1d0] sm:$0xf]
      %v256 = vld [vmem:[%s169 + $0x1d4] sm:$0xff]
      %v257 = vld [vmem:[%s169 + $0x1dc] sm:$0xf]
      %v258 = vld [vmem:[%s169 + $0x1e0] sm:$0xff]
      %v259 = vld [vmem:[%s169 + $0x1e8] sm:$0xf]
      %v260 = vld [vmem:[%s169 + $0x1ec] sm:$0xff]
      %v261 = vld [vmem:[%s169 + $0x1f4] sm:$0xf]
      %v262 = vld [vmem:[%s169 + $0x1f8] sm:$0xff]
      %v263 = vld [vmem:[%s169 + $0x200] sm:$0xf]
      %v264 = vld [vmem:[%s169 + $0x204] sm:$0xff]
      %v265 = vld [vmem:[%s169 + $0x20c] sm:$0xf]
      %v266 = vld [vmem:[%s169 + $0x210] sm:$0xff]
      %v267 = vld [vmem:[%s169 + $0x218] sm:$0xf]
      %v268 = vld [vmem:[%s169 + $0x21c] sm:$0xff]
      %v269 = vld [vmem:[%s169 + $0x224] sm:$0xf]
      %v270 = vld [vmem:[%s169 + $0x228] sm:$0xff]
      %v271 = vld [vmem:[%s169 + $0x230] sm:$0xf]
      %v272 = vld [vmem:[%s169 + $0x234] sm:$0xff]
      %v273 = vld [vmem:[%s169 + $0x23c] sm:$0xf]
      %v274 = vld [vmem:[%s169 + $0x240] sm:$0xff]
      %v275 = vld [vmem:[%s169 + $0x248] sm:$0xf]
      %v276 = vld [vmem:[%s1] sm:$0xf]
      %v277 = vld [vmem:[%s1 + $0x4] sm:$0xf]
      %v278 = vld [vmem:[%s1 + $0x8] sm:$0xf]
      %v279 = vld [vmem:[%s1 + $0xc] sm:$0xf]
      %v280 = vld [vmem:[%s1 + $0x10] sm:$0xf]
      %v281 = vld [vmem:[%s1 + $0x14] sm:$0xf]
      %v282 = vld [vmem:[%s1 + $0x18] sm:$0xf]
      %v283 = vld [vmem:[%s1 + $0x1c] sm:$0xf]
      %v284 = vld [vmem:[%s1 + $0x20] sm:$0xf]
      %v285 = vld [vmem:[%s1 + $0x24] sm:$0xf]
      %v286 = vld [vmem:[%s1 + $0x28] sm:$0xf]
      %v287 = vld [vmem:[%s1 + $0x2c] sm:$0xf]
      %v288 = vld [vmem:[%s1 + $0x30] sm:$0xf]
      %v289 = vld [vmem:[%s1 + $0x34] sm:$0xf]
      %v290 = vld [vmem:[%s1 + $0x38] sm:$0xf]
      %v291 = vld [vmem:[%s1 + $0x3c] sm:$0xf]
      %v292 = vld [vmem:[%s1 + $0x40] sm:$0xf]
      %v293 = vld [vmem:[%s1 + $0x44] sm:$0xf]
      %v294 = vld [vmem:[%s1 + $0x48] sm:$0xf]
      %v295 = vld [vmem:[%s1 + $0x4c] sm:$0xf]
      %v296 = vld [vmem:[%s1 + $0x50] sm:$0xf]
      %v297 = vld [vmem:[%s1 + $0x54] sm:$0xf]
      %v298 = vld [vmem:[%s1 + $0x58] sm:$0xf]
      %v299 = vld [vmem:[%s1 + $0x5c] sm:$0xf]
      %v300 = vld [vmem:[%s1 + $0x60] sm:$0xf]
      %v301 = vld [vmem:[%s1 + $0x64] sm:$0xf]
      %v302 = vld [vmem:[%s1 + $0x68] sm:$0xf]
      %v303 = vld [vmem:[%s1 + $0x6c] sm:$0xf]
      %v304 = vld [vmem:[%s1 + $0x70] sm:$0xf]
      %v305 = vld [vmem:[%s1 + $0x74] sm:$0xf]
      %v306 = vld [vmem:[%s1 + $0x78] sm:$0xf]
      %v307 = vld [vmem:[%s1 + $0x7c] sm:$0xf]
      %v308 = vld [vmem:[%s1 + $0x80] sm:$0xf]
      %v309 = vld [vmem:[%s1 + $0x84] sm:$0xf]
      %v310 = vld [vmem:[%s1 + $0x88] sm:$0xf]
      %v311 = vld [vmem:[%s1 + $0x8c] sm:$0xf]
      %v312 = vld [vmem:[%s2] sm:$0x1]
      %v314 = vlaneseq
      %v315 = vshrl.u32 %v314, 7
      %v316 = vsub.s32 0, %v315
      %v317 = vrot.slane %v312, %v316
      %v417 = vunpack.c.l.b16 %v178
      %v418 = vunpack.c.h.b16 %v178
      %v419 = vunpack.c.l.b16 %v179
      %v420 = vunpack.c.l.b16 %v180
      %v421 = vunpack.c.h.b16 %v180
      %v422 = vunpack.c.l.b16 %v181
      %v423 = vunpack.c.l.b16 %v182
      %v424 = vunpack.c.h.b16 %v182
      %v425 = vunpack.c.l.b16 %v183
      %v426 = vunpack.c.l.b16 %v184
      %v427 = vunpack.c.h.b16 %v184
      %v428 = vunpack.c.l.b16 %v185
      %v429 = vunpack.c.l.b16 %v186
      %v430 = vunpack.c.h.b16 %v186
      %v431 = vunpack.c.l.b16 %v187
      %v432 = vunpack.c.l.b16 %v188
      %v433 = vunpack.c.h.b16 %v188
      %v434 = vunpack.c.l.b16 %v189
      %v435 = vunpack.c.l.b16 %v190
      %v436 = vunpack.c.h.b16 %v190
      %v437 = vunpack.c.l.b16 %v191
      %v438 = vunpack.c.l.b16 %v192
      %v439 = vunpack.c.h.b16 %v192
      %v440 = vunpack.c.l.b16 %v193
      %v441 = vunpack.c.l.b16 %v194
      %v442 = vunpack.c.h.b16 %v194
      %v443 = vunpack.c.l.b16 %v195
      %v444 = vunpack.c.l.b16 %v196
      %v445 = vunpack.c.h.b16 %v196
      %v446 = vunpack.c.l.b16 %v197
      %v447 = vunpack.c.l.b16 %v198
      %v448 = vunpack.c.h.b16 %v198
      %v449 = vunpack.c.l.b16 %v199
      %v450 = vunpack.c.l.b16 %v200
      %v451 = vunpack.c.h.b16 %v200
      %v452 = vunpack.c.l.b16 %v201
      %v453 = vunpack.c.l.b16 %v202
      %v454 = vunpack.c.h.b16 %v202
      %v455 = vunpack.c.l.b16 %v203
      %v456 = vunpack.c.l.b16 %v204
      %v457 = vunpack.c.h.b16 %v204
      %v458 = vunpack.c.l.b16 %v205
      %v459 = vunpack.c.l.b16 %v206
      %v460 = vunpack.c.h.b16 %v206
      %v461 = vunpack.c.l.b16 %v207
      %v462 = vunpack.c.l.b16 %v208
      %v463 = vunpack.c.h.b16 %v208
      %v464 = vunpack.c.l.b16 %v209
      %v465 = vunpack.c.l.b16 %v210
      %v466 = vunpack.c.h.b16 %v210
      %v467 = vunpack.c.l.b16 %v211
      %v468 = vunpack.c.l.b16 %v212
      %v469 = vunpack.c.h.b16 %v212
      %v470 = vunpack.c.l.b16 %v213
      %v471 = vunpack.c.l.b16 %v214
      %v472 = vunpack.c.h.b16 %v214
      %v473 = vunpack.c.l.b16 %v215
      %v474 = vunpack.c.l.b16 %v216
      %v475 = vunpack.c.h.b16 %v216
      %v476 = vunpack.c.l.b16 %v217
      %v477 = vunpack.c.l.b16 %v218
      %v478 = vunpack.c.h.b16 %v218
      %v479 = vunpack.c.l.b16 %v219
      %v480 = vunpack.c.l.b16 %v220
      %v481 = vunpack.c.h.b16 %v220
      %v482 = vunpack.c.l.b16 %v221
      %v483 = vunpack.c.l.b16 %v222
      %v484 = vunpack.c.h.b16 %v222
      %v485 = vunpack.c.l.b16 %v223
      %v486 = vunpack.c.l.b16 %v224
      %v487 = vunpack.c.h.b16 %v224
      %v488 = vunpack.c.l.b16 %v225
      %v489 = vunpack.c.l.b16 %v226
      %v490 = vunpack.c.h.b16 %v226
      %v491 = vunpack.c.l.b16 %v227
      %v492 = vunpack.c.l.b16 %v228
      %v493 = vunpack.c.h.b16 %v228
      %v494 = vunpack.c.l.b16 %v229
      %v495 = vunpack.c.l.b16 %v230
      %v496 = vunpack.c.h.b16 %v230
      %v497 = vunpack.c.l.b16 %v231
      %v498 = vunpack.c.l.b16 %v232
      %v499 = vunpack.c.h.b16 %v232
      %v500 = vunpack.c.l.b16 %v233
      %v501 = vunpack.c.l.b16 %v234
      %v502 = vunpack.c.h.b16 %v234
      %v503 = vunpack.c.l.b16 %v235
      %v504 = vunpack.c.l.b16 %v236
      %v505 = vunpack.c.h.b16 %v236
      %v506 = vunpack.c.l.b16 %v237
      %v507 = vunpack.c.l.b16 %v238
      %v508 = vunpack.c.h.b16 %v238
      %v509 = vunpack.c.l.b16 %v239
      %v510 = vunpack.c.l.b16 %v240
      %v511 = vunpack.c.h.b16 %v240
      %v512 = vunpack.c.l.b16 %v241
      %v513 = vunpack.c.l.b16 %v242
      %v514 = vunpack.c.h.b16 %v242
      %v515 = vunpack.c.l.b16 %v243
      %v516 = vunpack.c.l.b16 %v244
      %v517 = vunpack.c.h.b16 %v244
      %v518 = vunpack.c.l.b16 %v245
      %v519 = vunpack.c.l.b16 %v246
      %v520 = vunpack.c.h.b16 %v246
      %v521 = vunpack.c.l.b16 %v247
      %v522 = vunpack.c.l.b16 %v248
      %v523 = vunpack.c.h.b16 %v248
      %v524 = vunpack.c.l.b16 %v249
      %v525 = vunpack.c.l.b16 %v250
      %v526 = vunpack.c.h.b16 %v250
      %v527 = vunpack.c.l.b16 %v251
      %v528 = vunpack.c.l.b16 %v252
      %v529 = vunpack.c.h.b16 %v252
      %v530 = vunpack.c.l.b16 %v253
      %v531 = vunpack.c.l.b16 %v254
      %v532 = vunpack.c.h.b16 %v254
      %v533 = vunpack.c.l.b16 %v255
      %v534 = vunpack.c.l.b16 %v256
      %v535 = vunpack.c.h.b16 %v256
      %v536 = vunpack.c.l.b16 %v257
      %v537 = vunpack.c.l.b16 %v258
      %v538 = vunpack.c.h.b16 %v258
      %v539 = vunpack.c.l.b16 %v259
      %v540 = vunpack.c.l.b16 %v260
      %v541 = vunpack.c.h.b16 %v260
      %v542 = vunpack.c.l.b16 %v261
      %v543 = vunpack.c.l.b16 %v262
      %v544 = vunpack.c.h.b16 %v262
      %v545 = vunpack.c.l.b16 %v263
      %v546 = vunpack.c.l.b16 %v264
      %v547 = vunpack.c.h.b16 %v264
      %v548 = vunpack.c.l.b16 %v265
      %v549 = vunpack.c.l.b16 %v266
      %v550 = vunpack.c.h.b16 %v266
      %v551 = vunpack.c.l.b16 %v267
      %v552 = vunpack.c.l.b16 %v268
      %v553 = vunpack.c.h.b16 %v268
      %v554 = vunpack.c.l.b16 %v269
      %v555 = vunpack.c.l.b16 %v270
      %v556 = vunpack.c.h.b16 %v270
      %v557 = vunpack.c.l.b16 %v271
      %v558 = vunpack.c.l.b16 %v272
      %v559 = vunpack.c.h.b16 %v272
      %v560 = vunpack.c.l.b16 %v273
      %v561 = vunpack.c.l.b16 %v274
      %v562 = vunpack.c.h.b16 %v274
      %v563 = vunpack.c.l.b16 %v275
      %v564 = vpack.c.b16 %v420, %v417
      %v565 = vpack.c.b16 %v421, %v418
      %v566 = vpack.c.b16 %v422, %v419
      %v567 = vpack.c.b16 %v426, %v423
      %v568 = vpack.c.b16 %v427, %v424
      %v569 = vpack.c.b16 %v428, %v425
      %v570 = vpack.c.b16 %v432, %v429
      %v571 = vpack.c.b16 %v433, %v430
      %v572 = vpack.c.b16 %v434, %v431
      %v573 = vpack.c.b16 %v438, %v435
      %v574 = vpack.c.b16 %v439, %v436
      %v575 = vpack.c.b16 %v440, %v437
      %v576 = vpack.c.b16 %v444, %v441
      %v577 = vpack.c.b16 %v445, %v442
      %v578 = vpack.c.b16 %v446, %v443
      %v579 = vpack.c.b16 %v450, %v447
      %v580 = vpack.c.b16 %v451, %v448
      %v581 = vpack.c.b16 %v452, %v449
      %v582 = vpack.c.b16 %v456, %v453
      %v583 = vpack.c.b16 %v457, %v454
      %v584 = vpack.c.b16 %v458, %v455
      %v585 = vpack.c.b16 %v462, %v459
      %v586 = vpack.c.b16 %v463, %v460
      %v587 = vpack.c.b16 %v464, %v461
      %v588 = vpack.c.b16 %v468, %v465
      %v589 = vpack.c.b16 %v469, %v466
      %v590 = vpack.c.b16 %v470, %v467
      %v591 = vpack.c.b16 %v474, %v471
      %v592 = vpack.c.b16 %v475, %v472
      %v593 = vpack.c.b16 %v476, %v473
      %v594 = vpack.c.b16 %v480, %v477
      %v595 = vpack.c.b16 %v481, %v478
      %v596 = vpack.c.b16 %v482, %v479
      %v597 = vpack.c.b16 %v486, %v483
      %v598 = vpack.c.b16 %v487, %v484
      %v599 = vpack.c.b16 %v488, %v485
      %v600 = vpack.c.b16 %v492, %v489
      %v601 = vpack.c.b16 %v493, %v490
      %v602 = vpack.c.b16 %v494, %v491
      %v603 = vpack.c.b16 %v498, %v495
      %v604 = vpack.c.b16 %v499, %v496
      %v605 = vpack.c.b16 %v500, %v497
      %v606 = vpack.c.b16 %v504, %v501
      %v607 = vpack.c.b16 %v505, %v502
      %v608 = vpack.c.b16 %v506, %v503
      %v609 = vpack.c.b16 %v510, %v507
      %v610 = vpack.c.b16 %v511, %v508
      %v611 = vpack.c.b16 %v512, %v509
      %v612 = vpack.c.b16 %v516, %v513
      %v613 = vpack.c.b16 %v517, %v514
      %v614 = vpack.c.b16 %v518, %v515
      %v615 = vpack.c.b16 %v522, %v519
      %v616 = vpack.c.b16 %v523, %v520
      %v617 = vpack.c.b16 %v524, %v521
      %v618 = vpack.c.b16 %v528, %v525
      %v619 = vpack.c.b16 %v529, %v526
      %v620 = vpack.c.b16 %v530, %v527
      %v621 = vpack.c.b16 %v534, %v531
      %v622 = vpack.c.b16 %v535, %v532
      %v623 = vpack.c.b16 %v536, %v533
      %v624 = vpack.c.b16 %v540, %v537
      %v625 = vpack.c.b16 %v541, %v538
      %v626 = vpack.c.b16 %v542, %v539
      %v627 = vpack.c.b16 %v546, %v543
      %v628 = vpack.c.b16 %v547, %v544
      %v629 = vpack.c.b16 %v548, %v545
      %v630 = vpack.c.b16 %v552, %v549
      %v631 = vpack.c.b16 %v553, %v550
      %v632 = vpack.c.b16 %v554, %v551
      %v633 = vpack.c.b16 %v558, %v555
      %v634 = vpack.c.b16 %v559, %v556
      %v635 = vpack.c.b16 %v560, %v557
      %v636 = vpack.c.b16 %v561, %v561
      %v637 = vpack.c.b16 %v562, %v562
      %v638 = vpack.c.b16 %v563, %v563
      %v725 = vunpack.c.l.b16 %v276
      %v726 = vunpack.c.l.b16 %v277
      %v727 = vunpack.c.l.b16 %v278
      %v728 = vunpack.c.l.b16 %v279
      %v729 = vunpack.c.l.b16 %v280
      %v730 = vunpack.c.l.b16 %v281
      %v731 = vunpack.c.l.b16 %v282
      %v732 = vunpack.c.l.b16 %v283
      %v733 = vunpack.c.l.b16 %v284
      %v734 = vunpack.c.l.b16 %v285
      %v735 = vunpack.c.l.b16 %v286
      %v736 = vunpack.c.l.b16 %v287
      %v737 = vunpack.c.l.b16 %v288
      %v738 = vunpack.c.l.b16 %v289
      %v739 = vunpack.c.l.b16 %v290
      %v740 = vunpack.c.l.b16 %v291
      %v741 = vunpack.c.l.b16 %v292
      %v742 = vunpack.c.l.b16 %v293
      %v743 = vunpack.c.l.b16 %v294
      %v744 = vunpack.c.l.b16 %v295
      %v745 = vunpack.c.l.b16 %v296
      %v746 = vunpack.c.l.b16 %v297
      %v747 = vunpack.c.l.b16 %v298
      %v748 = vunpack.c.l.b16 %v299
      %v749 = vunpack.c.l.b16 %v300
      %v750 = vunpack.c.l.b16 %v301
      %v751 = vunpack.c.l.b16 %v302
      %v752 = vunpack.c.l.b16 %v303
      %v753 = vunpack.c.l.b16 %v304
      %v754 = vunpack.c.l.b16 %v305
      %v755 = vunpack.c.l.b16 %v306
      %v756 = vunpack.c.l.b16 %v307
      %v757 = vunpack.c.l.b16 %v308
      %v758 = vunpack.c.l.b16 %v309
      %v759 = vunpack.c.l.b16 %v310
      %v760 = vunpack.c.l.b16 %v311
      %v761 = vpack.c.b16 %v726, %v725
      %v762 = vpack.c.b16 %v728, %v727
      %v763 = vpack.c.b16 %v730, %v729
      %v764 = vpack.c.b16 %v732, %v731
      %v765 = vpack.c.b16 %v734, %v733
      %v766 = vpack.c.b16 %v736, %v735
      %v767 = vpack.c.b16 %v738, %v737
      %v768 = vpack.c.b16 %v740, %v739
      %v769 = vpack.c.b16 %v742, %v741
      %v770 = vpack.c.b16 %v744, %v743
      %v771 = vpack.c.b16 %v746, %v745
      %v772 = vpack.c.b16 %v748, %v747
      %v773 = vpack.c.b16 %v750, %v749
      %v774 = vpack.c.b16 %v752, %v751
      %v775 = vpack.c.b16 %v754, %v753
      %v776 = vpack.c.b16 %v756, %v755
      %v777 = vpack.c.b16 %v758, %v757
      %v778 = vpack.c.b16 %v760, %v759
      %vm797 = vcmask 261120
      %v799 = vsel %vm797, %v566, 0
      %v802 = vsel %vm797, %v569, 0
      %v805 = vsel %vm797, %v572, 0
      %v808 = vsel %vm797, %v575, 0
      %v811 = vsel %vm797, %v578, 0
      %v814 = vsel %vm797, %v581, 0
      %v817 = vsel %vm797, %v584, 0
      %v820 = vsel %vm797, %v587, 0
      %v823 = vsel %vm797, %v590, 0
      %v826 = vsel %vm797, %v593, 0
      %v829 = vsel %vm797, %v596, 0
      %v832 = vsel %vm797, %v599, 0
      %v835 = vsel %vm797, %v602, 0
      %v838 = vsel %vm797, %v605, 0
      %v841 = vsel %vm797, %v608, 0
      %v844 = vsel %vm797, %v611, 0
      %v847 = vsel %vm797, %v614, 0
      %v850 = vsel %vm797, %v617, 0
      %v853 = vsel %vm797, %v620, 0
      %v856 = vsel %vm797, %v623, 0
      %v859 = vsel %vm797, %v626, 0
      %v862 = vsel %vm797, %v629, 0
      %v865 = vsel %vm797, %v632, 0
      %v868 = vsel %vm797, %v635, 0
      %v871 = vsel %vm797, %v638, 0
      %873 = vmatprep.subr.bf16.mxu0 0
      %874 = vmatpush1.bf16.msra.mxu0 %v761
      %875 = vmatprep.subr.bf16.mxu0 0
      %876 = vmatpush1.bf16.msra.mxu0 %v762
      %877 = vmatprep.subr.bf16.mxu0 0
      %878 = vmatpush1.bf16.msra.mxu0 %v763
      %879 = vmatprep.subr.bf16.mxu0 0
      %880 = vmatpush1.bf16.msra.mxu0 %v764
      %881 = vmatprep.subr.bf16.mxu0 0
      %882 = vmatpush1.bf16.msra.mxu0 %v765
      %883 = vmatprep.subr.bf16.mxu0 0
      %884 = vmatpush1.bf16.msra.mxu0 %v766
      %885 = vmatprep.subr.bf16.mxu0 0
      %886 = vmatpush1.bf16.msra.mxu0 %v767
      %887 = vmatprep.subr.bf16.mxu0 0
      %888 = vmatpush1.bf16.msra.mxu0 %v768
      %889 = vmatprep.subr.bf16.mxu0 0
      %890 = vmatpush1.bf16.msra.mxu0 %v769
      %891 = vmatprep.subr.bf16.mxu0 0
      %892 = vmatpush1.bf16.msra.mxu0 %v770
      %893 = vmatprep.subr.bf16.mxu0 0
      %894 = vmatpush1.bf16.msra.mxu0 %v771
      %895 = vmatprep.subr.bf16.mxu0 0
      %896 = vmatpush1.bf16.msra.mxu0 %v772
      %897 = vmatprep.subr.bf16.mxu0 0
      %898 = vmatpush1.bf16.msra.mxu0 %v773
      %899 = vmatprep.subr.bf16.mxu0 0
      %900 = vmatpush1.bf16.msra.mxu0 %v774
      %901 = vmatprep.subr.bf16.mxu0 0
      %902 = vmatpush1.bf16.msra.mxu0 %v775
      %903 = vmatprep.subr.bf16.mxu0 0
      %904 = vmatpush1.bf16.msra.mxu0 %v776
      %905 = vmatprep.mubr.bf16.mxu0 %v565
      %906 = vmatmul.mubr.bf16.gmra.mrb[0].mxu0 %v564
      %v907 = vpop.f32.mrb[0].mxu0
      %v908 = vadd.f32 %v317, %v907
      %v909 = vpop.f32.mrb[0].mxu0
      %v910 = vpop.f32.mrb[0].mxu0
      %v911 = vadd.f32 %v317, %v910
      %v912 = vpop.f32.mrb[0].mxu0
      %913 = vmatprep.mubr.bf16.mxu0 %v568
      %914 = vmatmul.mubr.bf16.gmra.mrb[0].mxu0 %v567
      %v915 = vpop.f32.mrb[0].mxu0
      %v916 = vadd.f32 %v317, %v915
      %v917 = vpop.f32.mrb[0].mxu0
      %v918 = vpop.f32.mrb[0].mxu0
      %v919 = vadd.f32 %v317, %v918
      %v920 = vpop.f32.mrb[0].mxu0
      %921 = vmatprep.mubr.bf16.mxu0 %v571
      %922 = vmatmul.mubr.bf16.gmra.mrb[0].mxu0 %v570
      %v923 = vpop.f32.mrb[0].mxu0
      %v924 = vadd.f32 %v317, %v923
      %v925 = vpop.f32.mrb[0].mxu0
      %v926 = vpop.f32.mrb[0].mxu0
      %v927 = vadd.f32 %v317, %v926
      %v928 = vpop.f32.mrb[0].mxu0
      %929 = vmatprep.mubr.bf16.mxu0 %v574
      %930 = vmatmul.mubr.bf16.gmra.mrb[0].mxu0 %v573
      %v931 = vpop.f32.mrb[0].mxu0
      %v932 = vadd.f32 %v317, %v931
      %v933 = vpop.f32.mrb[0].mxu0
      %v934 = vpop.f32.mrb[0].mxu0
      %v935 = vadd.f32 %v317, %v934
      %v936 = vpop.f32.mrb[0].mxu0
      %937 = vmatprep.mubr.bf16.mxu0 %v577
      %938 = vmatmul.mubr.bf16.gmra.mrb[0].mxu0 %v576
      %v939 = vpop.f32.mrb[0].mxu0
      %v940 = vadd.f32 %v317, %v939
      %v941 = vpop.f32.mrb[0].mxu0
      %v942 = vpop.f32.mrb[0].mxu0
      %v943 = vadd.f32 %v317, %v942
      %v944 = vpop.f32.mrb[0].mxu0
      %945 = vmatprep.mubr.bf16.mxu0 %v580
      %946 = vmatmul.mubr.bf16.gmra.mrb[0].mxu0 %v579
      %v947 = vpop.f32.mrb[0].mxu0
      %v948 = vadd.f32 %v317, %v947
      %v949 = vpop.f32.mrb[0].mxu0
      %v950 = vpop.f32.mrb[0].mxu0
      %v951 = vadd.f32 %v317, %v950
      %v952 = vpop.f32.mrb[0].mxu0
      %953 = vmatprep.mubr.bf16.mxu0 %v583
      %954 = vmatmul.mubr.bf16.gmra.mrb[0].mxu0 %v582
      %v955 = vpop.f32.mrb[0].mxu0
      %v956 = vadd.f32 %v317, %v955
      %v957 = vpop.f32.mrb[0].mxu0
      %v958 = vpop.f32.mrb[0].mxu0
      %v959 = vadd.f32 %v317, %v958
      %v960 = vpop.f32.mrb[0].mxu0
      %961 = vmatprep.mubr.bf16.mxu0 %v586
      %962 = vmatmul.mubr.bf16.gmra.mrb[0].mxu0 %v585
      %v963 = vpop.f32.mrb[0].mxu0
      %v964 = vadd.f32 %v317, %v963
      %v965 = vpop.f32.mrb[0].mxu0
      %v966 = vpop.f32.mrb[0].mxu0
      %v967 = vadd.f32 %v317, %v966
      %v968 = vpop.f32.mrb[0].mxu0
      %969 = vmatprep.mubr.bf16.mxu0 %v589
      %970 = vmatmul.mubr.bf16.gmra.mrb[0].mxu0 %v588
      %v971 = vpop.f32.mrb[0].mxu0
      %v972 = vadd.f32 %v317, %v971
      %v973 = vpop.f32.mrb[0].mxu0
      %v974 = vpop.f32.mrb[0].mxu0
      %v975 = vadd.f32 %v317, %v974
      %v976 = vpop.f32.mrb[0].mxu0
      %977 = vmatprep.mubr.bf16.mxu0 %v592
      %978 = vmatmul.mubr.bf16.gmra.mrb[0].mxu0 %v591
      %v979 = vpop.f32.mrb[0].mxu0
      %v980 = vadd.f32 %v317, %v979
      %v981 = vpop.f32.mrb[0].mxu0
      %v982 = vpop.f32.mrb[0].mxu0
      %v983 = vadd.f32 %v317, %v982
      %v984 = vpop.f32.mrb[0].mxu0
      %985 = vmatprep.mubr.bf16.mxu0 %v595
      %986 = vmatmul.mubr.bf16.gmra.mrb[0].mxu0 %v594
      %v987 = vpop.f32.mrb[0].mxu0
      %v988 = vadd.f32 %v317, %v987
      %v989 = vpop.f32.mrb[0].mxu0
      %v990 = vpop.f32.mrb[0].mxu0
      %v991 = vadd.f32 %v317, %v990
      %v992 = vpop.f32.mrb[0].mxu0
      %993 = vmatprep.mubr.bf16.mxu0 %v598
      %994 = vmatmul.mubr.bf16.gmra.mrb[0].mxu0 %v597
      %v995 = vpop.f32.mrb[0].mxu0
      %v996 = vadd.f32 %v317, %v995
      %v997 = vpop.f32.mrb[0].mxu0
      %v998 = vpop.f32.mrb[0].mxu0
      %v999 = vadd.f32 %v317, %v998
      %v1000 = vpop.f32.mrb[0].mxu0
      %1001 = vmatprep.mubr.bf16.mxu0 %v601
      %1002 = vmatmul.mubr.bf16.gmra.mrb[0].mxu0 %v600
      %v1003 = vpop.f32.mrb[0].mxu0
      %v1004 = vadd.f32 %v317, %v1003
      %v1005 = vpop.f32.mrb[0].mxu0
      %v1006 = vpop.f32.mrb[0].mxu0
      %v1007 = vadd.f32 %v317, %v1006
      %v1008 = vpop.f32.mrb[0].mxu0
      %1009 = vmatprep.mubr.bf16.mxu0 %v604
      %1010 = vmatmul.mubr.bf16.gmra.mrb[0].mxu0 %v603
      %v1011 = vpop.f32.mrb[0].mxu0
      %v1012 = vadd.f32 %v317, %v1011
      %v1013 = vpop.f32.mrb[0].mxu0
      %v1014 = vpop.f32.mrb[0].mxu0
      %v1015 = vadd.f32 %v317, %v1014
      %v1016 = vpop.f32.mrb[0].mxu0
      %1017 = vmatprep.mubr.bf16.mxu0 %v607
      %1018 = vmatmul.mubr.bf16.gmra.mrb[0].mxu0 %v606
      %v1019 = vpop.f32.mrb[0].mxu0
      %v1020 = vadd.f32 %v317, %v1019
      %v1021 = vpop.f32.mrb[0].mxu0
      %v1022 = vpop.f32.mrb[0].mxu0
      %v1023 = vadd.f32 %v317, %v1022
      %v1024 = vpop.f32.mrb[0].mxu0
      %1025 = vmatprep.mubr.bf16.mxu0 %v610
      %1026 = vmatmul.mubr.bf16.gmra.mrb[0].mxu0 %v609
      %v1027 = vpop.f32.mrb[0].mxu0
      %v1028 = vadd.f32 %v317, %v1027
      %v1029 = vpop.f32.mrb[0].mxu0
      %v1030 = vpop.f32.mrb[0].mxu0
      %v1031 = vadd.f32 %v317, %v1030
      %v1032 = vpop.f32.mrb[0].mxu0
      %1033 = vmatprep.mubr.bf16.mxu0 %v613
      %1034 = vmatmul.mubr.bf16.gmra.mrb[0].mxu0 %v612
      %v1035 = vpop.f32.mrb[0].mxu0
      %v1036 = vadd.f32 %v317, %v1035
      %v1037 = vpop.f32.mrb[0].mxu0
      %v1038 = vpop.f32.mrb[0].mxu0
      %v1039 = vadd.f32 %v317, %v1038
      %v1040 = vpop.f32.mrb[0].mxu0
      %1041 = vmatprep.mubr.bf16.mxu0 %v616
      %1042 = vmatmul.mubr.bf16.gmra.mrb[0].mxu0 %v615
      %v1043 = vpop.f32.mrb[0].mxu0
      %v1044 = vadd.f32 %v317, %v1043
      %v1045 = vpop.f32.mrb[0].mxu0
      %v1046 = vpop.f32.mrb[0].mxu0
      %v1047 = vadd.f32 %v317, %v1046
      %v1048 = vpop.f32.mrb[0].mxu0
      %1049 = vmatprep.mubr.bf16.mxu0 %v619
      %1050 = vmatmul.mubr.bf16.gmra.mrb[0].mxu0 %v618
      %v1051 = vpop.f32.mrb[0].mxu0
      %v1052 = vadd.f32 %v317, %v1051
      %v1053 = vpop.f32.mrb[0].mxu0
      %v1054 = vpop.f32.mrb[0].mxu0
      %v1055 = vadd.f32 %v317, %v1054
      %v1056 = vpop.f32.mrb[0].mxu0
      %1057 = vmatprep.mubr.bf16.mxu0 %v622
      %1058 = vmatmul.mubr.bf16.gmra.mrb[0].mxu0 %v621
      %v1059 = vpop.f32.mrb[0].mxu0
      %v1060 = vadd.f32 %v317, %v1059
      %v1061 = vpop.f32.mrb[0].mxu0
      %v1062 = vpop.f32.mrb[0].mxu0
      %v1063 = vadd.f32 %v317, %v1062
      %v1064 = vpop.f32.mrb[0].mxu0
      %1065 = vmatprep.mubr.bf16.mxu0 %v625
      %1066 = vmatmul.mubr.bf16.gmra.mrb[0].mxu0 %v624
      %v1067 = vpop.f32.mrb[0].mxu0
      %v1068 = vadd.f32 %v317, %v1067
      %v1069 = vpop.f32.mrb[0].mxu0
      %v1070 = vpop.f32.mrb[0].mxu0
      %v1071 = vadd.f32 %v317, %v1070
      %v1072 = vpop.f32.mrb[0].mxu0
      %1073 = vmatprep.mubr.bf16.mxu0 %v628
      %1074 = vmatmul.mubr.bf16.gmra.mrb[0].mxu0 %v627
      %v1075 = vpop.f32.mrb[0].mxu0
      %v1076 = vadd.f32 %v317, %v1075
      %v1077 = vpop.f32.mrb[0].mxu0
      %v1078 = vpop.f32.mrb[0].mxu0
      %v1079 = vadd.f32 %v317, %v1078
      %v1080 = vpop.f32.mrb[0].mxu0
      %1081 = vmatprep.mubr.bf16.mxu0 %v631
      %1082 = vmatmul.mubr.bf16.gmra.mrb[0].mxu0 %v630
      %v1083 = vpop.f32.mrb[0].mxu0
      %v1084 = vadd.f32 %v317, %v1083
      %v1085 = vpop.f32.mrb[0].mxu0
      %v1086 = vpop.f32.mrb[0].mxu0
      %v1087 = vadd.f32 %v317, %v1086
      %v1088 = vpop.f32.mrb[0].mxu0
      %1089 = vmatprep.mubr.bf16.mxu0 %v634
      %1090 = vmatmul.mubr.bf16.gmra.mrb[0].mxu0 %v633
      %v1091 = vpop.f32.mrb[0].mxu0
      %v1092 = vadd.f32 %v317, %v1091
      %v1093 = vpop.f32.mrb[0].mxu0
      %v1094 = vpop.f32.mrb[0].mxu0
      %v1095 = vadd.f32 %v317, %v1094
      %v1096 = vpop.f32.mrb[0].mxu0
      %1097 = vmatprep.mubr.bf16.mxu0 %v637
      %1098 = vmatmul.mubr.bf16.gmra.mrb[0].mxu0 %v636
      %v1099 = vpop.f32.mrb[0].mxu0
      %v1100 = vadd.f32 %v317, %v1099
      %v1101 = vpop.f32.mrb[0].mxu0
      %v1102 = vpop.f32.mrb[0].mxu0
      %v1103 = vpop.f32.mrb[0].mxu0
      %1104 = vdwg.mxu0
      %1105 = vmatprep.subr.bf16.mxu0 0
      %1106 = vmatpush1.bf16.msra.mxu0 %v777
      %1107 = vmatprep.subr.bf16.mxu0 0
      %1108 = vmatpush1.bf16.msra.mxu0 %v778
      %1109 = vmatprep.subr.bf16.mxu0 0
      %1110 = vmatpush1.bf16.msra.mxu0 0
      %1111 = vmatprep.subr.bf16.mxu0 0
      %1112 = vmatpush1.bf16.msra.mxu0 0
      %1113 = vmatprep.subr.bf16.mxu0 0
      %1114 = vmatpush1.bf16.msra.mxu0 0
      %1115 = vmatprep.subr.bf16.mxu0 0
      %1116 = vmatpush1.bf16.msra.mxu0 0
      %1117 = vmatprep.subr.bf16.mxu0 0
      %1118 = vmatpush1.bf16.msra.mxu0 0
      %1119 = vmatprep.subr.bf16.mxu0 0
      %1120 = vmatpush1.bf16.msra.mxu0 0
      %1121 = vmatprep.subr.bf16.mxu0 0
      %1122 = vmatpush1.bf16.msra.mxu0 0
      %1123 = vmatprep.subr.bf16.mxu0 0
      %1124 = vmatpush1.bf16.msra.mxu0 0
      %1125 = vmatprep.subr.bf16.mxu0 0
      %1126 = vmatpush1.bf16.msra.mxu0 0
      %1127 = vmatprep.subr.bf16.mxu0 0
      %1128 = vmatpush1.bf16.msra.mxu0 0
      %1129 = vmatprep.subr.bf16.mxu0 0
      %1130 = vmatpush1.bf16.msra.mxu0 0
      %1131 = vmatprep.subr.bf16.mxu0 0
      %1132 = vmatpush1.bf16.msra.mxu0 0
      %1133 = vmatprep.subr.bf16.mxu0 0
      %1134 = vmatpush1.bf16.msra.mxu0 0
      %1135 = vmatprep.subr.bf16.mxu0 0
      %1136 = vmatpush1.bf16.msra.mxu0 0
      %1137 = vmatprep.mubr.bf16.mxu0 0
      %1138 = vmatmul.mubr.bf16.gmra.mrb[0].mxu0 %v799
      %v1139 = vpop.f32.mrb[0].mxu0
      %v1140 = vadd.f32 %v908, %v1139
      %v1141 = vpop.f32.mrb[0].mxu0
      %v1142 = vpop.f32.mrb[0].mxu0
      %v1143 = vadd.f32 %v911, %v1142
      %v1144 = vpop.f32.mrb[0].mxu0
      %1145 = vmatprep.mubr.bf16.mxu0 0
      %1146 = vmatmul.mubr.bf16.gmra.mrb[0].mxu0 %v802
      %v1147 = vpop.f32.mrb[0].mxu0
      %v1148 = vadd.f32 %v916, %v1147
      %v1149 = vpop.f32.mrb[0].mxu0
      %v1150 = vpop.f32.mrb[0].mxu0
      %v1151 = vadd.f32 %v919, %v1150
      %v1152 = vpop.f32.mrb[0].mxu0
      %1153 = vmatprep.mubr.bf16.mxu0 0
      %1154 = vmatmul.mubr.bf16.gmra.mrb[0].mxu0 %v805
      %v1155 = vpop.f32.mrb[0].mxu0
      %v1156 = vadd.f32 %v924, %v1155
      %v1157 = vpop.f32.mrb[0].mxu0
      %v1158 = vpop.f32.mrb[0].mxu0
      %v1159 = vadd.f32 %v927, %v1158
      %v1160 = vpop.f32.mrb[0].mxu0
      %1161 = vmatprep.mubr.bf16.mxu0 0
      %1162 = vmatmul.mubr.bf16.gmra.mrb[0].mxu0 %v808
      %v1163 = vpop.f32.mrb[0].mxu0
      %v1164 = vadd.f32 %v932, %v1163
      %v1165 = vpop.f32.mrb[0].mxu0
      %v1166 = vpop.f32.mrb[0].mxu0
      %v1167 = vadd.f32 %v935, %v1166
      %v1168 = vpop.f32.mrb[0].mxu0
      %1169 = vmatprep.mubr.bf16.mxu0 0
      %1170 = vmatmul.mubr.bf16.gmra.mrb[0].mxu0 %v811
      %v1171 = vpop.f32.mrb[0].mxu0
      %v1172 = vadd.f32 %v940, %v1171
      %v1173 = vpop.f32.mrb[0].mxu0
      %v1174 = vpop.f32.mrb[0].mxu0
      %v1175 = vadd.f32 %v943, %v1174
      %v1176 = vpop.f32.mrb[0].mxu0
      %1177 = vmatprep.mubr.bf16.mxu0 0
      %1178 = vmatmul.mubr.bf16.gmra.mrb[0].mxu0 %v814
      %v1179 = vpop.f32.mrb[0].mxu0
      %v1180 = vadd.f32 %v948, %v1179
      %v1181 = vpop.f32.mrb[0].mxu0
      %v1182 = vpop.f32.mrb[0].mxu0
      %v1183 = vadd.f32 %v951, %v1182
      %v1184 = vpop.f32.mrb[0].mxu0
      %1185 = vmatprep.mubr.bf16.mxu0 0
      %1186 = vmatmul.mubr.bf16.gmra.mrb[0].mxu0 %v817
      %v1187 = vpop.f32.mrb[0].mxu0
      %v1188 = vadd.f32 %v956, %v1187
      %v1189 = vpop.f32.mrb[0].mxu0
      %v1190 = vpop.f32.mrb[0].mxu0
      %v1191 = vadd.f32 %v959, %v1190
      %v1192 = vpop.f32.mrb[0].mxu0
      %1193 = vmatprep.mubr.bf16.mxu0 0
      %1194 = vmatmul.mubr.bf16.gmra.mrb[0].mxu0 %v820
      %v1195 = vpop.f32.mrb[0].mxu0
      %v1196 = vadd.f32 %v964, %v1195
      %v1197 = vpop.f32.mrb[0].mxu0
      %v1198 = vpop.f32.mrb[0].mxu0
      %v1199 = vadd.f32 %v967, %v1198
      %v1200 = vpop.f32.mrb[0].mxu0
      %1201 = vmatprep.mubr.bf16.mxu0 0
      %1202 = vmatmul.mubr.bf16.gmra.mrb[0].mxu0 %v823
      %v1203 = vpop.f32.mrb[0].mxu0
      %v1204 = vadd.f32 %v972, %v1203
      %v1205 = vpop.f32.mrb[0].mxu0
      %v1206 = vpop.f32.mrb[0].mxu0
      %v1207 = vadd.f32 %v975, %v1206
      %v1208 = vpop.f32.mrb[0].mxu0
      %1209 = vmatprep.mubr.bf16.mxu0 0
      %1210 = vmatmul.mubr.bf16.gmra.mrb[0].mxu0 %v826
      %v1211 = vpop.f32.mrb[0].mxu0
      %v1212 = vadd.f32 %v980, %v1211
      %v1213 = vpop.f32.mrb[0].mxu0
      %v1214 = vpop.f32.mrb[0].mxu0
      %v1215 = vadd.f32 %v983, %v1214
      %v1216 = vpop.f32.mrb[0].mxu0
      %1217 = vmatprep.mubr.bf16.mxu0 0
      %1218 = vmatmul.mubr.bf16.gmra.mrb[0].mxu0 %v829
      %v1219 = vpop.f32.mrb[0].mxu0
      %v1220 = vadd.f32 %v988, %v1219
      %v1221 = vpop.f32.mrb[0].mxu0
      %v1222 = vpop.f32.mrb[0].mxu0
      %v1223 = vadd.f32 %v991, %v1222
      %v1224 = vpop.f32.mrb[0].mxu0
      %1225 = vmatprep.mubr.bf16.mxu0 0
      %1226 = vmatmul.mubr.bf16.gmra.mrb[0].mxu0 %v832
      %v1227 = vpop.f32.mrb[0].mxu0
      %v1228 = vadd.f32 %v996, %v1227
      %v1229 = vpop.f32.mrb[0].mxu0
      %v1230 = vpop.f32.mrb[0].mxu0
      %v1231 = vadd.f32 %v999, %v1230
      %v1232 = vpop.f32.mrb[0].mxu0
      %1233 = vmatprep.mubr.bf16.mxu0 0
      %1234 = vmatmul.mubr.bf16.gmra.mrb[0].mxu0 %v835
      %v1235 = vpop.f32.mrb[0].mxu0
      %v1236 = vadd.f32 %v1004, %v1235
      %v1237 = vpop.f32.mrb[0].mxu0
      %v1238 = vpop.f32.mrb[0].mxu0
      %v1239 = vadd.f32 %v1007, %v1238
      %v1240 = vpop.f32.mrb[0].mxu0
      %1241 = vmatprep.mubr.bf16.mxu0 0
      %1242 = vmatmul.mubr.bf16.gmra.mrb[0].mxu0 %v838
      %v1243 = vpop.f32.mrb[0].mxu0
      %v1244 = vadd.f32 %v1012, %v1243
      %v1245 = vpop.f32.mrb[0].mxu0
      %v1246 = vpop.f32.mrb[0].mxu0
      %v1247 = vadd.f32 %v1015, %v1246
      %v1248 = vpop.f32.mrb[0].mxu0
      %1249 = vmatprep.mubr.bf16.mxu0 0
      %1250 = vmatmul.mubr.bf16.gmra.mrb[0].mxu0 %v841
      %v1251 = vpop.f32.mrb[0].mxu0
      %v1252 = vadd.f32 %v1020, %v1251
      %v1253 = vpop.f32.mrb[0].mxu0
      %v1254 = vpop.f32.mrb[0].mxu0
      %v1255 = vadd.f32 %v1023, %v1254
      %v1256 = vpop.f32.mrb[0].mxu0
      %1257 = vmatprep.mubr.bf16.mxu0 0
      %1258 = vmatmul.mubr.bf16.gmra.mrb[0].mxu0 %v844
      %v1259 = vpop.f32.mrb[0].mxu0
      %v1260 = vadd.f32 %v1028, %v1259
      %v1261 = vpop.f32.mrb[0].mxu0
      %v1262 = vpop.f32.mrb[0].mxu0
      %v1263 = vadd.f32 %v1031, %v1262
      %v1264 = vpop.f32.mrb[0].mxu0
      %1265 = vmatprep.mubr.bf16.mxu0 0
      %1266 = vmatmul.mubr.bf16.gmra.mrb[0].mxu0 %v847
      %v1267 = vpop.f32.mrb[0].mxu0
      %v1268 = vadd.f32 %v1036, %v1267
      %v1269 = vpop.f32.mrb[0].mxu0
      %v1270 = vpop.f32.mrb[0].mxu0
      %v1271 = vadd.f32 %v1039, %v1270
      %v1272 = vpop.f32.mrb[0].mxu0
      %1273 = vmatprep.mubr.bf16.mxu0 0
      %1274 = vmatmul.mubr.bf16.gmra.mrb[0].mxu0 %v850
      %v1275 = vpop.f32.mrb[0].mxu0
      %v1276 = vadd.f32 %v1044, %v1275
      %v1277 = vpop.f32.mrb[0].mxu0
      %v1278 = vpop.f32.mrb[0].mxu0
      %v1279 = vadd.f32 %v1047, %v1278
      %v1280 = vpop.f32.mrb[0].mxu0
      %1281 = vmatprep.mubr.bf16.mxu0 0
      %1282 = vmatmul.mubr.bf16.gmra.mrb[0].mxu0 %v853
      %v1283 = vpop.f32.mrb[0].mxu0
      %v1284 = vadd.f32 %v1052, %v1283
      %v1285 = vpop.f32.mrb[0].mxu0
      %v1286 = vpop.f32.mrb[0].mxu0
      %v1287 = vadd.f32 %v1055, %v1286
      %v1288 = vpop.f32.mrb[0].mxu0
      %1289 = vmatprep.mubr.bf16.mxu0 0
      %1290 = vmatmul.mubr.bf16.gmra.mrb[0].mxu0 %v856
      %v1291 = vpop.f32.mrb[0].mxu0
      %v1292 = vadd.f32 %v1060, %v1291
      %v1293 = vpop.f32.mrb[0].mxu0
      %v1294 = vpop.f32.mrb[0].mxu0
      %v1295 = vadd.f32 %v1063, %v1294
      %v1296 = vpop.f32.mrb[0].mxu0
      %1297 = vmatprep.mubr.bf16.mxu0 0
      %1298 = vmatmul.mubr.bf16.gmra.mrb[0].mxu0 %v859
      %v1299 = vpop.f32.mrb[0].mxu0
      %v1300 = vadd.f32 %v1068, %v1299
      %v1301 = vpop.f32.mrb[0].mxu0
      %v1302 = vpop.f32.mrb[0].mxu0
      %v1303 = vadd.f32 %v1071, %v1302
      %v1304 = vpop.f32.mrb[0].mxu0
      %1305 = vmatprep.mubr.bf16.mxu0 0
      %1306 = vmatmul.mubr.bf16.gmra.mrb[0].mxu0 %v862
      %v1307 = vpop.f32.mrb[0].mxu0
      %v1308 = vadd.f32 %v1076, %v1307
      %v1309 = vpop.f32.mrb[0].mxu0
      %v1310 = vpop.f32.mrb[0].mxu0
      %v1311 = vadd.f32 %v1079, %v1310
      %v1312 = vpop.f32.mrb[0].mxu0
      %1313 = vmatprep.mubr.bf16.mxu0 0
      %1314 = vmatmul.mubr.bf16.gmra.mrb[0].mxu0 %v865
      %v1315 = vpop.f32.mrb[0].mxu0
      %v1316 = vadd.f32 %v1084, %v1315
      %v1317 = vpop.f32.mrb[0].mxu0
      %v1318 = vpop.f32.mrb[0].mxu0
      %v1319 = vadd.f32 %v1087, %v1318
      %v1320 = vpop.f32.mrb[0].mxu0
      %1321 = vmatprep.mubr.bf16.mxu0 0
      %1322 = vmatmul.mubr.bf16.gmra.mrb[0].mxu0 %v868
      %v1323 = vpop.f32.mrb[0].mxu0
      %v1324 = vadd.f32 %v1092, %v1323
      %v1325 = vpop.f32.mrb[0].mxu0
      %v1326 = vpop.f32.mrb[0].mxu0
      %v1327 = vadd.f32 %v1095, %v1326
      %v1328 = vpop.f32.mrb[0].mxu0
      %1329 = vmatprep.mubr.bf16.mxu0 0
      %1330 = vmatmul.mubr.bf16.gmra.mrb[0].mxu0 %v871
      %v1331 = vpop.f32.mrb[0].mxu0
      %v1332 = vadd.f32 %v1100, %v1331
      %v1333 = vpop.f32.mrb[0].mxu0
      %v1334 = vpop.f32.mrb[0].mxu0
      %v1335 = vpop.f32.mrb[0].mxu0
      %1336 = vdwg.mxu0
      %vm1337 = vcmask 64512
      %1338 = vst.msk [vmem:[%s175] sm:$0xff] %vm1337, %v1140
      %1339 = vst.msk [vmem:[%s175 + $0x8] sm:$0xff] %vm1337, %v1143
      %1340 = vst.msk [vmem:[%s175 + $0x10] sm:$0xff] %vm1337, %v1148
      %1341 = vst.msk [vmem:[%s175 + $0x18] sm:$0xff] %vm1337, %v1151
      %1342 = vst.msk [vmem:[%s175 + $0x20] sm:$0xff] %vm1337, %v1156
      %1343 = vst.msk [vmem:[%s175 + $0x28] sm:$0xff] %vm1337, %v1159
      %1344 = vst.msk [vmem:[%s175 + $0x30] sm:$0xff] %vm1337, %v1164
      %1345 = vst.msk [vmem:[%s175 + $0x38] sm:$0xff] %vm1337, %v1167
      %1346 = vst.msk [vmem:[%s175 + $0x40] sm:$0xff] %vm1337, %v1172
      %1347 = vst.msk [vmem:[%s175 + $0x48] sm:$0xff] %vm1337, %v1175
      %1348 = vst.msk [vmem:[%s175 + $0x50] sm:$0xff] %vm1337, %v1180
      %1349 = vst.msk [vmem:[%s175 + $0x58] sm:$0xff] %vm1337, %v1183
      %1350 = vst.msk [vmem:[%s175 + $0x60] sm:$0xff] %vm1337, %v1188
      %1351 = vst.msk [vmem:[%s175 + $0x68] sm:$0xff] %vm1337, %v1191
      %1352 = vst.msk [vmem:[%s175 + $0x70] sm:$0xff] %vm1337, %v1196
      %1353 = vst.msk [vmem:[%s175 + $0x78] sm:$0xff] %vm1337, %v1199
      %1354 = vst.msk [vmem:[%s175 + $0x80] sm:$0xff] %vm1337, %v1204
      %1355 = vst.msk [vmem:[%s175 + $0x88] sm:$0xff] %vm1337, %v1207
      %1356 = vst.msk [vmem:[%s175 + $0x90] sm:$0xff] %vm1337, %v1212
      %1357 = vst.msk [vmem:[%s175 + $0x98] sm:$0xff] %vm1337, %v1215
      %1358 = vst.msk [vmem:[%s175 + $0xa0] sm:$0xff] %vm1337, %v1220
      %1359 = vst.msk [vmem:[%s175 + $0xa8] sm:$0xff] %vm1337, %v1223
      %1360 = vst.msk [vmem:[%s175 + $0xb0] sm:$0xff] %vm1337, %v1228
      %1361 = vst.msk [vmem:[%s175 + $0xb8] sm:$0xff] %vm1337, %v1231
      %1362 = vst.msk [vmem:[%s175 + $0xc0] sm:$0xff] %vm1337, %v1236
      %1363 = vst.msk [vmem:[%s175 + $0xc8] sm:$0xff] %vm1337, %v1239
      %1364 = vst.msk [vmem:[%s175 + $0xd0] sm:$0xff] %vm1337, %v1244
      %1365 = vst.msk [vmem:[%s175 + $0xd8] sm:$0xff] %vm1337, %v1247
      %1366 = vst.msk [vmem:[%s175 + $0xe0] sm:$0xff] %vm1337, %v1252
      %1367 = vst.msk [vmem:[%s175 + $0xe8] sm:$0xff] %vm1337, %v1255
      %1368 = vst.msk [vmem:[%s175 + $0xf0] sm:$0xff] %vm1337, %v1260
      %1369 = vst.msk [vmem:[%s175 + $0xf8] sm:$0xff] %vm1337, %v1263
      %1370 = vst.msk [vmem:[%s175 + $0x100] sm:$0xff] %vm1337, %v1268
      %1371 = vst.msk [vmem:[%s175 + $0x108] sm:$0xff] %vm1337, %v1271
      %1372 = vst.msk [vmem:[%s175 + $0x110] sm:$0xff] %vm1337, %v1276
      %1373 = vst.msk [vmem:[%s175 + $0x118] sm:$0xff] %vm1337, %v1279
      %1374 = vst.msk [vmem:[%s175 + $0x120] sm:$0xff] %vm1337, %v1284
      %1375 = vst.msk [vmem:[%s175 + $0x128] sm:$0xff] %vm1337, %v1287
      %1376 = vst.msk [vmem:[%s175 + $0x130] sm:$0xff] %vm1337, %v1292
      %1377 = vst.msk [vmem:[%s175 + $0x138] sm:$0xff] %vm1337, %v1295
      %1378 = vst.msk [vmem:[%s175 + $0x140] sm:$0xff] %vm1337, %v1300
      %1379 = vst.msk [vmem:[%s175 + $0x148] sm:$0xff] %vm1337, %v1303
      %1380 = vst.msk [vmem:[%s175 + $0x150] sm:$0xff] %vm1337, %v1308
      %1381 = vst.msk [vmem:[%s175 + $0x158] sm:$0xff] %vm1337, %v1311
      %1382 = vst.msk [vmem:[%s175 + $0x160] sm:$0xff] %vm1337, %v1316
      %1383 = vst.msk [vmem:[%s175 + $0x168] sm:$0xff] %vm1337, %v1319
      %1384 = vst.msk [vmem:[%s175 + $0x170] sm:$0xff] %vm1337, %v1324
      %1385 = vst.msk [vmem:[%s175 + $0x178] sm:$0xff] %vm1337, %v1327
      %1386 = vst.msk [vmem:[%s175 + $0x180] sm:$0xff] %vm1337, %v1332
      %s1387 = smul.u32 49, %s14
      %p1388 = scmp.lt.s32.totalorder %s1387, 195
      %s1389 = scalar_select %p1388, %s1387, 195
      %s1390 = smul.addr %s1389, 8
      %s1391 = scalar_lea.vmem %s3, %s1390
      // Predicated region
      $region33: #{resnet_forward.20} parent=31 // pred_check
        %p1392 = pneg %p100
      $region34: #{resnet_forward.20} parent=31 // pred_check_branch
        %1394 = sbr.rel (%p1392) target = $region36
      $region35: #{resnet_forward.20} parent=31 // pred_region
        %s1395 = smul.u32 49, %s14
      $region36: #{resnet_forward.20} parent=31 // pred_fallthru
        _
    $region32: #{resnet_forward.20} parent=5 // pred_fallthru
      _
    %p1396 = scmp.le.s32.totalorder 2, %s9
    // Predicated region
    $region37: #{resnet_forward.20} parent=5 // pred_check
      %p1397 = pneg %p1396
    $region38: #{resnet_forward.20} parent=5 // pred_check_branch
      %1399 = sbr.rel (%p1397) target = $region40
    $region39: #{resnet_forward.20} parent=5 // pred_region
      %s1400 = ssub.s32 %s9, 2
      // Predicated region
      $region41: #{resnet_forward.20} parent=39 // pred_check
        %p1401 = pneg %p106
      $region42: #{resnet_forward.20} parent=39 // pred_check_branch
        %1403 = sbr.rel (%p1401) target = $region44
      $region43: #{resnet_forward.20} parent=39 // pred_region
        %s1404 = smul.u32 49, %s15
        %p1405 = scmp.lt.s32.totalorder %s1404, 195
        %s1406 = scalar_select %p1405, %s1404, 195
        %s1407 = smul.addr %s1406, 8
        %s1408 = scalar_lea.vmem %s3, %s1407
      $region44: #{resnet_forward.20} parent=39 // pred_fallthru
        _
    $region40: #{resnet_forward.20} parent=5 // pred_fallthru
      _
  $region6: #{resnet_forward.20} parent=0 // loop_footer
    %s13 = sadd.s32 1, %s9
  $region7: #{resnet_forward.20} parent=0 // loop_footer_branch
    %8 = sbr.rel target = $region3
  $region8: #{resnet_forward.20} parent=0 // loop_exit
    _

// kernel: resnet_forward.21
$region0: #{resnet_forward.21}
  #allocation0 [shape = 'u32[]', space=smem, size = 0x4, offset = 0x4, fixed_abs, tag = 'smem constant byte address 0x4 - core index']
  #allocation1 [shape = 'u32[144,128]{1,0:T(1,128)}', space=vmem, size = 0x12000, scoped, tag = 'internal scratch']
  %s0 = inlined_call_operand.vmem [shape: f32[2,784], index: 0, kind: input, shape index: {}]
  %s1 = inlined_call_operand.vmem [shape: f32[784,256], index: 1, kind: input, shape index: {}]
  %s2 = inlined_call_operand.vmem [shape: f32[1,256], index: 2, kind: input, shape index: {}]
  %s3 = inlined_call_operand.vmem [shape: f32[256,64], index: 3, kind: input, shape index: {}]
  %s4 = inlined_call_operand.vmem [shape: f32[1,64], index: 4, kind: input, shape index: {}]
  %s5 = inlined_call_operand.vmem [shape: f32[64,10], index: 5, kind: input, shape index: {}]
  %s6 = inlined_call_operand.vmem [shape: f32[1,10], index: 6, kind: input, shape index: {}]
  %s7 = inlined_call_operand.hbm [shape: f32[2,10], index: 7, kind: output, shape index: {}]
  %s8 = sld [smem:[#allocation0]]
  $region38: #{resnet_forward.21} parent=0
    _
  %s10 = ssub.s32 1, %s8
  %s11 = scalar_select 0, %s10, %s8
  $region1: #{resnet_forward.21} parent=0
    #allocation2 [shape = 'u8[1024]{0}', space=vmem, size = 0x400, scoped, tag = 'output window, operand 0, single buffered']
    #allocation3 [shape = 's32[1]{0}', space=sflag, size = 0x4, scoped, tag = 'scoped memory for resnet_forward.21']
    %12 = vsyncpa [#allocation3], 0
    // Predicated region
    $region2: #{resnet_forward.21} parent=1 // pred_check
      _
    $region3: #{resnet_forward.21} parent=1 // pred_check_branch
      %14 = sbr.rel (0) target = $region5
    $region4: #{resnet_forward.21} parent=1 // pred_region
      _
    $region5: #{resnet_forward.21} parent=1 // pred_fallthru
      _
    // Predicated region
    $region6: #{resnet_forward.21} parent=1 // pred_check
      _
    $region7: #{resnet_forward.21} parent=1 // pred_check_branch
      %16 = sbr.rel (0) target = $region9
    $region8: #{resnet_forward.21} parent=1 // pred_region
      _
    $region9: #{resnet_forward.21} parent=1 // pred_fallthru
      _
    // Predicated region
    $region10: #{resnet_forward.21} parent=1 // pred_check
      _
    $region11: #{resnet_forward.21} parent=1 // pred_check_branch
      %18 = sbr.rel (0) target = $region13
    $region12: #{resnet_forward.21} parent=1 // pred_region
      _
    $region13: #{resnet_forward.21} parent=1 // pred_fallthru
      _
    // Predicated region
    $region14: #{resnet_forward.21} parent=1 // pred_check
      _
    $region15: #{resnet_forward.21} parent=1 // pred_check_branch
      %20 = sbr.rel (0) target = $region17
    $region16: #{resnet_forward.21} parent=1 // pred_region
      _
    $region17: #{resnet_forward.21} parent=1 // pred_fallthru
      _
    // Predicated region
    $region18: #{resnet_forward.21} parent=1 // pred_check
      _
    $region19: #{resnet_forward.21} parent=1 // pred_check_branch
      %22 = sbr.rel (0) target = $region21
    $region20: #{resnet_forward.21} parent=1 // pred_region
      _
    $region21: #{resnet_forward.21} parent=1 // pred_fallthru
      _
    // Predicated region
    $region22: #{resnet_forward.21} parent=1 // pred_check
      _
    $region23: #{resnet_forward.21} parent=1 // pred_check_branch
      %24 = sbr.rel (0) target = $region25
    $region24: #{resnet_forward.21} parent=1 // pred_region
      _
    $region25: #{resnet_forward.21} parent=1 // pred_fallthru
      _
    // Predicated region
    $region26: #{resnet_forward.21} parent=1 // pred_check
      _
    $region27: #{resnet_forward.21} parent=1 // pred_check_branch
      %26 = sbr.rel (0) target = $region29
    $region28: #{resnet_forward.21} parent=1 // pred_region
      _
    $region29: #{resnet_forward.21} parent=1 // pred_fallthru
      _
    %v27 = vld [vmem:[%s0] sm:$0xff]
    %v28 = vld [vmem:[%s0 + $0x8] sm:$0x3f]
    %v29 = vld [vmem:[%s1] sm:$0xff]
    %v30 = vld [vmem:[%s1 + $0x8] sm:$0xff]
    %v31 = vld [vmem:[%s1 + $0x10] sm:$0xff]
    %v32 = vld [vmem:[%s1 + $0x18] sm:$0xff]
    %v33 = vld [vmem:[%s1 + $0x20] sm:$0xff]
    %v34 = vld [vmem:[%s1 + $0x28] sm:$0xff]
    %v35 = vld [vmem:[%s1 + $0x30] sm:$0xff]
    %v36 = vld [vmem:[%s1 + $0x38] sm:$0xff]
    %v37 = vld [vmem:[%s1 + $0x40] sm:$0xff]
    %v38 = vld [vmem:[%s1 + $0x48] sm:$0xff]
    %v39 = vld [vmem:[%s1 + $0x50] sm:$0xff]
    %v40 = vld [vmem:[%s1 + $0x58] sm:$0xff]
    %v41 = vld [vmem:[%s1 + $0x60] sm:$0xff]
    %v42 = vld [vmem:[%s1 + $0x68] sm:$0xff]
    %v43 = vld [vmem:[%s1 + $0x70] sm:$0xff]
    %v44 = vld [vmem:[%s1 + $0x78] sm:$0xff]
    %v45 = vld [vmem:[%s1 + $0x80] sm:$0xff]
    %v46 = vld [vmem:[%s1 + $0x88] sm:$0xff]
    %v47 = vld [vmem:[%s1 + $0x90] sm:$0xff]
    %v48 = vld [vmem:[%s1 + $0x98] sm:$0xff]
    %v49 = vld [vmem:[%s1 + $0xa0] sm:$0xff]
    %v50 = vld [vmem:[%s1 + $0xa8] sm:$0xff]
    %v51 = vld [vmem:[%s1 + $0xb0] sm:$0xff]
    %v52 = vld [vmem:[%s1 + $0xb8] sm:$0xff]
    %v53 = vld [vmem:[%s1 + $0xc0] sm:$0xff]
    %v54 = vld [vmem:[%s1 + $0xc8] sm:$0xff]
    %v55 = vld [vmem:[%s1 + $0xd0] sm:$0xff]
    %v56 = vld [vmem:[%s1 + $0xd8] sm:$0xff]
    %v57 = vld [vmem:[%s1 + $0xe0] sm:$0xff]
    %v58 = vld [vmem:[%s1 + $0xe8] sm:$0xff]
    %v59 = vld [vmem:[%s1 + $0xf0] sm:$0xff]
    %v60 = vld [vmem:[%s1 + $0xf8] sm:$0xff]
    %v61 = vld [vmem:[%s1 + $0x100] sm:$0xff]
    %v62 = vld [vmem:[%s1 + $0x108] sm:$0xff]
    %v63 = vld [vmem:[%s1 + $0x110] sm:$0xff]
    %v64 = vld [vmem:[%s1 + $0x118] sm:$0xff]
    %v65 = vld [vmem:[%s1 + $0x120] sm:$0xff]
    %v66 = vld [vmem:[%s1 + $0x128] sm:$0xff]
    %v67 = vld [vmem:[%s1 + $0x130] sm:$0xff]
    %v68 = vld [vmem:[%s1 + $0x138] sm:$0xff]
    %v69 = vld [vmem:[%s1 + $0x140] sm:$0xff]
    %v70 = vld [vmem:[%s1 + $0x148] sm:$0xff]
    %v71 = vld [vmem:[%s1 + $0x150] sm:$0xff]
    %v72 = vld [vmem:[%s1 + $0x158] sm:$0xff]
    %v73 = vld [vmem:[%s1 + $0x160] sm:$0xff]
    %v74 = vld [vmem:[%s1 + $0x168] sm:$0xff]
    %v75 = vld [vmem:[%s1 + $0x170] sm:$0xff]
    %v76 = vld [vmem:[%s1 + $0x178] sm:$0xff]
    %v77 = vld [vmem:[%s1 + $0x180] sm:$0xff]
    %v78 = vld [vmem:[%s1 + $0x188] sm:$0xff]
    %v79 = vld [vmem:[%s1 + $0x190] sm:$0xff]
    %v80 = vld [vmem:[%s1 + $0x198] sm:$0xff]
    %v81 = vld [vmem:[%s1 + $0x1a0] sm:$0xff]
    %v82 = vld [vmem:[%s1 + $0x1a8] sm:$0xff]
    %v83 = vld [vmem:[%s1 + $0x1b0] sm:$0xff]
    %v84 = vld [vmem:[%s1 + $0x1b8] sm:$0xff]
    %v85 = vld [vmem:[%s1 + $0x1c0] sm:$0xff]
    %v86 = vld [vmem:[%s1 + $0x1c8] sm:$0xff]
    %v87 = vld [vmem:[%s1 + $0x1d0] sm:$0xff]
    %v88 = vld [vmem:[%s1 + $0x1d8] sm:$0xff]
    %v89 = vld [vmem:[%s1 + $0x1e0] sm:$0xff]
    %v90 = vld [vmem:[%s1 + $0x1e8] sm:$0xff]
    %v91 = vld [vmem:[%s1 + $0x1f0] sm:$0xff]
    %v92 = vld [vmem:[%s1 + $0x1f8] sm:$0xff]
    %v93 = vld [vmem:[%s1 + $0x200] sm:$0xff]
    %v94 = vld [vmem:[%s1 + $0x208] sm:$0xff]
    %v95 = vld [vmem:[%s1 + $0x210] sm:$0xff]
    %v96 = vld [vmem:[%s1 + $0x218] sm:$0xff]
    %v97 = vld [vmem:[%s1 + $0x220] sm:$0xff]
    %v98 = vld [vmem:[%s1 + $0x228] sm:$0xff]
    %v99 = vld [vmem:[%s1 + $0x230] sm:$0xff]
    %v100 = vld [vmem:[%s1 + $0x238] sm:$0xff]
    %v101 = vld [vmem:[%s1 + $0x240] sm:$0xff]
    %v102 = vld [vmem:[%s1 + $0x248] sm:$0xff]
    %v103 = vld [vmem:[%s1 + $0x250] sm:$0xff]
    %v104 = vld [vmem:[%s1 + $0x258] sm:$0xff]
    %v105 = vld [vmem:[%s1 + $0x260] sm:$0xff]
    %v106 = vld [vmem:[%s1 + $0x268] sm:$0xff]
    %v107 = vld [vmem:[%s1 + $0x270] sm:$0xff]
    %v108 = vld [vmem:[%s1 + $0x278] sm:$0xff]
    %v109 = vld [vmem:[%s1 + $0x280] sm:$0xff]
    %v110 = vld [vmem:[%s1 + $0x288] sm:$0xff]
    %v111 = vld [vmem:[%s1 + $0x290] sm:$0xff]
    %v112 = vld [vmem:[%s1 + $0x298] sm:$0xff]
    %v113 = vld [vmem:[%s1 + $0x2a0] sm:$0xff]
    %v114 = vld [vmem:[%s1 + $0x2a8] sm:$0xff]
    %v115 = vld [vmem:[%s1 + $0x2b0] sm:$0xff]
    %v116 = vld [vmem:[%s1 + $0x2b8] sm:$0xff]
    %v117 = vld [vmem:[%s1 + $0x2c0] sm:$0xff]
    %v118 = vld [vmem:[%s1 + $0x2c8] sm:$0xff]
    %v119 = vld [vmem:[%s1 + $0x2d0] sm:$0xff]
    %v120 = vld [vmem:[%s1 + $0x2d8] sm:$0xff]
    %v121 = vld [vmem:[%s1 + $0x2e0] sm:$0xff]
    %v122 = vld [vmem:[%s1 + $0x2e8] sm:$0xff]
    %v123 = vld [vmem:[%s1 + $0x2f0] sm:$0xff]
    %v124 = vld [vmem:[%s1 + $0x2f8] sm:$0xff]
    %v125 = vld [vmem:[%s1 + $0x300] sm:$0xff]
    %v126 = vld [vmem:[%s1 + $0x308] sm:$0xff]
    %v127 = vld [vmem:[%s1 + $0x310] sm:$0xff]
    %v128 = vld [vmem:[%s1 + $0x318] sm:$0xff]
    %v129 = vld [vmem:[%s1 + $0x320] sm:$0xff]
    %v130 = vld [vmem:[%s1 + $0x328] sm:$0xff]
    %v131 = vld [vmem:[%s1 + $0x330] sm:$0xff]
    %v132 = vld [vmem:[%s1 + $0x338] sm:$0xff]
    %v133 = vld [vmem:[%s1 + $0x340] sm:$0xff]
    %v134 = vld [vmem:[%s1 + $0x348] sm:$0xff]
    %v135 = vld [vmem:[%s1 + $0x350] sm:$0xff]
    %v136 = vld [vmem:[%s1 + $0x358] sm:$0xff]
    %v137 = vld [vmem:[%s1 + $0x360] sm:$0xff]
    %v138 = vld [vmem:[%s1 + $0x368] sm:$0xff]
    %v139 = vld [vmem:[%s1 + $0x370] sm:$0xff]
    %v140 = vld [vmem:[%s1 + $0x378] sm:$0xff]
    %v141 = vld [vmem:[%s1 + $0x380] sm:$0xff]
    %v142 = vld [vmem:[%s1 + $0x388] sm:$0xff]
    %v143 = vld [vmem:[%s1 + $0x390] sm:$0xff]
    %v144 = vld [vmem:[%s1 + $0x398] sm:$0xff]
    %v145 = vld [vmem:[%s1 + $0x3a0] sm:$0xff]
    %v146 = vld [vmem:[%s1 + $0x3a8] sm:$0xff]
    %v147 = vld [vmem:[%s1 + $0x3b0] sm:$0xff]
    %v148 = vld [vmem:[%s1 + $0x3b8] sm:$0xff]
    %v149 = vld [vmem:[%s1 + $0x3c0] sm:$0xff]
    %v150 = vld [vmem:[%s1 + $0x3c8] sm:$0xff]
    %v151 = vld [vmem:[%s1 + $0x3d0] sm:$0xff]
    %v152 = vld [vmem:[%s1 + $0x3d8] sm:$0xff]
    %v153 = vld [vmem:[%s1 + $0x3e0] sm:$0xff]
    %v154 = vld [vmem:[%s1 + $0x3e8] sm:$0xff]
    %v155 = vld [vmem:[%s1 + $0x3f0] sm:$0xff]
    %v156 = vld [vmem:[%s1 + $0x3f8] sm:$0xff]
    %v157 = vld [vmem:[%s1 + $0x400] sm:$0xff]
    %v158 = vld [vmem:[%s1 + $0x408] sm:$0xff]
    %v159 = vld [vmem:[%s1 + $0x410] sm:$0xff]
    %v160 = vld [vmem:[%s1 + $0x418] sm:$0xff]
    %v161 = vld [vmem:[%s1 + $0x420] sm:$0xff]
    %v162 = vld [vmem:[%s1 + $0x428] sm:$0xff]
    %v163 = vld [vmem:[%s1 + $0x430] sm:$0xff]
    %v164 = vld [vmem:[%s1 + $0x438] sm:$0xff]
    %v165 = vld [vmem:[%s1 + $0x440] sm:$0xff]
    %v166 = vld [vmem:[%s1 + $0x448] sm:$0xff]
    %v167 = vld [vmem:[%s1 + $0x450] sm:$0xff]
    %v168 = vld [vmem:[%s1 + $0x458] sm:$0xff]
    %v169 = vld [vmem:[%s1 + $0x460] sm:$0xff]
    %v170 = vld [vmem:[%s1 + $0x468] sm:$0xff]
    %v171 = vld [vmem:[%s1 + $0x470] sm:$0xff]
    %v172 = vld [vmem:[%s1 + $0x478] sm:$0xff]
    %v173 = vld [vmem:[%s1 + $0x480] sm:$0xff]
    %v174 = vld [vmem:[%s1 + $0x488] sm:$0xff]
    %v175 = vld [vmem:[%s1 + $0x490] sm:$0xff]
    %v176 = vld [vmem:[%s1 + $0x498] sm:$0xff]
    %v177 = vld [vmem:[%s1 + $0x4a0] sm:$0xff]
    %v178 = vld [vmem:[%s1 + $0x4a8] sm:$0xff]
    %v179 = vld [vmem:[%s1 + $0x4b0] sm:$0xff]
    %v180 = vld [vmem:[%s1 + $0x4b8] sm:$0xff]
    %v181 = vld [vmem:[%s1 + $0x4c0] sm:$0xff]
    %v182 = vld [vmem:[%s1 + $0x4c8] sm:$0xff]
    %v183 = vld [vmem:[%s1 + $0x4d0] sm:$0xff]
    %v184 = vld [vmem:[%s1 + $0x4d8] sm:$0xff]
    %v185 = vld [vmem:[%s1 + $0x4e0] sm:$0xff]
    %v186 = vld [vmem:[%s1 + $0x4e8] sm:$0xff]
    %v187 = vld [vmem:[%s1 + $0x4f0] sm:$0xff]
    %v188 = vld [vmem:[%s1 + $0x4f8] sm:$0xff]
    %v189 = vld [vmem:[%s1 + $0x500] sm:$0xff]
    %v190 = vld [vmem:[%s1 + $0x508] sm:$0xff]
    %v191 = vld [vmem:[%s1 + $0x510] sm:$0xff]
    %v192 = vld [vmem:[%s1 + $0x518] sm:$0xff]
    %v193 = vld [vmem:[%s1 + $0x520] sm:$0xff]
    %v194 = vld [vmem:[%s1 + $0x528] sm:$0xff]
    %v195 = vld [vmem:[%s1 + $0x530] sm:$0xff]
    %v196 = vld [vmem:[%s1 + $0x538] sm:$0xff]
    %v197 = vld [vmem:[%s1 + $0x540] sm:$0xff]
    %v198 = vld [vmem:[%s1 + $0x548] sm:$0xff]
    %v199 = vld [vmem:[%s1 + $0x550] sm:$0xff]
    %v200 = vld [vmem:[%s1 + $0x558] sm:$0xff]
    %v201 = vld [vmem:[%s1 + $0x560] sm:$0xff]
    %v202 = vld [vmem:[%s1 + $0x568] sm:$0xff]
    %v203 = vld [vmem:[%s1 + $0x570] sm:$0xff]
    %v204 = vld [vmem:[%s1 + $0x578] sm:$0xff]
    %v205 = vld [vmem:[%s1 + $0x580] sm:$0xff]
    %v206 = vld [vmem:[%s1 + $0x588] sm:$0xff]
    %v207 = vld [vmem:[%s1 + $0x590] sm:$0xff]
    %v208 = vld [vmem:[%s1 + $0x598] sm:$0xff]
    %v209 = vld [vmem:[%s1 + $0x5a0] sm:$0xff]
    %v210 = vld [vmem:[%s1 + $0x5a8] sm:$0xff]
    %v211 = vld [vmem:[%s1 + $0x5b0] sm:$0xff]
    %v212 = vld [vmem:[%s1 + $0x5b8] sm:$0xff]
    %v213 = vld [vmem:[%s1 + $0x5c0] sm:$0xff]
    %v214 = vld [vmem:[%s1 + $0x5c8] sm:$0xff]
    %v215 = vld [vmem:[%s1 + $0x5d0] sm:$0xff]
    %v216 = vld [vmem:[%s1 + $0x5d8] sm:$0xff]
    %v217 = vld [vmem:[%s1 + $0x5e0] sm:$0xff]
    %v218 = vld [vmem:[%s1 + $0x5e8] sm:$0xff]
    %v219 = vld [vmem:[%s1 + $0x5f0] sm:$0xff]
    %v220 = vld [vmem:[%s1 + $0x5f8] sm:$0xff]
    %v221 = vld [vmem:[%s1 + $0x600] sm:$0xff]
    %v222 = vld [vmem:[%s1 + $0x608] sm:$0xff]
    %v223 = vld [vmem:[%s1 + $0x610] sm:$0xff]
    %v224 = vld [vmem:[%s1 + $0x618] sm:$0xff]
    %v225 = vld [vmem:[%s2] sm:$0x3]
    %v227 = vlaneseq
    %v228 = vshrl.u32 %v227, 7
    %v229 = vsub.s32 0, %v228
    %v230 = vrot.slane %v225, %v229
    %v231 = vlaneseq
    %v232 = vshrl.u32 %v231, 7
    %v233 = vsub.s32 1, %v232
    %v234 = vrot.slane %v225, %v233
    %v239 = vcombine.high %v27, %v27
    %v241 = vunpack.c.l.s4 1983009808
    %v242 = vunpack.c.0.s8 %v241
    %v243 = vlaneseq
    %v244 = vshrl.u32 %v243, 7
    %v245 = vsub.s32 %v242, %v244
    %v246 = vrot.slane %v27, %v245
    %v248 = vunpack.c.l.s4 1983009808
    %v249 = vunpack.c.0.s8 %v248
    %v250 = vlaneseq
    %v251 = vshrl.u32 %v250, 7
    %v252 = vsub.s32 %v249, %v251
    %v253 = vrot.slane %v239, %v252
    %v254 = vcombine.high %v246, %v246
    %v255 = vcombine.high %v253, %v253
    %v256 = vcombine.high %v28, %v28
    %v258 = vunpack.c.l.s4 1983009808
    %v259 = vunpack.c.0.s8 %v258
    %v260 = vlaneseq
    %v261 = vshrl.u32 %v260, 7
    %v262 = vsub.s32 %v259, %v261
    %v263 = vrot.slane %v28, %v262
    %v265 = vunpack.c.l.s4 1983009808
    %v266 = vunpack.c.0.s8 %v265
    %v267 = vlaneseq
    %v268 = vshrl.u32 %v267, 7
    %v269 = vsub.s32 %v266, %v268
    %v270 = vrot.slane %v256, %v269
    %v271 = vcombine.high %v263, %v263
    %vm278 = vcmask 130048
    %v279 = vsel %vm278, %v270, 0
    %281 = vmatprep.subr.mxu0 %v30
    %282 = vmatpush1.msra.mxu0 %v29
    %283 = vmatprep.subr.mxu0 %v32
    %284 = vmatpush1.msra.mxu0 %v31
    %285 = vmatprep.subr.mxu0 %v34
    %286 = vmatpush1.msra.mxu0 %v33
    %287 = vmatprep.subr.mxu0 %v36
    %288 = vmatpush1.msra.mxu0 %v35
    %289 = vmatprep.subr.mxu0 %v38
    %290 = vmatpush1.msra.mxu0 %v37
    %291 = vmatprep.subr.mxu0 %v40
    %292 = vmatpush1.msra.mxu0 %v39
    %293 = vmatprep.subr.mxu0 %v42
    %294 = vmatpush1.msra.mxu0 %v41
    %295 = vmatprep.subr.mxu0 %v44
    %296 = vmatpush1.msra.mxu0 %v43
    %297 = vmatprep.subr.mxu0 %v46
    %298 = vmatpush1.msra.mxu0 %v45
    %299 = vmatprep.subr.mxu0 %v48
    %300 = vmatpush1.msra.mxu0 %v47
    %301 = vmatprep.subr.mxu0 %v50
    %302 = vmatpush1.msra.mxu0 %v49
    %303 = vmatprep.subr.mxu0 %v52
    %304 = vmatpush1.msra.mxu0 %v51
    %305 = vmatprep.subr.mxu0 %v54
    %306 = vmatpush1.msra.mxu0 %v53
    %307 = vmatprep.subr.mxu0 %v56
    %308 = vmatpush1.msra.mxu0 %v55
    %309 = vmatprep.subr.mxu0 %v58
    %310 = vmatpush1.msra.mxu0 %v57
    %311 = vmatprep.subr.mxu0 %v60
    %312 = vmatpush1.msra.mxu0 %v59
    %313 = vmatprep.subr.mxu0 %v62
    %314 = vmatpush1.msra.mxu0 %v61
    %315 = vmatprep.subr.mxu0 %v64
    %316 = vmatpush1.msra.mxu0 %v63
    %317 = vmatprep.subr.mxu0 %v66
    %318 = vmatpush1.msra.mxu0 %v65
    %319 = vmatprep.subr.mxu0 %v68
    %320 = vmatpush1.msra.mxu0 %v67
    %321 = vmatprep.subr.mxu0 %v70
    %322 = vmatpush1.msra.mxu0 %v69
    %323 = vmatprep.subr.mxu0 %v72
    %324 = vmatpush1.msra.mxu0 %v71
    %325 = vmatprep.subr.mxu0 %v74
    %326 = vmatpush1.msra.mxu0 %v73
    %327 = vmatprep.subr.mxu0 %v76
    %328 = vmatpush1.msra.mxu0 %v75
    %329 = vmatprep.subr.mxu0 %v78
    %330 = vmatpush1.msra.mxu0 %v77
    %331 = vmatprep.subr.mxu0 %v80
    %332 = vmatpush1.msra.mxu0 %v79
    %333 = vmatprep.subr.mxu0 %v82
    %334 = vmatpush1.msra.mxu0 %v81
    %335 = vmatprep.subr.mxu0 %v84
    %336 = vmatpush1.msra.mxu0 %v83
    %337 = vmatprep.subr.mxu0 %v86
    %338 = vmatpush1.msra.mxu0 %v85
    %339 = vmatprep.subr.mxu0 %v88
    %340 = vmatpush1.msra.mxu0 %v87
    %341 = vmatprep.subr.mxu0 %v90
    %342 = vmatpush1.msra.mxu0 %v89
    %343 = vmatprep.subr.mxu0 %v92
    %344 = vmatpush1.msra.mxu0 %v91
    %345 = vmatprep.mubr.f32.mxu0 %v254
    %346 = vmatmul.mubr.f32.gmra.mrb[0].mxu0 %v246
    %v347 = vpop.f32.mrb[0].mxu0
    %v348 = vadd.f32 %v230, %v347
    %v349 = vpop.f32.mrb[0].mxu0
    %v350 = vadd.f32 %v234, %v349
    %351 = vdwg.mxu0
    %352 = vmatprep.subr.mxu0 %v94
    %353 = vmatpush1.msra.mxu0 %v93
    %354 = vmatprep.subr.mxu0 %v96
    %355 = vmatpush1.msra.mxu0 %v95
    %356 = vmatprep.subr.mxu0 %v98
    %357 = vmatpush1.msra.mxu0 %v97
    %358 = vmatprep.subr.mxu0 %v100
    %359 = vmatpush1.msra.mxu0 %v99
    %360 = vmatprep.subr.mxu0 %v102
    %361 = vmatpush1.msra.mxu0 %v101
    %362 = vmatprep.subr.mxu0 %v104
    %363 = vmatpush1.msra.mxu0 %v103
    %364 = vmatprep.subr.mxu0 %v106
    %365 = vmatpush1.msra.mxu0 %v105
    %366 = vmatprep.subr.mxu0 %v108
    %367 = vmatpush1.msra.mxu0 %v107
    %368 = vmatprep.subr.mxu0 %v110
    %369 = vmatpush1.msra.mxu0 %v109
    %370 = vmatprep.subr.mxu0 %v112
    %371 = vmatpush1.msra.mxu0 %v111
    %372 = vmatprep.subr.mxu0 %v114
    %373 = vmatpush1.msra.mxu0 %v113
    %374 = vmatprep.subr.mxu0 %v116
    %375 = vmatpush1.msra.mxu0 %v115
    %376 = vmatprep.subr.mxu0 %v118
    %377 = vmatpush1.msra.mxu0 %v117
    %378 = vmatprep.subr.mxu0 %v120
    %379 = vmatpush1.msra.mxu0 %v119
    %380 = vmatprep.subr.mxu0 %v122
    %381 = vmatpush1.msra.mxu0 %v121
    %382 = vmatprep.subr.mxu0 %v124
    %383 = vmatpush1.msra.mxu0 %v123
    %384 = vmatprep.subr.mxu0 %v126
    %385 = vmatpush1.msra.mxu0 %v125
    %386 = vmatprep.subr.mxu0 %v128
    %387 = vmatpush1.msra.mxu0 %v127
    %388 = vmatprep.subr.mxu0 %v130
    %389 = vmatpush1.msra.mxu0 %v129
    %390 = vmatprep.subr.mxu0 %v132
    %391 = vmatpush1.msra.mxu0 %v131
    %392 = vmatprep.subr.mxu0 %v134
    %393 = vmatpush1.msra.mxu0 %v133
    %394 = vmatprep.subr.mxu0 %v136
    %395 = vmatpush1.msra.mxu0 %v135
    %396 = vmatprep.subr.mxu0 %v138
    %397 = vmatpush1.msra.mxu0 %v137
    %398 = vmatprep.subr.mxu0 %v140
    %399 = vmatpush1.msra.mxu0 %v139
    %400 = vmatprep.subr.mxu0 %v142
    %401 = vmatpush1.msra.mxu0 %v141
    %402 = vmatprep.subr.mxu0 %v144
    %403 = vmatpush1.msra.mxu0 %v143
    %404 = vmatprep.subr.mxu0 %v146
    %405 = vmatpush1.msra.mxu0 %v145
    %406 = vmatprep.subr.mxu0 %v148
    %407 = vmatpush1.msra.mxu0 %v147
    %408 = vmatprep.subr.mxu0 %v150
    %409 = vmatpush1.msra.mxu0 %v149
    %410 = vmatprep.subr.mxu0 %v152
    %411 = vmatpush1.msra.mxu0 %v151
    %412 = vmatprep.subr.mxu0 %v154
    %413 = vmatpush1.msra.mxu0 %v153
    %414 = vmatprep.subr.mxu0 %v156
    %415 = vmatpush1.msra.mxu0 %v155
    %416 = vmatprep.mubr.f32.mxu0 %v255
    %417 = vmatmul.mubr.f32.gmra.mrb[0].mxu0 %v253
    %v418 = vpop.f32.mrb[0].mxu0
    %v419 = vadd.f32 %v348, %v418
    %v420 = vpop.f32.mrb[0].mxu0
    %v421 = vadd.f32 %v350, %v420
    %422 = vdwg.mxu0
    %423 = vmatprep.subr.mxu0 %v158
    %424 = vmatpush1.msra.mxu0 %v157
    %425 = vmatprep.subr.mxu0 %v160
    %426 = vmatpush1.msra.mxu0 %v159
    %427 = vmatprep.subr.mxu0 %v162
    %428 = vmatpush1.msra.mxu0 %v161
    %429 = vmatprep.subr.mxu0 %v164
    %430 = vmatpush1.msra.mxu0 %v163
    %431 = vmatprep.subr.mxu0 %v166
    %432 = vmatpush1.msra.mxu0 %v165
    %433 = vmatprep.subr.mxu0 %v168
    %434 = vmatpush1.msra.mxu0 %v167
    %435 = vmatprep.subr.mxu0 %v170
    %436 = vmatpush1.msra.mxu0 %v169
    %437 = vmatprep.subr.mxu0 %v172
    %438 = vmatpush1.msra.mxu0 %v171
    %439 = vmatprep.subr.mxu0 %v174
    %440 = vmatpush1.msra.mxu0 %v173
    %441 = vmatprep.subr.mxu0 %v176
    %442 = vmatpush1.msra.mxu0 %v175
    %443 = vmatprep.subr.mxu0 %v178
    %444 = vmatpush1.msra.mxu0 %v177
    %445 = vmatprep.subr.mxu0 %v180
    %446 = vmatpush1.msra.mxu0 %v179
    %447 = vmatprep.subr.mxu0 %v182
    %448 = vmatpush1.msra.mxu0 %v181
    %449 = vmatprep.subr.mxu0 %v184
    %450 = vmatpush1.msra.mxu0 %v183
    %451 = vmatprep.subr.mxu0 %v186
    %452 = vmatpush1.msra.mxu0 %v185
    %453 = vmatprep.subr.mxu0 %v188
    %454 = vmatpush1.msra.mxu0 %v187
    %455 = vmatprep.subr.mxu0 %v190
    %456 = vmatpush1.msra.mxu0 %v189
    %457 = vmatprep.subr.mxu0 %v192
    %458 = vmatpush1.msra.mxu0 %v191
    %459 = vmatprep.subr.mxu0 %v194
    %460 = vmatpush1.msra.mxu0 %v193
    %461 = vmatprep.subr.mxu0 %v196
    %462 = vmatpush1.msra.mxu0 %v195
    %463 = vmatprep.subr.mxu0 %v198
    %464 = vmatpush1.msra.mxu0 %v197
    %465 = vmatprep.subr.mxu0 %v200
    %466 = vmatpush1.msra.mxu0 %v199
    %467 = vmatprep.subr.mxu0 %v202
    %468 = vmatpush1.msra.mxu0 %v201
    %469 = vmatprep.subr.mxu0 %v204
    %470 = vmatpush1.msra.mxu0 %v203
    %471 = vmatprep.subr.mxu0 %v206
    %472 = vmatpush1.msra.mxu0 %v205
    %473 = vmatprep.subr.mxu0 %v208
    %474 = vmatpush1.msra.mxu0 %v207
    %475 = vmatprep.subr.mxu0 %v210
    %476 = vmatpush1.msra.mxu0 %v209
    %477 = vmatprep.subr.mxu0 %v212
    %478 = vmatpush1.msra.mxu0 %v211
    %479 = vmatprep.subr.mxu0 %v214
    %480 = vmatpush1.msra.mxu0 %v213
    %481 = vmatprep.subr.mxu0 %v216
    %482 = vmatpush1.msra.mxu0 %v215
    %483 = vmatprep.subr.mxu0 %v218
    %484 = vmatpush1.msra.mxu0 %v217
    %485 = vmatprep.subr.mxu0 %v220
    %486 = vmatpush1.msra.mxu0 %v219
    %487 = vmatprep.mubr.f32.mxu0 %v271
    %488 = vmatmul.mubr.f32.gmra.mrb[0].mxu0 %v263
    %v489 = vpop.f32.mrb[0].mxu0
    %v490 = vadd.f32 %v419, %v489
    %v491 = vpop.f32.mrb[0].mxu0
    %v492 = vadd.f32 %v421, %v491
    %493 = vdwg.mxu0
    %494 = vmatprep.subr.mxu0 %v222
    %495 = vmatpush1.msra.mxu0 %v221
    %496 = vmatprep.subr.mxu0 %v224
    %497 = vmatpush1.msra.mxu0 %v223
    %498 = vmatprep.subr.mxu0 0.0
    %499 = vmatpush1.msra.mxu0 0.0
    %500 = vmatprep.subr.mxu0 0.0
    %501 = vmatpush1.msra.mxu0 0.0
    %502 = vmatprep.subr.mxu0 0.0
    %503 = vmatpush1.msra.mxu0 0.0
    %504 = vmatprep.subr.mxu0 0.0
    %505 = vmatpush1.msra.mxu0 0.0
    %506 = vmatprep.subr.mxu0 0.0
    %507 = vmatpush1.msra.mxu0 0.0
    %508 = vmatprep.subr.mxu0 0.0
    %509 = vmatpush1.msra.mxu0 0.0
    %510 = vmatprep.subr.mxu0 0.0
    %511 = vmatpush1.msra.mxu0 0.0
    %512 = vmatprep.subr.mxu0 0.0
    %513 = vmatpush1.msra.mxu0 0.0
    %514 = vmatprep.subr.mxu0 0.0
    %515 = vmatpush1.msra.mxu0 0.0
    %516 = vmatprep.subr.mxu0 0.0
    %517 = vmatpush1.msra.mxu0 0.0
    %518 = vmatprep.subr.mxu0 0.0
    %519 = vmatpush1.msra.mxu0 0.0
    %520 = vmatprep.subr.mxu0 0.0
    %521 = vmatpush1.msra.mxu0 0.0
    %522 = vmatprep.subr.mxu0 0.0
    %523 = vmatpush1.msra.mxu0 0.0
    %524 = vmatprep.subr.mxu0 0.0
    %525 = vmatpush1.msra.mxu0 0.0
    %526 = vmatprep.subr.mxu0 0.0
    %527 = vmatpush1.msra.mxu0 0.0
    %528 = vmatprep.subr.mxu0 0.0
    %529 = vmatpush1.msra.mxu0 0.0
    %530 = vmatprep.subr.mxu0 0.0
    %531 = vmatpush1.msra.mxu0 0.0
    %532 = vmatprep.subr.mxu0 0.0
    %533 = vmatpush1.msra.mxu0 0.0
    %534 = vmatprep.subr.mxu0 0.0
    %535 = vmatpush1.msra.mxu0 0.0
    %536 = vmatprep.subr.mxu0 0.0
    %537 = vmatpush1.msra.mxu0 0.0
    %538 = vmatprep.subr.mxu0 0.0
    %539 = vmatpush1.msra.mxu0 0.0
    %540 = vmatprep.subr.mxu0 0.0
    %541 = vmatpush1.msra.mxu0 0.0
    %542 = vmatprep.subr.mxu0 0.0
    %543 = vmatpush1.msra.mxu0 0.0
    %544 = vmatprep.subr.mxu0 0.0
    %545 = vmatpush1.msra.mxu0 0.0
    %546 = vmatprep.subr.mxu0 0.0
    %547 = vmatpush1.msra.mxu0 0.0
    %548 = vmatprep.subr.mxu0 0.0
    %549 = vmatpush1.msra.mxu0 0.0
    %550 = vmatprep.subr.mxu0 0.0
    %551 = vmatpush1.msra.mxu0 0.0
    %552 = vmatprep.subr.mxu0 0.0
    %553 = vmatpush1.msra.mxu0 0.0
    %554 = vmatprep.subr.mxu0 0.0
    %555 = vmatpush1.msra.mxu0 0.0
    %556 = vmatprep.subr.mxu0 0.0
    %557 = vmatpush1.msra.mxu0 0.0
    %558 = vmatprep.mubr.f32.mxu0 0.0
    %559 = vmatmul.mubr.f32.gmra.mrb[0].mxu0 %v279
    %v560 = vpop.f32.mrb[0].mxu0
    %v561 = vadd.f32 %v490, %v560
    %v562 = vpop.f32.mrb[0].mxu0
    %v563 = vadd.f32 %v492, %v562
    %564 = vdwg.mxu0
    %v565 = vmax.f32 %v561, 0.0
    %v566 = vmax.f32 %v563, 0.0
    %v567 = vld [vmem:[%s3] sm:$0xff]
    %v568 = vld [vmem:[%s3 + $0x8] sm:$0xff]
    %v569 = vld [vmem:[%s3 + $0x10] sm:$0xff]
    %v570 = vld [vmem:[%s3 + $0x18] sm:$0xff]
    %v571 = vld [vmem:[%s3 + $0x20] sm:$0xff]
    %v572 = vld [vmem:[%s3 + $0x28] sm:$0xff]
    %v573 = vld [vmem:[%s3 + $0x30] sm:$0xff]
    %v574 = vld [vmem:[%s3 + $0x38] sm:$0xff]
    %v575 = vld [vmem:[%s3 + $0x40] sm:$0xff]
    %v576 = vld [vmem:[%s3 + $0x48] sm:$0xff]
    %v577 = vld [vmem:[%s3 + $0x50] sm:$0xff]
    %v578 = vld [vmem:[%s3 + $0x58] sm:$0xff]
    %v579 = vld [vmem:[%s3 + $0x60] sm:$0xff]
    %v580 = vld [vmem:[%s3 + $0x68] sm:$0xff]
    %v581 = vld [vmem:[%s3 + $0x70] sm:$0xff]
    %v582 = vld [vmem:[%s3 + $0x78] sm:$0xff]
    %v583 = vld [vmem:[%s3 + $0x80] sm:$0xff]
    %v584 = vld [vmem:[%s3 + $0x88] sm:$0xff]
    %v585 = vld [vmem:[%s3 + $0x90] sm:$0xff]
    %v586 = vld [vmem:[%s3 + $0x98] sm:$0xff]
    %v587 = vld [vmem:[%s3 + $0xa0] sm:$0xff]
    %v588 = vld [vmem:[%s3 + $0xa8] sm:$0xff]
    %v589 = vld [vmem:[%s3 + $0xb0] sm:$0xff]
    %v590 = vld [vmem:[%s3 + $0xb8] sm:$0xff]
    %v591 = vld [vmem:[%s3 + $0xc0] sm:$0xff]
    %v592 = vld [vmem:[%s3 + $0xc8] sm:$0xff]
    %v593 = vld [vmem:[%s3 + $0xd0] sm:$0xff]
    %v594 = vld [vmem:[%s3 + $0xd8] sm:$0xff]
    %v595 = vld [vmem:[%s3 + $0xe0] sm:$0xff]
    %v596 = vld [vmem:[%s3 + $0xe8] sm:$0xff]
    %v597 = vld [vmem:[%s3 + $0xf0] sm:$0xff]
    %v598 = vld [vmem:[%s3 + $0xf8] sm:$0xff]
    %v599 = vld [vmem:[%s4] sm:$0x1]
    %v601 = vlaneseq
    %v602 = vshrl.u32 %v601, 7
    %v603 = vsub.s32 0, %v602
    %v604 = vrot.slane %v599, %v603
    %606 = vmatprep.subr.mxu0 0.0
    %607 = vmatpush1.msra.mxu0 %v567
    %608 = vmatprep.subr.mxu0 0.0
    %609 = vmatpush1.msra.mxu0 %v568
    %610 = vmatprep.subr.mxu0 0.0
    %611 = vmatpush1.msra.mxu0 %v569
    %612 = vmatprep.subr.mxu0 0.0
    %613 = vmatpush1.msra.mxu0 %v570
    %614 = vmatprep.subr.mxu0 0.0
    %615 = vmatpush1.msra.mxu0 %v571
    %616 = vmatprep.subr.mxu0 0.0
    %617 = vmatpush1.msra.mxu0 %v572
    %618 = vmatprep.subr.mxu0 0.0
    %619 = vmatpush1.msra.mxu0 %v573
    %620 = vmatprep.subr.mxu0 0.0
    %621 = vmatpush1.msra.mxu0 %v574
    %622 = vmatprep.subr.mxu0 0.0
    %623 = vmatpush1.msra.mxu0 %v575
    %624 = vmatprep.subr.mxu0 0.0
    %625 = vmatpush1.msra.mxu0 %v576
    %626 = vmatprep.subr.mxu0 0.0
    %627 = vmatpush1.msra.mxu0 %v577
    %628 = vmatprep.subr.mxu0 0.0
    %629 = vmatpush1.msra.mxu0 %v578
    %630 = vmatprep.subr.mxu0 0.0
    %631 = vmatpush1.msra.mxu0 %v579
    %632 = vmatprep.subr.mxu0 0.0
    %633 = vmatpush1.msra.mxu0 %v580
    %634 = vmatprep.subr.mxu0 0.0
    %635 = vmatpush1.msra.mxu0 %v581
    %636 = vmatprep.subr.mxu0 0.0
    %637 = vmatpush1.msra.mxu0 %v582
    %638 = vmatprep.subr.mxu0 0.0
    %639 = vmatpush1.msra.mxu0 %v583
    %640 = vmatprep.subr.mxu0 0.0
    %641 = vmatpush1.msra.mxu0 %v584
    %642 = vmatprep.subr.mxu0 0.0
    %643 = vmatpush1.msra.mxu0 %v585
    %644 = vmatprep.subr.mxu0 0.0
    %645 = vmatpush1.msra.mxu0 %v586
    %646 = vmatprep.subr.mxu0 0.0
    %647 = vmatpush1.msra.mxu0 %v587
    %648 = vmatprep.subr.mxu0 0.0
    %649 = vmatpush1.msra.mxu0 %v588
    %650 = vmatprep.subr.mxu0 0.0
    %651 = vmatpush1.msra.mxu0 %v589
    %652 = vmatprep.subr.mxu0 0.0
    %653 = vmatpush1.msra.mxu0 %v590
    %654 = vmatprep.subr.mxu0 0.0
    %655 = vmatpush1.msra.mxu0 %v591
    %656 = vmatprep.subr.mxu0 0.0
    %657 = vmatpush1.msra.mxu0 %v592
    %658 = vmatprep.subr.mxu0 0.0
    %659 = vmatpush1.msra.mxu0 %v593
    %660 = vmatprep.subr.mxu0 0.0
    %661 = vmatpush1.msra.mxu0 %v594
    %662 = vmatprep.subr.mxu0 0.0
    %663 = vmatpush1.msra.mxu0 %v595
    %664 = vmatprep.subr.mxu0 0.0
    %665 = vmatpush1.msra.mxu0 %v596
    %666 = vmatprep.subr.mxu0 0.0
    %667 = vmatpush1.msra.mxu0 %v597
    %668 = vmatprep.subr.mxu0 0.0
    %669 = vmatpush1.msra.mxu0 %v598
    %670 = vmatprep.mubr.f32.mxu0 %v566
    %671 = vmatmul.mubr.f32.gmra.mrb[0].mxu0 %v565
    %v672 = vpop.f32.mrb[0].mxu0
    %v673 = vadd.f32 %v604, %v672
    %v674 = vpop.f32.mrb[0].mxu0
    %675 = vdwg.mxu0
    %v676 = vmax.f32 %v673, 0.0
    %v677 = vld [vmem:[%s5] sm:$0xff]
    %v678 = vld [vmem:[%s5 + $0x8] sm:$0xff]
    %v679 = vld [vmem:[%s5 + $0x10] sm:$0xff]
    %v680 = vld [vmem:[%s5 + $0x18] sm:$0xff]
    %v681 = vld [vmem:[%s5 + $0x20] sm:$0xff]
    %v682 = vld [vmem:[%s5 + $0x28] sm:$0xff]
    %v683 = vld [vmem:[%s5 + $0x30] sm:$0xff]
    %v684 = vld [vmem:[%s5 + $0x38] sm:$0xff]
    %v685 = vld [vmem:[%s6] sm:$0x1]
    %v687 = vlaneseq
    %v688 = vshrl.u32 %v687, 7
    %v689 = vsub.s32 0, %v688
    %v690 = vrot.slane %v685, %v689
    %vm692 = vcmask 523264
    %v694 = vsel %vm692, %v676, 0
    %696 = vmatprep.subr.mxu0 0.0
    %697 = vmatpush1.msra.mxu0 %v677
    %698 = vmatprep.subr.mxu0 0.0
    %699 = vmatpush1.msra.mxu0 %v678
    %700 = vmatprep.subr.mxu0 0.0
    %701 = vmatpush1.msra.mxu0 %v679
    %702 = vmatprep.subr.mxu0 0.0
    %703 = vmatpush1.msra.mxu0 %v680
    %704 = vmatprep.subr.mxu0 0.0
    %705 = vmatpush1.msra.mxu0 %v681
    %706 = vmatprep.subr.mxu0 0.0
    %707 = vmatpush1.msra.mxu0 %v682
    %708 = vmatprep.subr.mxu0 0.0
    %709 = vmatpush1.msra.mxu0 %v683
    %710 = vmatprep.subr.mxu0 0.0
    %711 = vmatpush1.msra.mxu0 %v684
    %712 = vmatprep.subr.mxu0 0.0
    %713 = vmatpush1.msra.mxu0 0.0
    %714 = vmatprep.subr.mxu0 0.0
    %715 = vmatpush1.msra.mxu0 0.0
    %716 = vmatprep.subr.mxu0 0.0
    %717 = vmatpush1.msra.mxu0 0.0
    %718 = vmatprep.subr.mxu0 0.0
    %719 = vmatpush1.msra.mxu0 0.0
    %720 = vmatprep.subr.mxu0 0.0
    %721 = vmatpush1.msra.mxu0 0.0
    %722 = vmatprep.subr.mxu0 0.0
    %723 = vmatpush1.msra.mxu0 0.0
    %724 = vmatprep.subr.mxu0 0.0
    %725 = vmatpush1.msra.mxu0 0.0
    %726 = vmatprep.subr.mxu0 0.0
    %727 = vmatpush1.msra.mxu0 0.0
    %728 = vmatprep.subr.mxu0 0.0
    %729 = vmatpush1.msra.mxu0 0.0
    %730 = vmatprep.subr.mxu0 0.0
    %731 = vmatpush1.msra.mxu0 0.0
    %732 = vmatprep.subr.mxu0 0.0
    %733 = vmatpush1.msra.mxu0 0.0
    %734 = vmatprep.subr.mxu0 0.0
    %735 = vmatpush1.msra.mxu0 0.0
    %736 = vmatprep.subr.mxu0 0.0
    %737 = vmatpush1.msra.mxu0 0.0
    %738 = vmatprep.subr.mxu0 0.0
    %739 = vmatpush1.msra.mxu0 0.0
    %740 = vmatprep.subr.mxu0 0.0
    %741 = vmatpush1.msra.mxu0 0.0
    %742 = vmatprep.subr.mxu0 0.0
    %743 = vmatpush1.msra.mxu0 0.0
    %744 = vmatprep.subr.mxu0 0.0
    %745 = vmatpush1.msra.mxu0 0.0
    %746 = vmatprep.subr.mxu0 0.0
    %747 = vmatpush1.msra.mxu0 0.0
    %748 = vmatprep.subr.mxu0 0.0
    %749 = vmatpush1.msra.mxu0 0.0
    %750 = vmatprep.subr.mxu0 0.0
    %751 = vmatpush1.msra.mxu0 0.0
    %752 = vmatprep.subr.mxu0 0.0
    %753 = vmatpush1.msra.mxu0 0.0
    %754 = vmatprep.subr.mxu0 0.0
    %755 = vmatpush1.msra.mxu0 0.0
    %756 = vmatprep.subr.mxu0 0.0
    %757 = vmatpush1.msra.mxu0 0.0
    %758 = vmatprep.subr.mxu0 0.0
    %759 = vmatpush1.msra.mxu0 0.0
    %760 = vmatprep.mubr.f32.mxu0 0.0
    %761 = vmatmul.mubr.f32.gmra.mrb[0].mxu0 %v694
    %v762 = vpop.f32.mrb[0].mxu0
    %v763 = vadd.f32 %v690, %v762
    %v764 = vpop.f32.mrb[0].mxu0
    %765 = vdwg.mxu0
    %vm766 = vcmask 74752
    %767 = vst.msk [vmem:[#allocation2] sm:$0x3] %vm766, %v763
    // Predicated region
    $region30: #{resnet_forward.21} parent=1 // pred_check
      _
    $region31: #{resnet_forward.21} parent=1 // pred_check_branch
      %769 = sbr.rel (0) target = $region33
    $region32: #{resnet_forward.21} parent=1 // pred_region
      %s771 = ssub.s32 32, 32
      %772 = vsyncadd [#allocation3], %s771
      %s774 = sshll.u32 [#allocation2], 4
      %s775 = int_to_ptr.vmem [resolvable:$true] %s774
      %777 = dma.vmem_to_hbm [thread:$0]  %s775, 32, %s7, [#allocation3]
    $region33: #{resnet_forward.21} parent=1 // pred_fallthru
      _
    // Predicated region
    $region34: #{resnet_forward.21} parent=1 // pred_check
      _
    $region35: #{resnet_forward.21} parent=1 // pred_check_branch
      %779 = sbr.rel (0) target = $region37
    $region36: #{resnet_forward.21} parent=1 // pred_region
      %780 = dma.done [#allocation3], 32
    $region37: #{resnet_forward.21} parent=1 // pred_fallthru
      _
    %781 = vsyncpa [#allocation3], 1

</llo_original>
